<compile_context>
chip_gen: v6e
topology: v6e:2x2x1
jax: 0.10.0
libtpu: 0.0.40
codegen_flags: <defaults>
</compile_context>

<pallas_src>
import functools

import jax
import jax.numpy as jnp
import numpy as np
from jax import lax
from jax.experimental import pallas as pl
from jax.experimental.pallas import tpu as pltpu

NEG_SLOPE = 0.01
C_HID = 100      # conv channels (from the module)
C_PAD = 128      # channels padded to a full lane tile
FC_HID = 50      # fc hidden width (from the module)
B_TILE = 8       # batch row block padded to one (8, 128) sublane tile

# Row layout of the packed small-constant slab (f32, 128 lanes, single DMA).
ROW_W1 = 0                     # rows 0..2   : conv1 taps (3, C_PAD)
ROW_B1 = 3                     # conv1 bias
ROW_B2 = 4                     # conv2 bias
ROW_BF1 = 5                    # fc1 bias (cols 0:FC_HID)
ROW_BF2 = 6                    # fc2 bias (cols 0:FC_HID)
ROW_BH = 7                     # fused head bias [value | adv_0..A-1 | mean(adv)]
ROW_WF2 = 8                    # rows 8..57  : fc2 weight (FC_HID, FC_HID) at cols 0:FC_HID
ROW_WH = 64                    # rows 64..191: fused head weight, rows >= FC_HID are zero
CONST_ROWS = ROW_WH + C_PAD    # 192


def _leaky(x):
    return jnp.where(x > 0, x, NEG_SLOPE * x)


def dueling_ddqn_kernel(xcol_ref, const_ref, w2_hbm, wf1_hbm, q_ref,
                        w2_vmem, wf1_vmem, sems, *, bp):
    """Single-invocation kernel: whole DuelingDDQN forward for one padded batch."""
    # ---- kick off the big weight DMAs immediately (overlap with conv1) -----
    w2_copy = pltpu.make_async_copy(w2_hbm, w2_vmem, sems.at[0])
    wf1_copy = pltpu.make_async_copy(wf1_hbm, wf1_vmem, sems.at[1])
    w2_copy.start()
    wf1_copy.start()

    nrows = xcol_ref.shape[0]          # S * bp
    s_len = nrows // bp
    w_dt = w2_vmem.dtype               # bf16 (default) or f32 MXU operands

    def mx(a, w):
        # MXU matmul with operands in the prepared weight dtype, f32 accumulation.
        return jnp.dot(a.astype(w_dt), w, preferred_element_type=jnp.float32)

    # ---- conv1: C_in == 1 -> three rank-1 broadcast multiply-adds (VPU) ----
    # Shifting the x column by +/-bp rows against a zero block realizes conv1's
    # zero padding: rows 0..bp-1 are t==0 and rows nrows-bp.. are t==S-1.
    xcol = xcol_ref[...]                                            # (S*bp, 1) f32
    zcol = jnp.zeros((bp, 1), jnp.float32)
    xm1 = jnp.concatenate([zcol, xcol[:nrows - bp, :]], axis=0)     # x at t-1
    xp1 = jnp.concatenate([xcol[bp:, :], zcol], axis=0)             # x at t+1

    w1_0 = const_ref[ROW_W1 + 0:ROW_W1 + 1, :]                      # (1, C_PAD)
    w1_1 = const_ref[ROW_W1 + 1:ROW_W1 + 2, :]
    w1_2 = const_ref[ROW_W1 + 2:ROW_W1 + 3, :]
    b1 = const_ref[ROW_B1:ROW_B1 + 1, :]
    h0 = _leaky(xm1 * w1_0 + xcol * w1_1 + xp1 * w1_2 + b1)         # (S*bp, C_PAD)

    # ---- +/-1 timestep taps for conv2: whole-(8,128)-tile row shifts --------
    zblk = jnp.zeros((bp, C_PAD), jnp.float32)
    hm1 = jnp.concatenate([zblk, h0[:nrows - bp, :]], axis=0)       # h0 at t-1
    hp1 = jnp.concatenate([h0[bp:, :], zblk], axis=0)               # h0 at t+1

    # ---- conv2: one (S*bp, C) @ (C, C) matmul per kernel tap (MXU) ----------
    w2_copy.wait()
    b2 = const_ref[ROW_B2:ROW_B2 + 1, :]
    h2 = _leaky(mx(hm1, w2_vmem[0]) + mx(h0, w2_vmem[1]) + mx(hp1, w2_vmem[2]) + b2)

    # ---- fc1: tile-aligned channel-major flatten + ONE (bp, S*C_PAD) matmul -
    h2_flat = jnp.concatenate(
        [h2[t * bp:(t + 1) * bp, :] for t in range(s_len)], axis=1)  # (bp, S*C_PAD)
    wf1_copy.wait()
    bf1 = const_ref[ROW_BF1:ROW_BF1 + 1, :FC_HID]
    y1 = _leaky(mx(h2_flat, wf1_vmem[...]) + bf1)                    # (bp, FC_HID)

    # ---- fc2 (f32; lane-padded weight -> lane-dense (bp, 128) result) -------
    wf2t = const_ref[ROW_WF2:ROW_WF2 + FC_HID, :]                    # (FC_HID, C_PAD)
    bf2 = const_ref[ROW_BF2:ROW_BF2 + 1, :]
    y2 = _leaky(jnp.dot(y1, wf2t, preferred_element_type=jnp.float32) + bf2)

    # ---- fused dueling head: [value | advantages | mean(adv)] in one matmul -
    whead = const_ref[ROW_WH:ROW_WH + C_PAD, :]                      # (C_PAD, C_PAD)
    bhead = const_ref[ROW_BH:ROW_BH + 1, :]
    hv = jnp.dot(y2, whead, preferred_element_type=jnp.float32) + bhead
    n_act = q_ref.shape[1]
    q_ref[...] = hv[:, 0:1] + hv[:, 1:1 + n_act] - hv[:, 1 + n_act:2 + n_act]


def prepare_params(params, state_size, action_size, big_weight_dtype=jnp.bfloat16):
    """One-time weight re-layout / padding / packing (hoisted off the hot path)."""
    (w1, b1, w2, b2, wf1, bf1, wf2, bf2, wv, bv, wa, ba) = params
    S = state_size
    A = action_size
    pad_c = C_PAD - C_HID

    # Big slabs (manually DMA'd & overlapped in the kernel); bf16 by default
    # to halve the dominant weight DMA bytes.
    # conv2: (C_out, C_in, 3) -> (3, C_PAD, C_PAD)  [tap, ci, co]
    w2r = jnp.pad(jnp.transpose(w2, (2, 1, 0)),
                  ((0, 0), (0, pad_c), (0, pad_c))).astype(big_weight_dtype)
    # fc1: absorb PyTorch's channel-major flatten (index c*S + t) into a
    # (S*C_PAD, FC_HID) slab matching the kernel's (t, c) lane flatten.
    wf1r = jnp.transpose(wf1.reshape(FC_HID, C_HID, S), (2, 1, 0))    # (S, C, 50)
    wf1f = jnp.pad(wf1r, ((0, 0), (0, pad_c), (0, 0))).reshape(
        S * C_PAD, FC_HID).astype(big_weight_dtype)

    # Small constants packed into one lane-padded f32 slab (single DMA).
    const = jnp.zeros((CONST_ROWS, C_PAD), jnp.float32)
    const = const.at[ROW_W1:ROW_W1 + 3, :C_HID].set(jnp.transpose(w1[:, 0, :]))
    const = const.at[ROW_B1, :C_HID].set(b1)
    const = const.at[ROW_B2, :C_HID].set(b2)
    const = const.at[ROW_BF1, :FC_HID].set(bf1)
    const = const.at[ROW_BF2, :FC_HID].set(bf2)
    const = const.at[ROW_WF2:ROW_WF2 + FC_HID, :FC_HID].set(jnp.transpose(wf2))
    # Fused dueling head with the advantage mean folded in as one extra column.
    whead = jnp.concatenate(
        [jnp.transpose(wv), jnp.transpose(wa),
         jnp.transpose(jnp.mean(wa, axis=0, keepdims=True))], axis=1)   # (50, A+2)
    bhead = jnp.concatenate([bv, ba, jnp.mean(ba, keepdims=True)])      # (A+2,)
    const = const.at[ROW_WH:ROW_WH + FC_HID, :A + 2].set(whead)
    const = const.at[ROW_BH, :A + 2].set(bhead)
    return (w2r, wf1f, const)


def dueling_ddqn_forward(x, prepped, action_size):
    """x: (B, state_size) float32  ->  q_values: (B, action_size) float32."""
    # Mirror the PyTorch dim handling: 4-D (B,1,1,S) / 3-D (B,1,S) / 2-D (B,S).
    if x.ndim == 4:
        x = jnp.squeeze(x, axis=2)
    if x.ndim == 3:
        x = jnp.squeeze(x, axis=1)
    x = x.astype(jnp.float32)
    B, S = x.shape
    w2r, wf1f, const = prepped
    assert wf1f.shape[0] == S * C_PAD, "prepared params do not match state_size"

    bp = ((B + B_TILE - 1) // B_TILE) * B_TILE       # batch rows padded to 8
    # Tiny per-call glue: x as a (S*bp, 1) column with row index t*bp + b.
    xcol = jnp.pad(jnp.transpose(x), ((0, 0), (0, bp - B))).reshape(S * bp, 1)

    vmem = pl.BlockSpec(memory_space=pltpu.MemorySpace.VMEM)
    hbm = pl.BlockSpec(memory_space=pl.ANY)
    q = pl.pallas_call(
        functools.partial(dueling_ddqn_kernel, bp=bp),
        out_shape=jax.ShapeDtypeStruct((bp, action_size), jnp.float32),
        in_specs=[vmem, vmem, hbm, hbm],
        out_specs=vmem,
        scratch_shapes=[
            pltpu.VMEM(w2r.shape, w2r.dtype),      # conv2 weight landing buffer
            pltpu.VMEM(wf1f.shape, wf1f.dtype),    # fc1 weight landing buffer
            pltpu.SemaphoreType.DMA((2,)),
        ],
    )(xcol, const, w2r, wf1f)
    return q[:B, :]


def init_params(key, state_size, action_size):
    """Deterministic synthetic params matching the nn.Module shapes."""
    ks = jax.random.split(key, 12)

    def u(k, shape, fan_in):
        bound = 1.0 / np.sqrt(fan_in)
        return jax.random.uniform(k, shape, jnp.float32, -bound, bound)

    w1 = u(ks[0], (C_HID, 1, 3), 1 * 3)
    b1 = u(ks[1], (C_HID,), 1 * 3)
    w2 = u(ks[2], (C_HID, C_HID, 3), C_HID * 3)
    b2 = u(ks[3], (C_HID,), C_HID * 3)
    wf1 = u(ks[4], (FC_HID, C_HID * state_size), C_HID * state_size)
    bf1 = u(ks[5], (FC_HID,), C_HID * state_size)
    wf2 = u(ks[6], (FC_HID, FC_HID), FC_HID)
    bf2 = u(ks[7], (FC_HID,), FC_HID)
    wv = u(ks[8], (1, FC_HID), FC_HID)
    bv = u(ks[9], (1,), FC_HID)
    wa = u(ks[10], (action_size, FC_HID), FC_HID)
    ba = u(ks[11], (action_size,), FC_HID)
    return (w1, b1, w2, b2, wf1, bf1, wf2, bf2, wv, bv, wa, ba)


def ref_forward(x, params, action_size):
    """Pure-JAX reference mirroring the PyTorch forward (for verification)."""
    (w1, b1, w2, b2, wf1, bf1, wf2, bf2, wv, bv, wa, ba) = params
    B, S = x.shape
    dn = ('NCH', 'OIH', 'NCH')
    h1 = lax.conv_general_dilated(x[:, None, :], w1, (1,), ((1, 1),),
                                  dimension_numbers=dn) + b1[None, :, None]
    h1 = jnp.where(h1 > 0, h1, NEG_SLOPE * h1)
    h2 = lax.conv_general_dilated(h1, w2, (1,), ((1, 1),),
                                  dimension_numbers=dn) + b2[None, :, None]
    h2 = jnp.where(h2 > 0, h2, NEG_SLOPE * h2)
    f = h2.reshape(B, -1)                                   # channel-major flatten
    y1 = f @ wf1.T + bf1
    y1 = jnp.where(y1 > 0, y1, NEG_SLOPE * y1)
    y2 = y1 @ wf2.T + bf2
    y2 = jnp.where(y2 > 0, y2, NEG_SLOPE * y2)
    value = y2 @ wv.T + bv
    adv = y2 @ wa.T + ba
    return value + (adv - adv.mean(axis=1, keepdims=True))


if __name__ == "__main__":
    B, STATE_SIZE, ACTION_SIZE = 2, 16, 4
    key = jax.random.PRNGKey(0)
    kx, kp = jax.random.split(key)
    x = jax.random.normal(kx, (B, STATE_SIZE), jnp.float32)
    params = init_params(kp, STATE_SIZE, ACTION_SIZE)
    q_ref = ref_forward(x, params, ACTION_SIZE)

    fwd = jax.jit(dueling_ddqn_forward, static_argnames=("action_size",))

    # f32 big weights: consistency check against the pure-JAX reference.
    # (Tolerance accommodates the TPU's default matmul precision, which may
    # execute both the kernel's and the reference's f32 dots as bf16 passes.)
    prep_f32 = prepare_params(params, STATE_SIZE, ACTION_SIZE,
                              big_weight_dtype=jnp.float32)
    q_f32 = fwd(x, prep_f32, action_size=ACTION_SIZE)
    jax.block_until_ready(q_f32)
    np.testing.assert_allclose(np.asarray(q_f32), np.asarray(q_ref),
                               rtol=1e-2, atol=1e-2)

    # bf16 big weights (the default DMA-optimized path), f32 accumulation.
    prep_bf16 = prepare_params(params, STATE_SIZE, ACTION_SIZE)
    q_bf16 = fwd(x, prep_bf16, action_size=ACTION_SIZE)
    jax.block_until_ready(q_bf16)
    np.testing.assert_allclose(np.asarray(q_bf16), np.asarray(q_ref),
                               rtol=5e-2, atol=5e-2)

    print("KERNEL_OK")
</pallas_src>

<mosaic_0001>
module attributes {stable_mosaic.version = 11 : i64} {
  func.func @dueling_ddqn_kernel(%arg0: memref<128x1xf32, #tpu.memory_space<vmem>>, %arg1: memref<192x128xf32, #tpu.memory_space<vmem>>, %arg2: memref<3x128x128xf32, #tpu.memory_space<any>>, %arg3: memref<2048x50xf32, #tpu.memory_space<any>>, %arg4: memref<8x4xf32, #tpu.memory_space<vmem>>, %arg5: memref<3x128x128xf32, #tpu.memory_space<vmem>>, %arg6: memref<2048x50xf32, #tpu.memory_space<vmem>>, %arg7: memref<2x!tpu.dma_semaphore, #tpu.memory_space<semaphore_mem>>) attributes {dimension_semantics = [], scalar_prefetch = 0 : i64, scratch_operands = 3 : i64, tpu.core_type = #tpu.core_type<tc>} {
    %c0_i32 = arith.constant 0 : i32
    %0 = tpu.memref_slice %arg7[%c0_i32] : memref<2x!tpu.dma_semaphore, #tpu.memory_space<semaphore_mem>> -> memref<1x!tpu.dma_semaphore, #tpu.memory_space<semaphore_mem>>
    %1 = tpu.memref_squeeze %0 : memref<1x!tpu.dma_semaphore, #tpu.memory_space<semaphore_mem>> -> memref<!tpu.dma_semaphore, #tpu.memory_space<semaphore_mem>>
    tpu.enqueue_dma source(%arg2 : memref<3x128x128xf32, #tpu.memory_space<any>>) target(%arg5 : memref<3x128x128xf32, #tpu.memory_space<vmem>>) target_semaphore(%1 : memref<!tpu.dma_semaphore, #tpu.memory_space<semaphore_mem>>)
    %c1_i32 = arith.constant 1 : i32
    %2 = tpu.memref_slice %arg7[%c1_i32] : memref<2x!tpu.dma_semaphore, #tpu.memory_space<semaphore_mem>> -> memref<1x!tpu.dma_semaphore, #tpu.memory_space<semaphore_mem>>
    %3 = tpu.memref_squeeze %2 : memref<1x!tpu.dma_semaphore, #tpu.memory_space<semaphore_mem>> -> memref<!tpu.dma_semaphore, #tpu.memory_space<semaphore_mem>>
    tpu.enqueue_dma source(%arg3 : memref<2048x50xf32, #tpu.memory_space<any>>) target(%arg6 : memref<2048x50xf32, #tpu.memory_space<vmem>>) target_semaphore(%3 : memref<!tpu.dma_semaphore, #tpu.memory_space<semaphore_mem>>)
    %c0 = arith.constant 0 : index
    %c0_0 = arith.constant 0 : index
    %4 = vector.load %arg0[%c0, %c0_0] : memref<128x1xf32, #tpu.memory_space<vmem>>, vector<128x1xf32>
    %cst = arith.constant 0.000000e+00 : f32
    %5 = vector.broadcast %cst : f32 to vector<8x1xf32>
    %6 = vector.extract_strided_slice %4 {offsets = [0, 0], sizes = [120, 1], strides = [1, 1]} : vector<128x1xf32> to vector<120x1xf32>
    %7 = tpu.concatenate %5, %6 in 0 : vector<8x1xf32>, vector<120x1xf32> -> vector<128x1xf32>
    %8 = vector.extract_strided_slice %4 {offsets = [8, 0], sizes = [120, 1], strides = [1, 1]} : vector<128x1xf32> to vector<120x1xf32>
    %9 = tpu.concatenate %8, %5 in 0 : vector<120x1xf32>, vector<8x1xf32> -> vector<128x1xf32>
    %c0_1 = arith.constant 0 : index
    %c0_2 = arith.constant 0 : index
    %10 = vector.load %arg1[%c0_1, %c0_2] : memref<192x128xf32, #tpu.memory_space<vmem>>, vector<1x128xf32>
    %c1 = arith.constant 1 : index
    %c0_3 = arith.constant 0 : index
    %11 = vector.load %arg1[%c1, %c0_3] : memref<192x128xf32, #tpu.memory_space<vmem>>, vector<1x128xf32>
    %c2 = arith.constant 2 : index
    %c0_4 = arith.constant 0 : index
    %12 = vector.load %arg1[%c2, %c0_4] : memref<192x128xf32, #tpu.memory_space<vmem>>, vector<1x128xf32>
    %c3 = arith.constant 3 : index
    %c0_5 = arith.constant 0 : index
    %13 = vector.load %arg1[%c3, %c0_5] : memref<192x128xf32, #tpu.memory_space<vmem>>, vector<1x128xf32>
    %14 = vector.broadcast %7 : vector<128x1xf32> to vector<128x128xf32>
    %15 = vector.broadcast %10 : vector<1x128xf32> to vector<128x128xf32>
    %16 = arith.mulf %14, %15 : vector<128x128xf32>
    %17 = vector.broadcast %4 : vector<128x1xf32> to vector<128x128xf32>
    %18 = vector.broadcast %11 : vector<1x128xf32> to vector<128x128xf32>
    %19 = arith.mulf %17, %18 : vector<128x128xf32>
    %20 = arith.addf %16, %19 : vector<128x128xf32>
    %21 = vector.broadcast %9 : vector<128x1xf32> to vector<128x128xf32>
    %22 = vector.broadcast %12 : vector<1x128xf32> to vector<128x128xf32>
    %23 = arith.mulf %21, %22 : vector<128x128xf32>
    %24 = arith.addf %20, %23 : vector<128x128xf32>
    %25 = vector.broadcast %13 : vector<1x128xf32> to vector<128x128xf32>
    %26 = arith.addf %24, %25 : vector<128x128xf32>
    %cst_6 = arith.constant 0.000000e+00 : f32
    %27 = vector.broadcast %cst_6 : f32 to vector<128x128xf32>
    %28 = arith.cmpf ogt, %26, %27 : vector<128x128xf32>
    %cst_7 = arith.constant 0.00999999977 : f32
    %29 = vector.broadcast %cst_7 : f32 to vector<128x128xf32>
    %30 = arith.mulf %29, %26 : vector<128x128xf32>
    %31 = arith.select %28, %26, %30 : vector<128x128xi1>, vector<128x128xf32>
    %cst_8 = arith.constant 0.000000e+00 : f32
    %32 = vector.broadcast %cst_8 : f32 to vector<8x128xf32>
    %33 = vector.extract_strided_slice %31 {offsets = [0, 0], sizes = [120, 128], strides = [1, 1]} : vector<128x128xf32> to vector<120x128xf32>
    %34 = tpu.concatenate %32, %33 in 0 : vector<8x128xf32>, vector<120x128xf32> -> vector<128x128xf32>
    %35 = vector.extract_strided_slice %31 {offsets = [8, 0], sizes = [120, 128], strides = [1, 1]} : vector<128x128xf32> to vector<120x128xf32>
    %36 = tpu.concatenate %35, %32 in 0 : vector<120x128xf32>, vector<8x128xf32> -> vector<128x128xf32>
    %c0_i32_9 = arith.constant 0 : i32
    %37 = tpu.memref_slice %arg7[%c0_i32_9] : memref<2x!tpu.dma_semaphore, #tpu.memory_space<semaphore_mem>> -> memref<1x!tpu.dma_semaphore, #tpu.memory_space<semaphore_mem>>
    %38 = tpu.memref_squeeze %37 : memref<1x!tpu.dma_semaphore, #tpu.memory_space<semaphore_mem>> -> memref<!tpu.dma_semaphore, #tpu.memory_space<semaphore_mem>>
    tpu.wait_dma2 semaphore(%38 : memref<!tpu.dma_semaphore, #tpu.memory_space<semaphore_mem>>) src(%arg2 : memref<3x128x128xf32, #tpu.memory_space<any>>) dst(%arg5 : memref<3x128x128xf32, #tpu.memory_space<vmem>>)
    %c4 = arith.constant 4 : index
    %c0_10 = arith.constant 0 : index
    %39 = vector.load %arg1[%c4, %c0_10] : memref<192x128xf32, #tpu.memory_space<vmem>>, vector<1x128xf32>
    %c0_11 = arith.constant 0 : index
    %c0_12 = arith.constant 0 : index
    %c0_13 = arith.constant 0 : index
    %40 = vector.load %arg5[%c0_11, %c0_12, %c0_13] : memref<3x128x128xf32, #tpu.memory_space<vmem>>, vector<1x128x128xf32>
    %41 = vector.shape_cast %40 : vector<1x128x128xf32> to vector<128x128xf32>
    %cst_14 = arith.constant dense<0.000000e+00> : vector<128x128xf32>
    %42 = tpu.matmul %34, %41, %cst_14 {dimension_numbers = #tpu.dot_dimension_numbers<[1], [0], [0], [1], [0, 0, 1, 1], [], []>} : vector<128x128xf32>, vector<128x128xf32>, vector<128x128xf32> -> vector<128x128xf32>
    %c1_15 = arith.constant 1 : index
    %c0_16 = arith.constant 0 : index
    %c0_17 = arith.constant 0 : index
    %43 = vector.load %arg5[%c1_15, %c0_16, %c0_17] : memref<3x128x128xf32, #tpu.memory_space<vmem>>, vector<1x128x128xf32>
    %44 = vector.shape_cast %43 : vector<1x128x128xf32> to vector<128x128xf32>
    %cst_18 = arith.constant dense<0.000000e+00> : vector<128x128xf32>
    %45 = tpu.matmul %31, %44, %cst_18 {dimension_numbers = #tpu.dot_dimension_numbers<[1], [0], [0], [1], [0, 0, 1, 1], [], []>} : vector<128x128xf32>, vector<128x128xf32>, vector<128x128xf32> -> vector<128x128xf32>
    %46 = arith.addf %42, %45 : vector<128x128xf32>
    %c2_19 = arith.constant 2 : index
    %c0_20 = arith.constant 0 : index
    %c0_21 = arith.constant 0 : index
    %47 = vector.load %arg5[%c2_19, %c0_20, %c0_21] : memref<3x128x128xf32, #tpu.memory_space<vmem>>, vector<1x128x128xf32>
    %48 = vector.shape_cast %47 : vector<1x128x128xf32> to vector<128x128xf32>
    %cst_22 = arith.constant dense<0.000000e+00> : vector<128x128xf32>
    %49 = tpu.matmul %36, %48, %cst_22 {dimension_numbers = #tpu.dot_dimension_numbers<[1], [0], [0], [1], [0, 0, 1, 1], [], []>} : vector<128x128xf32>, vector<128x128xf32>, vector<128x128xf32> -> vector<128x128xf32>
    %50 = arith.addf %46, %49 : vector<128x128xf32>
    %51 = vector.broadcast %39 : vector<1x128xf32> to vector<128x128xf32>
    %52 = arith.addf %50, %51 : vector<128x128xf32>
    %cst_23 = arith.constant 0.000000e+00 : f32
    %53 = vector.broadcast %cst_23 : f32 to vector<128x128xf32>
    %54 = arith.cmpf ogt, %52, %53 : vector<128x128xf32>
    %cst_24 = arith.constant 0.00999999977 : f32
    %55 = vector.broadcast %cst_24 : f32 to vector<128x128xf32>
    %56 = arith.mulf %55, %52 : vector<128x128xf32>
    %57 = arith.select %54, %52, %56 : vector<128x128xi1>, vector<128x128xf32>
    %58 = vector.extract_strided_slice %57 {offsets = [0, 0], sizes = [8, 128], strides = [1, 1]} : vector<128x128xf32> to vector<8x128xf32>
    %59 = vector.extract_strided_slice %57 {offsets = [8, 0], sizes = [8, 128], strides = [1, 1]} : vector<128x128xf32> to vector<8x128xf32>
    %60 = vector.extract_strided_slice %57 {offsets = [16, 0], sizes = [8, 128], strides = [1, 1]} : vector<128x128xf32> to vector<8x128xf32>
    %61 = vector.extract_strided_slice %57 {offsets = [24, 0], sizes = [8, 128], strides = [1, 1]} : vector<128x128xf32> to vector<8x128xf32>
    %62 = vector.extract_strided_slice %57 {offsets = [32, 0], sizes = [8, 128], strides = [1, 1]} : vector<128x128xf32> to vector<8x128xf32>
    %63 = vector.extract_strided_slice %57 {offsets = [40, 0], sizes = [8, 128], strides = [1, 1]} : vector<128x128xf32> to vector<8x128xf32>
    %64 = vector.extract_strided_slice %57 {offsets = [48, 0], sizes = [8, 128], strides = [1, 1]} : vector<128x128xf32> to vector<8x128xf32>
    %65 = vector.extract_strided_slice %57 {offsets = [56, 0], sizes = [8, 128], strides = [1, 1]} : vector<128x128xf32> to vector<8x128xf32>
    %66 = vector.extract_strided_slice %57 {offsets = [64, 0], sizes = [8, 128], strides = [1, 1]} : vector<128x128xf32> to vector<8x128xf32>
    %67 = vector.extract_strided_slice %57 {offsets = [72, 0], sizes = [8, 128], strides = [1, 1]} : vector<128x128xf32> to vector<8x128xf32>
    %68 = vector.extract_strided_slice %57 {offsets = [80, 0], sizes = [8, 128], strides = [1, 1]} : vector<128x128xf32> to vector<8x128xf32>
    %69 = vector.extract_strided_slice %57 {offsets = [88, 0], sizes = [8, 128], strides = [1, 1]} : vector<128x128xf32> to vector<8x128xf32>
    %70 = vector.extract_strided_slice %57 {offsets = [96, 0], sizes = [8, 128], strides = [1, 1]} : vector<128x128xf32> to vector<8x128xf32>
    %71 = vector.extract_strided_slice %57 {offsets = [104, 0], sizes = [8, 128], strides = [1, 1]} : vector<128x128xf32> to vector<8x128xf32>
    %72 = vector.extract_strided_slice %57 {offsets = [112, 0], sizes = [8, 128], strides = [1, 1]} : vector<128x128xf32> to vector<8x128xf32>
    %73 = vector.extract_strided_slice %57 {offsets = [120, 0], sizes = [8, 128], strides = [1, 1]} : vector<128x128xf32> to vector<8x128xf32>
    %74 = tpu.concatenate %58, %59, %60, %61, %62, %63, %64, %65, %66, %67, %68, %69, %70, %71, %72, %73 in 1 : vector<8x128xf32>, vector<8x128xf32>, vector<8x128xf32>, vector<8x128xf32>, vector<8x128xf32>, vector<8x128xf32>, vector<8x128xf32>, vector<8x128xf32>, vector<8x128xf32>, vector<8x128xf32>, vector<8x128xf32>, vector<8x128xf32>, vector<8x128xf32>, vector<8x128xf32>, vector<8x128xf32>, vector<8x128xf32> -> vector<8x2048xf32>
    %c1_i32_25 = arith.constant 1 : i32
    %75 = tpu.memref_slice %arg7[%c1_i32_25] : memref<2x!tpu.dma_semaphore, #tpu.memory_space<semaphore_mem>> -> memref<1x!tpu.dma_semaphore, #tpu.memory_space<semaphore_mem>>
    %76 = tpu.memref_squeeze %75 : memref<1x!tpu.dma_semaphore, #tpu.memory_space<semaphore_mem>> -> memref<!tpu.dma_semaphore, #tpu.memory_space<semaphore_mem>>
    tpu.wait_dma2 semaphore(%76 : memref<!tpu.dma_semaphore, #tpu.memory_space<semaphore_mem>>) src(%arg3 : memref<2048x50xf32, #tpu.memory_space<any>>) dst(%arg6 : memref<2048x50xf32, #tpu.memory_space<vmem>>)
    %c5 = arith.constant 5 : index
    %c0_26 = arith.constant 0 : index
    %77 = vector.load %arg1[%c5, %c0_26] : memref<192x128xf32, #tpu.memory_space<vmem>>, vector<1x50xf32>
    %c0_27 = arith.constant 0 : index
    %c0_28 = arith.constant 0 : index
    %78 = vector.load %arg6[%c0_27, %c0_28] : memref<2048x50xf32, #tpu.memory_space<vmem>>, vector<2048x50xf32>
    %cst_29 = arith.constant dense<0.000000e+00> : vector<8x50xf32>
    %79 = tpu.matmul %74, %78, %cst_29 {dimension_numbers = #tpu.dot_dimension_numbers<[1], [0], [0], [1], [0, 0, 1, 1], [], []>} : vector<8x2048xf32>, vector<2048x50xf32>, vector<8x50xf32> -> vector<8x50xf32>
    %80 = vector.broadcast %77 : vector<1x50xf32> to vector<8x50xf32>
    %81 = arith.addf %79, %80 : vector<8x50xf32>
    %cst_30 = arith.constant 0.000000e+00 : f32
    %82 = vector.broadcast %cst_30 : f32 to vector<8x50xf32>
    %83 = arith.cmpf ogt, %81, %82 : vector<8x50xf32>
    %cst_31 = arith.constant 0.00999999977 : f32
    %84 = vector.broadcast %cst_31 : f32 to vector<8x50xf32>
    %85 = arith.mulf %84, %81 : vector<8x50xf32>
    %86 = arith.select %83, %81, %85 : vector<8x50xi1>, vector<8x50xf32>
    %c8 = arith.constant 8 : index
    %c0_32 = arith.constant 0 : index
    %87 = vector.load %arg1[%c8, %c0_32] : memref<192x128xf32, #tpu.memory_space<vmem>>, vector<50x128xf32>
    %c6 = arith.constant 6 : index
    %c0_33 = arith.constant 0 : index
    %88 = vector.load %arg1[%c6, %c0_33] : memref<192x128xf32, #tpu.memory_space<vmem>>, vector<1x128xf32>
    %cst_34 = arith.constant dense<0.000000e+00> : vector<8x128xf32>
    %89 = tpu.matmul %86, %87, %cst_34 {dimension_numbers = #tpu.dot_dimension_numbers<[1], [0], [0], [1], [0, 0, 1, 1], [], []>} : vector<8x50xf32>, vector<50x128xf32>, vector<8x128xf32> -> vector<8x128xf32>
    %90 = vector.broadcast %88 : vector<1x128xf32> to vector<8x128xf32>
    %91 = arith.addf %89, %90 : vector<8x128xf32>
    %cst_35 = arith.constant 0.000000e+00 : f32
    %92 = vector.broadcast %cst_35 : f32 to vector<8x128xf32>
    %93 = arith.cmpf ogt, %91, %92 : vector<8x128xf32>
    %cst_36 = arith.constant 0.00999999977 : f32
    %94 = vector.broadcast %cst_36 : f32 to vector<8x128xf32>
    %95 = arith.mulf %94, %91 : vector<8x128xf32>
    %96 = arith.select %93, %91, %95 : vector<8x128xi1>, vector<8x128xf32>
    %c64 = arith.constant 64 : index
    %c0_37 = arith.constant 0 : index
    %97 = vector.load %arg1[%c64, %c0_37] : memref<192x128xf32, #tpu.memory_space<vmem>>, vector<128x128xf32>
    %c7 = arith.constant 7 : index
    %c0_38 = arith.constant 0 : index
    %98 = vector.load %arg1[%c7, %c0_38] : memref<192x128xf32, #tpu.memory_space<vmem>>, vector<1x128xf32>
    %cst_39 = arith.constant dense<0.000000e+00> : vector<8x128xf32>
    %99 = tpu.matmul %96, %97, %cst_39 {dimension_numbers = #tpu.dot_dimension_numbers<[1], [0], [0], [1], [0, 0, 1, 1], [], []>} : vector<8x128xf32>, vector<128x128xf32>, vector<8x128xf32> -> vector<8x128xf32>
    %100 = vector.broadcast %98 : vector<1x128xf32> to vector<8x128xf32>
    %101 = arith.addf %99, %100 : vector<8x128xf32>
    %102 = vector.extract_strided_slice %101 {offsets = [0, 0], sizes = [8, 1], strides = [1, 1]} : vector<8x128xf32> to vector<8x1xf32>
    %103 = vector.extract_strided_slice %101 {offsets = [0, 1], sizes = [8, 4], strides = [1, 1]} : vector<8x128xf32> to vector<8x4xf32>
    %104 = vector.broadcast %102 : vector<8x1xf32> to vector<8x4xf32>
    %105 = arith.addf %104, %103 : vector<8x4xf32>
    %106 = vector.extract_strided_slice %101 {offsets = [0, 5], sizes = [8, 1], strides = [1, 1]} : vector<8x128xf32> to vector<8x1xf32>
    %107 = vector.broadcast %106 : vector<8x1xf32> to vector<8x4xf32>
    %108 = arith.subf %105, %107 : vector<8x4xf32>
    %c0_40 = arith.constant 0 : index
    %c0_41 = arith.constant 0 : index
    %109 = vector.load %arg4[%c0_40, %c0_41] : memref<8x4xf32, #tpu.memory_space<vmem>>, vector<8x4xf32>
    tpu.vector_store %arg4[%c0_40, %c0_41], %108 {strides = array<i32>} : memref<8x4xf32, #tpu.memory_space<vmem>>, vector<8x4xf32>,
    return
  }
}

</mosaic_0001>

<llo_original>
// kernel: dueling_ddqn_forward.1
$region0: #{dueling_ddqn_forward.1}
  #allocation0 [shape = 'u32[]', space=smem, size = 0x4, offset = 0x4, fixed_abs, tag = 'smem constant byte address 0x4 - core index']
  #allocation1 [shape = 'u32[144,128]{1,0:T(1,128)}', space=vmem, size = 0x12000, scoped, tag = 'internal scratch']
  #allocation2 [shape = 'f32[3,128,128]{2,1,0:T(8,128)}', space=vmem, size = 0x30000, scoped, tag = 'scratch operand']
  #allocation3 [shape = 'f32[2048,50]{1,0:T(8,128)}', space=vmem, size = 0x100000, scoped, tag = 'scratch operand']
  #allocation4 [shape = 's32[2]{0}', space=sflag, size = 0x8, scoped, tag = 'scratch operand']
  #allocation5 [shape = 's32[]', space=sflag, size = 0x4, offset = 0, fixed_abs, tag = 'sflag constant byte address 0x0 - dummy sync flag']
  #allocation6 [shape = 's32[]', space=sflag, size = 0x4, offset = 0, fixed_abs, tag = 'sflag constant byte address 0x0 - dummy sync flag']
  %s0 = inlined_call_operand.vmem [shape: f32[128,1], index: 0, kind: input, shape index: {}]
  %s1 = inlined_call_operand.vmem [shape: f32[192,128], index: 1, kind: input, shape index: {}]
  %s2 = inlined_call_operand.vmem [shape: f32[3,128,128], index: 2, kind: input, shape index: {}]
  %s3 = inlined_call_operand.vmem [shape: f32[2048,50], index: 3, kind: input, shape index: {}]
  %s4 = inlined_call_operand.vmem [shape: f32[8,4], index: 4, kind: output, shape index: {}]
  %s5 = sld [smem:[#allocation0]]
  $region86: #{dueling_ddqn_forward.1} parent=0
    _
  %s7 = ssub.s32 1, %s5
  %s8 = scalar_select 0, %s7, %s5
  // Predicated region
  $region2: #{dueling_ddqn_forward.1} parent=0 // pred_check
    _
  $region3: #{dueling_ddqn_forward.1} parent=0 // pred_check_branch
    %10 = sbr.rel (0) target = $region5
  $region4: #{dueling_ddqn_forward.1} parent=0 // pred_region
    _
  $region5: #{dueling_ddqn_forward.1} parent=0 // pred_fallthru
    _
  // Predicated region
  $region6: #{dueling_ddqn_forward.1} parent=0 // pred_check
    _
  $region7: #{dueling_ddqn_forward.1} parent=0 // pred_check_branch
    %12 = sbr.rel (0) target = $region9
  $region8: #{dueling_ddqn_forward.1} parent=0 // pred_region
    _
  $region9: #{dueling_ddqn_forward.1} parent=0 // pred_fallthru
    _
  %p14 = scmp.lt.u32.totalorder 384, 8
  %p15 = pneg %p14
  // Predicated region
  $region10: #{dueling_ddqn_forward.1} parent=0 // pred_check
    _
  $region11: #{dueling_ddqn_forward.1} parent=0 // pred_check_branch
    %17 = sbr.rel (%p14) target = $region13
  $region12: #{dueling_ddqn_forward.1} parent=0 // pred_region
    %s33 = sand.u32 384, 7
    %p34 = scmp.eq.s32.totalorder %s33, 0
    // Predicated region
    $region25: #{dueling_ddqn_forward.1} parent=12 // pred_check
      %p35 = pneg %p34
    $region26: #{dueling_ddqn_forward.1} parent=12 // pred_check_branch
      %37 = sbr.rel (%p35) target = $region28
    $region27: #{dueling_ddqn_forward.1} parent=12 // pred_region
      loop: start=0, step=1, limit=1
      $region29: #{dueling_ddqn_forward.1} parent=27 // loop_pre_header
        _
      $region30: #{dueling_ddqn_forward.1} parent=27 // loop_header
        %s39 = sphi 0, %s43
        %p40 = scmp.ge.s32.totalorder %s39, 1
        %s44 = sphi %s2, %s2
        %s45 = sphi [#allocation2], [#allocation2]
      $region31: #{dueling_ddqn_forward.1} parent=27 // loop_header_branch
        %42 = sbr.rel (%p40) target = $region35
      $region32: #{dueling_ddqn_forward.1} parent=27 // loop_body
        %v46 = vld [vmem:[%s44] sm:$0xff]
        %47 = vst [vmem:[%s45] sm:$0xff] %v46
        %v48 = vld [vmem:[%s44 + $0x8] sm:$0xff]
        %49 = vst [vmem:[%s45 + $0x8] sm:$0xff] %v48
        %v50 = vld [vmem:[%s44 + $0x10] sm:$0xff]
        %51 = vst [vmem:[%s45 + $0x10] sm:$0xff] %v50
        %v52 = vld [vmem:[%s44 + $0x18] sm:$0xff]
        %53 = vst [vmem:[%s45 + $0x18] sm:$0xff] %v52
        %v54 = vld [vmem:[%s44 + $0x20] sm:$0xff]
        %55 = vst [vmem:[%s45 + $0x20] sm:$0xff] %v54
        %v56 = vld [vmem:[%s44 + $0x28] sm:$0xff]
        %57 = vst [vmem:[%s45 + $0x28] sm:$0xff] %v56
        %v58 = vld [vmem:[%s44 + $0x30] sm:$0xff]
        %59 = vst [vmem:[%s45 + $0x30] sm:$0xff] %v58
        %v60 = vld [vmem:[%s44 + $0x38] sm:$0xff]
        %61 = vst [vmem:[%s45 + $0x38] sm:$0xff] %v60
        %v62 = vld [vmem:[%s44 + $0x40] sm:$0xff]
        %63 = vst [vmem:[%s45 + $0x40] sm:$0xff] %v62
        %v64 = vld [vmem:[%s44 + $0x48] sm:$0xff]
        %65 = vst [vmem:[%s45 + $0x48] sm:$0xff] %v64
        %v66 = vld [vmem:[%s44 + $0x50] sm:$0xff]
        %67 = vst [vmem:[%s45 + $0x50] sm:$0xff] %v66
        %v68 = vld [vmem:[%s44 + $0x58] sm:$0xff]
        %69 = vst [vmem:[%s45 + $0x58] sm:$0xff] %v68
        %v70 = vld [vmem:[%s44 + $0x60] sm:$0xff]
        %71 = vst [vmem:[%s45 + $0x60] sm:$0xff] %v70
        %v72 = vld [vmem:[%s44 + $0x68] sm:$0xff]
        %73 = vst [vmem:[%s45 + $0x68] sm:$0xff] %v72
        %v74 = vld [vmem:[%s44 + $0x70] sm:$0xff]
        %75 = vst [vmem:[%s45 + $0x70] sm:$0xff] %v74
        %v76 = vld [vmem:[%s44 + $0x78] sm:$0xff]
        %77 = vst [vmem:[%s45 + $0x78] sm:$0xff] %v76
        %v78 = vld [vmem:[%s44 + $0x80] sm:$0xff]
        %79 = vst [vmem:[%s45 + $0x80] sm:$0xff] %v78
        %v80 = vld [vmem:[%s44 + $0x88] sm:$0xff]
        %81 = vst [vmem:[%s45 + $0x88] sm:$0xff] %v80
        %v82 = vld [vmem:[%s44 + $0x90] sm:$0xff]
        %83 = vst [vmem:[%s45 + $0x90] sm:$0xff] %v82
        %v84 = vld [vmem:[%s44 + $0x98] sm:$0xff]
        %85 = vst [vmem:[%s45 + $0x98] sm:$0xff] %v84
        %v86 = vld [vmem:[%s44 + $0xa0] sm:$0xff]
        %87 = vst [vmem:[%s45 + $0xa0] sm:$0xff] %v86
        %v88 = vld [vmem:[%s44 + $0xa8] sm:$0xff]
        %89 = vst [vmem:[%s45 + $0xa8] sm:$0xff] %v88
        %v90 = vld [vmem:[%s44 + $0xb0] sm:$0xff]
        %91 = vst [vmem:[%s45 + $0xb0] sm:$0xff] %v90
        %v92 = vld [vmem:[%s44 + $0xb8] sm:$0xff]
        %93 = vst [vmem:[%s45 + $0xb8] sm:$0xff] %v92
        %v94 = vld [vmem:[%s44 + $0xc0] sm:$0xff]
        %95 = vst [vmem:[%s45 + $0xc0] sm:$0xff] %v94
        %v96 = vld [vmem:[%s44 + $0xc8] sm:$0xff]
        %97 = vst [vmem:[%s45 + $0xc8] sm:$0xff] %v96
        %v98 = vld [vmem:[%s44 + $0xd0] sm:$0xff]
        %99 = vst [vmem:[%s45 + $0xd0] sm:$0xff] %v98
        %v100 = vld [vmem:[%s44 + $0xd8] sm:$0xff]
        %101 = vst [vmem:[%s45 + $0xd8] sm:$0xff] %v100
        %v102 = vld [vmem:[%s44 + $0xe0] sm:$0xff]
        %103 = vst [vmem:[%s45 + $0xe0] sm:$0xff] %v102
        %v104 = vld [vmem:[%s44 + $0xe8] sm:$0xff]
        %105 = vst [vmem:[%s45 + $0xe8] sm:$0xff] %v104
        %v106 = vld [vmem:[%s44 + $0xf0] sm:$0xff]
        %107 = vst [vmem:[%s45 + $0xf0] sm:$0xff] %v106
        %v108 = vld [vmem:[%s44 + $0xf8] sm:$0xff]
        %109 = vst [vmem:[%s45 + $0xf8] sm:$0xff] %v108
        %v110 = vld [vmem:[%s44 + $0x100] sm:$0xff]
        %111 = vst [vmem:[%s45 + $0x100] sm:$0xff] %v110
        %v112 = vld [vmem:[%s44 + $0x108] sm:$0xff]
        %113 = vst [vmem:[%s45 + $0x108] sm:$0xff] %v112
        %v114 = vld [vmem:[%s44 + $0x110] sm:$0xff]
        %115 = vst [vmem:[%s45 + $0x110] sm:$0xff] %v114
        %v116 = vld [vmem:[%s44 + $0x118] sm:$0xff]
        %117 = vst [vmem:[%s45 + $0x118] sm:$0xff] %v116
        %v118 = vld [vmem:[%s44 + $0x120] sm:$0xff]
        %119 = vst [vmem:[%s45 + $0x120] sm:$0xff] %v118
        %v120 = vld [vmem:[%s44 + $0x128] sm:$0xff]
        %121 = vst [vmem:[%s45 + $0x128] sm:$0xff] %v120
        %v122 = vld [vmem:[%s44 + $0x130] sm:$0xff]
        %123 = vst [vmem:[%s45 + $0x130] sm:$0xff] %v122
        %v124 = vld [vmem:[%s44 + $0x138] sm:$0xff]
        %125 = vst [vmem:[%s45 + $0x138] sm:$0xff] %v124
        %v126 = vld [vmem:[%s44 + $0x140] sm:$0xff]
        %127 = vst [vmem:[%s45 + $0x140] sm:$0xff] %v126
        %v128 = vld [vmem:[%s44 + $0x148] sm:$0xff]
        %129 = vst [vmem:[%s45 + $0x148] sm:$0xff] %v128
        %v130 = vld [vmem:[%s44 + $0x150] sm:$0xff]
        %131 = vst [vmem:[%s45 + $0x150] sm:$0xff] %v130
        %v132 = vld [vmem:[%s44 + $0x158] sm:$0xff]
        %133 = vst [vmem:[%s45 + $0x158] sm:$0xff] %v132
        %v134 = vld [vmem:[%s44 + $0x160] sm:$0xff]
        %135 = vst [vmem:[%s45 + $0x160] sm:$0xff] %v134
        %v136 = vld [vmem:[%s44 + $0x168] sm:$0xff]
        %137 = vst [vmem:[%s45 + $0x168] sm:$0xff] %v136
        %v138 = vld [vmem:[%s44 + $0x170] sm:$0xff]
        %139 = vst [vmem:[%s45 + $0x170] sm:$0xff] %v138
        %v140 = vld [vmem:[%s44 + $0x178] sm:$0xff]
        %141 = vst [vmem:[%s45 + $0x178] sm:$0xff] %v140
      $region33: #{dueling_ddqn_forward.1} parent=27 // loop_footer
        %s43 = sadd.s32 1, %s39
      $region34: #{dueling_ddqn_forward.1} parent=27 // loop_footer_branch
        %38 = sbr.rel target = $region30
      $region35: #{dueling_ddqn_forward.1} parent=27 // loop_exit
        _
    $region28: #{dueling_ddqn_forward.1} parent=12 // pred_fallthru
      _
    %p142 = pneg %p34
    // Predicated region
    $region36: #{dueling_ddqn_forward.1} parent=12 // pred_check
      _
    $region37: #{dueling_ddqn_forward.1} parent=12 // pred_check_branch
      %144 = sbr.rel (%p34) target = $region39
    $region38: #{dueling_ddqn_forward.1} parent=12 // pred_region
      %s145 = sand.u32 384, 7
    $region39: #{dueling_ddqn_forward.1} parent=12 // pred_fallthru
      _
  $region13: #{dueling_ddqn_forward.1} parent=0 // pred_fallthru
    _
  // Predicated region
  $region14: #{dueling_ddqn_forward.1} parent=0 // pred_check
    %p18 = pneg %p14
  $region15: #{dueling_ddqn_forward.1} parent=0 // pred_check_branch
    %20 = sbr.rel (%p18) target = $region17
  $region16: #{dueling_ddqn_forward.1} parent=0 // pred_region
    %s21 = sshll.u32 1, 384
    %s22 = ssub.s32 %s21, 1
    loop: start=0, step=1, limit=1
    $region18: #{dueling_ddqn_forward.1} parent=16 // loop_pre_header
      _
    $region19: #{dueling_ddqn_forward.1} parent=16 // loop_header
      %s24 = sphi 0, %s28
      %p25 = scmp.ge.s32.totalorder %s24, 1
      %s29 = sphi %s2, %s2
      %s30 = sphi [#allocation2], [#allocation2]
    $region20: #{dueling_ddqn_forward.1} parent=16 // loop_header_branch
      %27 = sbr.rel (%p25) target = $region24
    $region21: #{dueling_ddqn_forward.1} parent=16 // loop_body
      %v31 = vld [vmem:[%s29] sm:%s22]
      %32 = vst [vmem:[%s30] sm:%s22] %v31
    $region22: #{dueling_ddqn_forward.1} parent=16 // loop_footer
      %s28 = sadd.s32 1, %s24
    $region23: #{dueling_ddqn_forward.1} parent=16 // loop_footer_branch
      %23 = sbr.rel target = $region19
    $region24: #{dueling_ddqn_forward.1} parent=16 // loop_exit
      _
  $region17: #{dueling_ddqn_forward.1} parent=0 // pred_fallthru
    _
  // Predicated region
  $region40: #{dueling_ddqn_forward.1} parent=0 // pred_check
    _
  $region41: #{dueling_ddqn_forward.1} parent=0 // pred_check_branch
    %148 = sbr.rel (0) target = $region43
  $region42: #{dueling_ddqn_forward.1} parent=0 // pred_region
    %149 = vsyncadd [#allocation4], 6144
  $region43: #{dueling_ddqn_forward.1} parent=0 // pred_fallthru
    _
  %s150 = scalar_lea.sflag [#allocation4], 1
  %p152 = scmp.lt.u32.totalorder 2048, 8
  %p153 = pneg %p152
  // Predicated region
  $region44: #{dueling_ddqn_forward.1} parent=0 // pred_check
    _
  $region45: #{dueling_ddqn_forward.1} parent=0 // pred_check_branch
    %155 = sbr.rel (%p152) target = $region47
  $region46: #{dueling_ddqn_forward.1} parent=0 // pred_region
    %s171 = sand.u32 2048, 7
    %p172 = scmp.eq.s32.totalorder %s171, 0
    // Predicated region
    $region59: #{dueling_ddqn_forward.1} parent=46 // pred_check
      %p173 = pneg %p172
    $region60: #{dueling_ddqn_forward.1} parent=46 // pred_check_branch
      %175 = sbr.rel (%p173) target = $region62
    $region61: #{dueling_ddqn_forward.1} parent=46 // pred_region
      loop: start=0, step=1, limit=1
      $region63: #{dueling_ddqn_forward.1} parent=61 // loop_pre_header
        _
      $region64: #{dueling_ddqn_forward.1} parent=61 // loop_header
        %s177 = sphi 0, %s181
        %p178 = scmp.ge.s32.totalorder %s177, 1
        %s182 = sphi %s3, %s3
        %s183 = sphi [#allocation3], [#allocation3]
      $region65: #{dueling_ddqn_forward.1} parent=61 // loop_header_branch
        %180 = sbr.rel (%p178) target = $region69
      $region66: #{dueling_ddqn_forward.1} parent=61 // loop_body
        %v184 = vld [vmem:[%s182] sm:$0xff]
        %185 = vst [vmem:[%s183] sm:$0xff] %v184
        %v186 = vld [vmem:[%s182 + $0x8] sm:$0xff]
        %187 = vst [vmem:[%s183 + $0x8] sm:$0xff] %v186
        %v188 = vld [vmem:[%s182 + $0x10] sm:$0xff]
        %189 = vst [vmem:[%s183 + $0x10] sm:$0xff] %v188
        %v190 = vld [vmem:[%s182 + $0x18] sm:$0xff]
        %191 = vst [vmem:[%s183 + $0x18] sm:$0xff] %v190
        %v192 = vld [vmem:[%s182 + $0x20] sm:$0xff]
        %193 = vst [vmem:[%s183 + $0x20] sm:$0xff] %v192
        %v194 = vld [vmem:[%s182 + $0x28] sm:$0xff]
        %195 = vst [vmem:[%s183 + $0x28] sm:$0xff] %v194
        %v196 = vld [vmem:[%s182 + $0x30] sm:$0xff]
        %197 = vst [vmem:[%s183 + $0x30] sm:$0xff] %v196
        %v198 = vld [vmem:[%s182 + $0x38] sm:$0xff]
        %199 = vst [vmem:[%s183 + $0x38] sm:$0xff] %v198
        %v200 = vld [vmem:[%s182 + $0x40] sm:$0xff]
        %201 = vst [vmem:[%s183 + $0x40] sm:$0xff] %v200
        %v202 = vld [vmem:[%s182 + $0x48] sm:$0xff]
        %203 = vst [vmem:[%s183 + $0x48] sm:$0xff] %v202
        %v204 = vld [vmem:[%s182 + $0x50] sm:$0xff]
        %205 = vst [vmem:[%s183 + $0x50] sm:$0xff] %v204
        %v206 = vld [vmem:[%s182 + $0x58] sm:$0xff]
        %207 = vst [vmem:[%s183 + $0x58] sm:$0xff] %v206
        %v208 = vld [vmem:[%s182 + $0x60] sm:$0xff]
        %209 = vst [vmem:[%s183 + $0x60] sm:$0xff] %v208
        %v210 = vld [vmem:[%s182 + $0x68] sm:$0xff]
        %211 = vst [vmem:[%s183 + $0x68] sm:$0xff] %v210
        %v212 = vld [vmem:[%s182 + $0x70] sm:$0xff]
        %213 = vst [vmem:[%s183 + $0x70] sm:$0xff] %v212
        %v214 = vld [vmem:[%s182 + $0x78] sm:$0xff]
        %215 = vst [vmem:[%s183 + $0x78] sm:$0xff] %v214
        %v216 = vld [vmem:[%s182 + $0x80] sm:$0xff]
        %217 = vst [vmem:[%s183 + $0x80] sm:$0xff] %v216
        %v218 = vld [vmem:[%s182 + $0x88] sm:$0xff]
        %219 = vst [vmem:[%s183 + $0x88] sm:$0xff] %v218
        %v220 = vld [vmem:[%s182 + $0x90] sm:$0xff]
        %221 = vst [vmem:[%s183 + $0x90] sm:$0xff] %v220
        %v222 = vld [vmem:[%s182 + $0x98] sm:$0xff]
        %223 = vst [vmem:[%s183 + $0x98] sm:$0xff] %v222
        %v224 = vld [vmem:[%s182 + $0xa0] sm:$0xff]
        %225 = vst [vmem:[%s183 + $0xa0] sm:$0xff] %v224
        %v226 = vld [vmem:[%s182 + $0xa8] sm:$0xff]
        %227 = vst [vmem:[%s183 + $0xa8] sm:$0xff] %v226
        %v228 = vld [vmem:[%s182 + $0xb0] sm:$0xff]
        %229 = vst [vmem:[%s183 + $0xb0] sm:$0xff] %v228
        %v230 = vld [vmem:[%s182 + $0xb8] sm:$0xff]
        %231 = vst [vmem:[%s183 + $0xb8] sm:$0xff] %v230
        %v232 = vld [vmem:[%s182 + $0xc0] sm:$0xff]
        %233 = vst [vmem:[%s183 + $0xc0] sm:$0xff] %v232
        %v234 = vld [vmem:[%s182 + $0xc8] sm:$0xff]
        %235 = vst [vmem:[%s183 + $0xc8] sm:$0xff] %v234
        %v236 = vld [vmem:[%s182 + $0xd0] sm:$0xff]
        %237 = vst [vmem:[%s183 + $0xd0] sm:$0xff] %v236
        %v238 = vld [vmem:[%s182 + $0xd8] sm:$0xff]
        %239 = vst [vmem:[%s183 + $0xd8] sm:$0xff] %v238
        %v240 = vld [vmem:[%s182 + $0xe0] sm:$0xff]
        %241 = vst [vmem:[%s183 + $0xe0] sm:$0xff] %v240
        %v242 = vld [vmem:[%s182 + $0xe8] sm:$0xff]
        %243 = vst [vmem:[%s183 + $0xe8] sm:$0xff] %v242
        %v244 = vld [vmem:[%s182 + $0xf0] sm:$0xff]
        %245 = vst [vmem:[%s183 + $0xf0] sm:$0xff] %v244
        %v246 = vld [vmem:[%s182 + $0xf8] sm:$0xff]
        %247 = vst [vmem:[%s183 + $0xf8] sm:$0xff] %v246
        %v248 = vld [vmem:[%s182 + $0x100] sm:$0xff]
        %249 = vst [vmem:[%s183 + $0x100] sm:$0xff] %v248
        %v250 = vld [vmem:[%s182 + $0x108] sm:$0xff]
        %251 = vst [vmem:[%s183 + $0x108] sm:$0xff] %v250
        %v252 = vld [vmem:[%s182 + $0x110] sm:$0xff]
        %253 = vst [vmem:[%s183 + $0x110] sm:$0xff] %v252
        %v254 = vld [vmem:[%s182 + $0x118] sm:$0xff]
        %255 = vst [vmem:[%s183 + $0x118] sm:$0xff] %v254
        %v256 = vld [vmem:[%s182 + $0x120] sm:$0xff]
        %257 = vst [vmem:[%s183 + $0x120] sm:$0xff] %v256
        %v258 = vld [vmem:[%s182 + $0x128] sm:$0xff]
        %259 = vst [vmem:[%s183 + $0x128] sm:$0xff] %v258
        %v260 = vld [vmem:[%s182 + $0x130] sm:$0xff]
        %261 = vst [vmem:[%s183 + $0x130] sm:$0xff] %v260
        %v262 = vld [vmem:[%s182 + $0x138] sm:$0xff]
        %263 = vst [vmem:[%s183 + $0x138] sm:$0xff] %v262
        %v264 = vld [vmem:[%s182 + $0x140] sm:$0xff]
        %265 = vst [vmem:[%s183 + $0x140] sm:$0xff] %v264
        %v266 = vld [vmem:[%s182 + $0x148] sm:$0xff]
        %267 = vst [vmem:[%s183 + $0x148] sm:$0xff] %v266
        %v268 = vld [vmem:[%s182 + $0x150] sm:$0xff]
        %269 = vst [vmem:[%s183 + $0x150] sm:$0xff] %v268
        %v270 = vld [vmem:[%s182 + $0x158] sm:$0xff]
        %271 = vst [vmem:[%s183 + $0x158] sm:$0xff] %v270
        %v272 = vld [vmem:[%s182 + $0x160] sm:$0xff]
        %273 = vst [vmem:[%s183 + $0x160] sm:$0xff] %v272
        %v274 = vld [vmem:[%s182 + $0x168] sm:$0xff]
        %275 = vst [vmem:[%s183 + $0x168] sm:$0xff] %v274
        %v276 = vld [vmem:[%s182 + $0x170] sm:$0xff]
        %277 = vst [vmem:[%s183 + $0x170] sm:$0xff] %v276
        %v278 = vld [vmem:[%s182 + $0x178] sm:$0xff]
        %279 = vst [vmem:[%s183 + $0x178] sm:$0xff] %v278
        %v280 = vld [vmem:[%s182 + $0x180] sm:$0xff]
        %281 = vst [vmem:[%s183 + $0x180] sm:$0xff] %v280
        %v282 = vld [vmem:[%s182 + $0x188] sm:$0xff]
        %283 = vst [vmem:[%s183 + $0x188] sm:$0xff] %v282
        %v284 = vld [vmem:[%s182 + $0x190] sm:$0xff]
        %285 = vst [vmem:[%s183 + $0x190] sm:$0xff] %v284
        %v286 = vld [vmem:[%s182 + $0x198] sm:$0xff]
        %287 = vst [vmem:[%s183 + $0x198] sm:$0xff] %v286
        %v288 = vld [vmem:[%s182 + $0x1a0] sm:$0xff]
        %289 = vst [vmem:[%s183 + $0x1a0] sm:$0xff] %v288
        %v290 = vld [vmem:[%s182 + $0x1a8] sm:$0xff]
        %291 = vst [vmem:[%s183 + $0x1a8] sm:$0xff] %v290
        %v292 = vld [vmem:[%s182 + $0x1b0] sm:$0xff]
        %293 = vst [vmem:[%s183 + $0x1b0] sm:$0xff] %v292
        %v294 = vld [vmem:[%s182 + $0x1b8] sm:$0xff]
        %295 = vst [vmem:[%s183 + $0x1b8] sm:$0xff] %v294
        %v296 = vld [vmem:[%s182 + $0x1c0] sm:$0xff]
        %297 = vst [vmem:[%s183 + $0x1c0] sm:$0xff] %v296
        %v298 = vld [vmem:[%s182 + $0x1c8] sm:$0xff]
        %299 = vst [vmem:[%s183 + $0x1c8] sm:$0xff] %v298
        %v300 = vld [vmem:[%s182 + $0x1d0] sm:$0xff]
        %301 = vst [vmem:[%s183 + $0x1d0] sm:$0xff] %v300
        %v302 = vld [vmem:[%s182 + $0x1d8] sm:$0xff]
        %303 = vst [vmem:[%s183 + $0x1d8] sm:$0xff] %v302
        %v304 = vld [vmem:[%s182 + $0x1e0] sm:$0xff]
        %305 = vst [vmem:[%s183 + $0x1e0] sm:$0xff] %v304
        %v306 = vld [vmem:[%s182 + $0x1e8] sm:$0xff]
        %307 = vst [vmem:[%s183 + $0x1e8] sm:$0xff] %v306
        %v308 = vld [vmem:[%s182 + $0x1f0] sm:$0xff]
        %309 = vst [vmem:[%s183 + $0x1f0] sm:$0xff] %v308
        %v310 = vld [vmem:[%s182 + $0x1f8] sm:$0xff]
        %311 = vst [vmem:[%s183 + $0x1f8] sm:$0xff] %v310
        %v312 = vld [vmem:[%s182 + $0x200] sm:$0xff]
        %313 = vst [vmem:[%s183 + $0x200] sm:$0xff] %v312
        %v314 = vld [vmem:[%s182 + $0x208] sm:$0xff]
        %315 = vst [vmem:[%s183 + $0x208] sm:$0xff] %v314
        %v316 = vld [vmem:[%s182 + $0x210] sm:$0xff]
        %317 = vst [vmem:[%s183 + $0x210] sm:$0xff] %v316
        %v318 = vld [vmem:[%s182 + $0x218] sm:$0xff]
        %319 = vst [vmem:[%s183 + $0x218] sm:$0xff] %v318
        %v320 = vld [vmem:[%s182 + $0x220] sm:$0xff]
        %321 = vst [vmem:[%s183 + $0x220] sm:$0xff] %v320
        %v322 = vld [vmem:[%s182 + $0x228] sm:$0xff]
        %323 = vst [vmem:[%s183 + $0x228] sm:$0xff] %v322
        %v324 = vld [vmem:[%s182 + $0x230] sm:$0xff]
        %325 = vst [vmem:[%s183 + $0x230] sm:$0xff] %v324
        %v326 = vld [vmem:[%s182 + $0x238] sm:$0xff]
        %327 = vst [vmem:[%s183 + $0x238] sm:$0xff] %v326
        %v328 = vld [vmem:[%s182 + $0x240] sm:$0xff]
        %329 = vst [vmem:[%s183 + $0x240] sm:$0xff] %v328
        %v330 = vld [vmem:[%s182 + $0x248] sm:$0xff]
        %331 = vst [vmem:[%s183 + $0x248] sm:$0xff] %v330
        %v332 = vld [vmem:[%s182 + $0x250] sm:$0xff]
        %333 = vst [vmem:[%s183 + $0x250] sm:$0xff] %v332
        %v334 = vld [vmem:[%s182 + $0x258] sm:$0xff]
        %335 = vst [vmem:[%s183 + $0x258] sm:$0xff] %v334
        %v336 = vld [vmem:[%s182 + $0x260] sm:$0xff]
        %337 = vst [vmem:[%s183 + $0x260] sm:$0xff] %v336
        %v338 = vld [vmem:[%s182 + $0x268] sm:$0xff]
        %339 = vst [vmem:[%s183 + $0x268] sm:$0xff] %v338
        %v340 = vld [vmem:[%s182 + $0x270] sm:$0xff]
        %341 = vst [vmem:[%s183 + $0x270] sm:$0xff] %v340
        %v342 = vld [vmem:[%s182 + $0x278] sm:$0xff]
        %343 = vst [vmem:[%s183 + $0x278] sm:$0xff] %v342
        %v344 = vld [vmem:[%s182 + $0x280] sm:$0xff]
        %345 = vst [vmem:[%s183 + $0x280] sm:$0xff] %v344
        %v346 = vld [vmem:[%s182 + $0x288] sm:$0xff]
        %347 = vst [vmem:[%s183 + $0x288] sm:$0xff] %v346
        %v348 = vld [vmem:[%s182 + $0x290] sm:$0xff]
        %349 = vst [vmem:[%s183 + $0x290] sm:$0xff] %v348
        %v350 = vld [vmem:[%s182 + $0x298] sm:$0xff]
        %351 = vst [vmem:[%s183 + $0x298] sm:$0xff] %v350
        %v352 = vld [vmem:[%s182 + $0x2a0] sm:$0xff]
        %353 = vst [vmem:[%s183 + $0x2a0] sm:$0xff] %v352
        %v354 = vld [vmem:[%s182 + $0x2a8] sm:$0xff]
        %355 = vst [vmem:[%s183 + $0x2a8] sm:$0xff] %v354
        %v356 = vld [vmem:[%s182 + $0x2b0] sm:$0xff]
        %357 = vst [vmem:[%s183 + $0x2b0] sm:$0xff] %v356
        %v358 = vld [vmem:[%s182 + $0x2b8] sm:$0xff]
        %359 = vst [vmem:[%s183 + $0x2b8] sm:$0xff] %v358
        %v360 = vld [vmem:[%s182 + $0x2c0] sm:$0xff]
        %361 = vst [vmem:[%s183 + $0x2c0] sm:$0xff] %v360
        %v362 = vld [vmem:[%s182 + $0x2c8] sm:$0xff]
        %363 = vst [vmem:[%s183 + $0x2c8] sm:$0xff] %v362
        %v364 = vld [vmem:[%s182 + $0x2d0] sm:$0xff]
        %365 = vst [vmem:[%s183 + $0x2d0] sm:$0xff] %v364
        %v366 = vld [vmem:[%s182 + $0x2d8] sm:$0xff]
        %367 = vst [vmem:[%s183 + $0x2d8] sm:$0xff] %v366
        %v368 = vld [vmem:[%s182 + $0x2e0] sm:$0xff]
        %369 = vst [vmem:[%s183 + $0x2e0] sm:$0xff] %v368
        %v370 = vld [vmem:[%s182 + $0x2e8] sm:$0xff]
        %371 = vst [vmem:[%s183 + $0x2e8] sm:$0xff] %v370
        %v372 = vld [vmem:[%s182 + $0x2f0] sm:$0xff]
        %373 = vst [vmem:[%s183 + $0x2f0] sm:$0xff] %v372
        %v374 = vld [vmem:[%s182 + $0x2f8] sm:$0xff]
        %375 = vst [vmem:[%s183 + $0x2f8] sm:$0xff] %v374
        %v376 = vld [vmem:[%s182 + $0x300] sm:$0xff]
        %377 = vst [vmem:[%s183 + $0x300] sm:$0xff] %v376
        %v378 = vld [vmem:[%s182 + $0x308] sm:$0xff]
        %379 = vst [vmem:[%s183 + $0x308] sm:$0xff] %v378
        %v380 = vld [vmem:[%s182 + $0x310] sm:$0xff]
        %381 = vst [vmem:[%s183 + $0x310] sm:$0xff] %v380
        %v382 = vld [vmem:[%s182 + $0x318] sm:$0xff]
        %383 = vst [vmem:[%s183 + $0x318] sm:$0xff] %v382
        %v384 = vld [vmem:[%s182 + $0x320] sm:$0xff]
        %385 = vst [vmem:[%s183 + $0x320] sm:$0xff] %v384
        %v386 = vld [vmem:[%s182 + $0x328] sm:$0xff]
        %387 = vst [vmem:[%s183 + $0x328] sm:$0xff] %v386
        %v388 = vld [vmem:[%s182 + $0x330] sm:$0xff]
        %389 = vst [vmem:[%s183 + $0x330] sm:$0xff] %v388
        %v390 = vld [vmem:[%s182 + $0x338] sm:$0xff]
        %391 = vst [vmem:[%s183 + $0x338] sm:$0xff] %v390
        %v392 = vld [vmem:[%s182 + $0x340] sm:$0xff]
        %393 = vst [vmem:[%s183 + $0x340] sm:$0xff] %v392
        %v394 = vld [vmem:[%s182 + $0x348] sm:$0xff]
        %395 = vst [vmem:[%s183 + $0x348] sm:$0xff] %v394
        %v396 = vld [vmem:[%s182 + $0x350] sm:$0xff]
        %397 = vst [vmem:[%s183 + $0x350] sm:$0xff] %v396
        %v398 = vld [vmem:[%s182 + $0x358] sm:$0xff]
        %399 = vst [vmem:[%s183 + $0x358] sm:$0xff] %v398
        %v400 = vld [vmem:[%s182 + $0x360] sm:$0xff]
        %401 = vst [vmem:[%s183 + $0x360] sm:$0xff] %v400
        %v402 = vld [vmem:[%s182 + $0x368] sm:$0xff]
        %403 = vst [vmem:[%s183 + $0x368] sm:$0xff] %v402
        %v404 = vld [vmem:[%s182 + $0x370] sm:$0xff]
        %405 = vst [vmem:[%s183 + $0x370] sm:$0xff] %v404
        %v406 = vld [vmem:[%s182 + $0x378] sm:$0xff]
        %407 = vst [vmem:[%s183 + $0x378] sm:$0xff] %v406
        %v408 = vld [vmem:[%s182 + $0x380] sm:$0xff]
        %409 = vst [vmem:[%s183 + $0x380] sm:$0xff] %v408
        %v410 = vld [vmem:[%s182 + $0x388] sm:$0xff]
        %411 = vst [vmem:[%s183 + $0x388] sm:$0xff] %v410
        %v412 = vld [vmem:[%s182 + $0x390] sm:$0xff]
        %413 = vst [vmem:[%s183 + $0x390] sm:$0xff] %v412
        %v414 = vld [vmem:[%s182 + $0x398] sm:$0xff]
        %415 = vst [vmem:[%s183 + $0x398] sm:$0xff] %v414
        %v416 = vld [vmem:[%s182 + $0x3a0] sm:$0xff]
        %417 = vst [vmem:[%s183 + $0x3a0] sm:$0xff] %v416
        %v418 = vld [vmem:[%s182 + $0x3a8] sm:$0xff]
        %419 = vst [vmem:[%s183 + $0x3a8] sm:$0xff] %v418
        %v420 = vld [vmem:[%s182 + $0x3b0] sm:$0xff]
        %421 = vst [vmem:[%s183 + $0x3b0] sm:$0xff] %v420
        %v422 = vld [vmem:[%s182 + $0x3b8] sm:$0xff]
        %423 = vst [vmem:[%s183 + $0x3b8] sm:$0xff] %v422
        %v424 = vld [vmem:[%s182 + $0x3c0] sm:$0xff]
        %425 = vst [vmem:[%s183 + $0x3c0] sm:$0xff] %v424
        %v426 = vld [vmem:[%s182 + $0x3c8] sm:$0xff]
        %427 = vst [vmem:[%s183 + $0x3c8] sm:$0xff] %v426
        %v428 = vld [vmem:[%s182 + $0x3d0] sm:$0xff]
        %429 = vst [vmem:[%s183 + $0x3d0] sm:$0xff] %v428
        %v430 = vld [vmem:[%s182 + $0x3d8] sm:$0xff]
        %431 = vst [vmem:[%s183 + $0x3d8] sm:$0xff] %v430
        %v432 = vld [vmem:[%s182 + $0x3e0] sm:$0xff]
        %433 = vst [vmem:[%s183 + $0x3e0] sm:$0xff] %v432
        %v434 = vld [vmem:[%s182 + $0x3e8] sm:$0xff]
        %435 = vst [vmem:[%s183 + $0x3e8] sm:$0xff] %v434
        %v436 = vld [vmem:[%s182 + $0x3f0] sm:$0xff]
        %437 = vst [vmem:[%s183 + $0x3f0] sm:$0xff] %v436
        %v438 = vld [vmem:[%s182 + $0x3f8] sm:$0xff]
        %439 = vst [vmem:[%s183 + $0x3f8] sm:$0xff] %v438
        %v440 = vld [vmem:[%s182 + $0x400] sm:$0xff]
        %441 = vst [vmem:[%s183 + $0x400] sm:$0xff] %v440
        %v442 = vld [vmem:[%s182 + $0x408] sm:$0xff]
        %443 = vst [vmem:[%s183 + $0x408] sm:$0xff] %v442
        %v444 = vld [vmem:[%s182 + $0x410] sm:$0xff]
        %445 = vst [vmem:[%s183 + $0x410] sm:$0xff] %v444
        %v446 = vld [vmem:[%s182 + $0x418] sm:$0xff]
        %447 = vst [vmem:[%s183 + $0x418] sm:$0xff] %v446
        %v448 = vld [vmem:[%s182 + $0x420] sm:$0xff]
        %449 = vst [vmem:[%s183 + $0x420] sm:$0xff] %v448
        %v450 = vld [vmem:[%s182 + $0x428] sm:$0xff]
        %451 = vst [vmem:[%s183 + $0x428] sm:$0xff] %v450
        %v452 = vld [vmem:[%s182 + $0x430] sm:$0xff]
        %453 = vst [vmem:[%s183 + $0x430] sm:$0xff] %v452
        %v454 = vld [vmem:[%s182 + $0x438] sm:$0xff]
        %455 = vst [vmem:[%s183 + $0x438] sm:$0xff] %v454
        %v456 = vld [vmem:[%s182 + $0x440] sm:$0xff]
        %457 = vst [vmem:[%s183 + $0x440] sm:$0xff] %v456
        %v458 = vld [vmem:[%s182 + $0x448] sm:$0xff]
        %459 = vst [vmem:[%s183 + $0x448] sm:$0xff] %v458
        %v460 = vld [vmem:[%s182 + $0x450] sm:$0xff]
        %461 = vst [vmem:[%s183 + $0x450] sm:$0xff] %v460
        %v462 = vld [vmem:[%s182 + $0x458] sm:$0xff]
        %463 = vst [vmem:[%s183 + $0x458] sm:$0xff] %v462
        %v464 = vld [vmem:[%s182 + $0x460] sm:$0xff]
        %465 = vst [vmem:[%s183 + $0x460] sm:$0xff] %v464
        %v466 = vld [vmem:[%s182 + $0x468] sm:$0xff]
        %467 = vst [vmem:[%s183 + $0x468] sm:$0xff] %v466
        %v468 = vld [vmem:[%s182 + $0x470] sm:$0xff]
        %469 = vst [vmem:[%s183 + $0x470] sm:$0xff] %v468
        %v470 = vld [vmem:[%s182 + $0x478] sm:$0xff]
        %471 = vst [vmem:[%s183 + $0x478] sm:$0xff] %v470
        %v472 = vld [vmem:[%s182 + $0x480] sm:$0xff]
        %473 = vst [vmem:[%s183 + $0x480] sm:$0xff] %v472
        %v474 = vld [vmem:[%s182 + $0x488] sm:$0xff]
        %475 = vst [vmem:[%s183 + $0x488] sm:$0xff] %v474
        %v476 = vld [vmem:[%s182 + $0x490] sm:$0xff]
        %477 = vst [vmem:[%s183 + $0x490] sm:$0xff] %v476
        %v478 = vld [vmem:[%s182 + $0x498] sm:$0xff]
        %479 = vst [vmem:[%s183 + $0x498] sm:$0xff] %v478
        %v480 = vld [vmem:[%s182 + $0x4a0] sm:$0xff]
        %481 = vst [vmem:[%s183 + $0x4a0] sm:$0xff] %v480
        %v482 = vld [vmem:[%s182 + $0x4a8] sm:$0xff]
        %483 = vst [vmem:[%s183 + $0x4a8] sm:$0xff] %v482
        %v484 = vld [vmem:[%s182 + $0x4b0] sm:$0xff]
        %485 = vst [vmem:[%s183 + $0x4b0] sm:$0xff] %v484
        %v486 = vld [vmem:[%s182 + $0x4b8] sm:$0xff]
        %487 = vst [vmem:[%s183 + $0x4b8] sm:$0xff] %v486
        %v488 = vld [vmem:[%s182 + $0x4c0] sm:$0xff]
        %489 = vst [vmem:[%s183 + $0x4c0] sm:$0xff] %v488
        %v490 = vld [vmem:[%s182 + $0x4c8] sm:$0xff]
        %491 = vst [vmem:[%s183 + $0x4c8] sm:$0xff] %v490
        %v492 = vld [vmem:[%s182 + $0x4d0] sm:$0xff]
        %493 = vst [vmem:[%s183 + $0x4d0] sm:$0xff] %v492
        %v494 = vld [vmem:[%s182 + $0x4d8] sm:$0xff]
        %495 = vst [vmem:[%s183 + $0x4d8] sm:$0xff] %v494
        %v496 = vld [vmem:[%s182 + $0x4e0] sm:$0xff]
        %497 = vst [vmem:[%s183 + $0x4e0] sm:$0xff] %v496
        %v498 = vld [vmem:[%s182 + $0x4e8] sm:$0xff]
        %499 = vst [vmem:[%s183 + $0x4e8] sm:$0xff] %v498
        %v500 = vld [vmem:[%s182 + $0x4f0] sm:$0xff]
        %501 = vst [vmem:[%s183 + $0x4f0] sm:$0xff] %v500
        %v502 = vld [vmem:[%s182 + $0x4f8] sm:$0xff]
        %503 = vst [vmem:[%s183 + $0x4f8] sm:$0xff] %v502
        %v504 = vld [vmem:[%s182 + $0x500] sm:$0xff]
        %505 = vst [vmem:[%s183 + $0x500] sm:$0xff] %v504
        %v506 = vld [vmem:[%s182 + $0x508] sm:$0xff]
        %507 = vst [vmem:[%s183 + $0x508] sm:$0xff] %v506
        %v508 = vld [vmem:[%s182 + $0x510] sm:$0xff]
        %509 = vst [vmem:[%s183 + $0x510] sm:$0xff] %v508
        %v510 = vld [vmem:[%s182 + $0x518] sm:$0xff]
        %511 = vst [vmem:[%s183 + $0x518] sm:$0xff] %v510
        %v512 = vld [vmem:[%s182 + $0x520] sm:$0xff]
        %513 = vst [vmem:[%s183 + $0x520] sm:$0xff] %v512
        %v514 = vld [vmem:[%s182 + $0x528] sm:$0xff]
        %515 = vst [vmem:[%s183 + $0x528] sm:$0xff] %v514
        %v516 = vld [vmem:[%s182 + $0x530] sm:$0xff]
        %517 = vst [vmem:[%s183 + $0x530] sm:$0xff] %v516
        %v518 = vld [vmem:[%s182 + $0x538] sm:$0xff]
        %519 = vst [vmem:[%s183 + $0x538] sm:$0xff] %v518
        %v520 = vld [vmem:[%s182 + $0x540] sm:$0xff]
        %521 = vst [vmem:[%s183 + $0x540] sm:$0xff] %v520
        %v522 = vld [vmem:[%s182 + $0x548] sm:$0xff]
        %523 = vst [vmem:[%s183 + $0x548] sm:$0xff] %v522
        %v524 = vld [vmem:[%s182 + $0x550] sm:$0xff]
        %525 = vst [vmem:[%s183 + $0x550] sm:$0xff] %v524
        %v526 = vld [vmem:[%s182 + $0x558] sm:$0xff]
        %527 = vst [vmem:[%s183 + $0x558] sm:$0xff] %v526
        %v528 = vld [vmem:[%s182 + $0x560] sm:$0xff]
        %529 = vst [vmem:[%s183 + $0x560] sm:$0xff] %v528
        %v530 = vld [vmem:[%s182 + $0x568] sm:$0xff]
        %531 = vst [vmem:[%s183 + $0x568] sm:$0xff] %v530
        %v532 = vld [vmem:[%s182 + $0x570] sm:$0xff]
        %533 = vst [vmem:[%s183 + $0x570] sm:$0xff] %v532
        %v534 = vld [vmem:[%s182 + $0x578] sm:$0xff]
        %535 = vst [vmem:[%s183 + $0x578] sm:$0xff] %v534
        %v536 = vld [vmem:[%s182 + $0x580] sm:$0xff]
        %537 = vst [vmem:[%s183 + $0x580] sm:$0xff] %v536
        %v538 = vld [vmem:[%s182 + $0x588] sm:$0xff]
        %539 = vst [vmem:[%s183 + $0x588] sm:$0xff] %v538
        %v540 = vld [vmem:[%s182 + $0x590] sm:$0xff]
        %541 = vst [vmem:[%s183 + $0x590] sm:$0xff] %v540
        %v542 = vld [vmem:[%s182 + $0x598] sm:$0xff]
        %543 = vst [vmem:[%s183 + $0x598] sm:$0xff] %v542
        %v544 = vld [vmem:[%s182 + $0x5a0] sm:$0xff]
        %545 = vst [vmem:[%s183 + $0x5a0] sm:$0xff] %v544
        %v546 = vld [vmem:[%s182 + $0x5a8] sm:$0xff]
        %547 = vst [vmem:[%s183 + $0x5a8] sm:$0xff] %v546
        %v548 = vld [vmem:[%s182 + $0x5b0] sm:$0xff]
        %549 = vst [vmem:[%s183 + $0x5b0] sm:$0xff] %v548
        %v550 = vld [vmem:[%s182 + $0x5b8] sm:$0xff]
        %551 = vst [vmem:[%s183 + $0x5b8] sm:$0xff] %v550
        %v552 = vld [vmem:[%s182 + $0x5c0] sm:$0xff]
        %553 = vst [vmem:[%s183 + $0x5c0] sm:$0xff] %v552
        %v554 = vld [vmem:[%s182 + $0x5c8] sm:$0xff]
        %555 = vst [vmem:[%s183 + $0x5c8] sm:$0xff] %v554
        %v556 = vld [vmem:[%s182 + $0x5d0] sm:$0xff]
        %557 = vst [vmem:[%s183 + $0x5d0] sm:$0xff] %v556
        %v558 = vld [vmem:[%s182 + $0x5d8] sm:$0xff]
        %559 = vst [vmem:[%s183 + $0x5d8] sm:$0xff] %v558
        %v560 = vld [vmem:[%s182 + $0x5e0] sm:$0xff]
        %561 = vst [vmem:[%s183 + $0x5e0] sm:$0xff] %v560
        %v562 = vld [vmem:[%s182 + $0x5e8] sm:$0xff]
        %563 = vst [vmem:[%s183 + $0x5e8] sm:$0xff] %v562
        %v564 = vld [vmem:[%s182 + $0x5f0] sm:$0xff]
        %565 = vst [vmem:[%s183 + $0x5f0] sm:$0xff] %v564
        %v566 = vld [vmem:[%s182 + $0x5f8] sm:$0xff]
        %567 = vst [vmem:[%s183 + $0x5f8] sm:$0xff] %v566
        %v568 = vld [vmem:[%s182 + $0x600] sm:$0xff]
        %569 = vst [vmem:[%s183 + $0x600] sm:$0xff] %v568
        %v570 = vld [vmem:[%s182 + $0x608] sm:$0xff]
        %571 = vst [vmem:[%s183 + $0x608] sm:$0xff] %v570
        %v572 = vld [vmem:[%s182 + $0x610] sm:$0xff]
        %573 = vst [vmem:[%s183 + $0x610] sm:$0xff] %v572
        %v574 = vld [vmem:[%s182 + $0x618] sm:$0xff]
        %575 = vst [vmem:[%s183 + $0x618] sm:$0xff] %v574
        %v576 = vld [vmem:[%s182 + $0x620] sm:$0xff]
        %577 = vst [vmem:[%s183 + $0x620] sm:$0xff] %v576
        %v578 = vld [vmem:[%s182 + $0x628] sm:$0xff]
        %579 = vst [vmem:[%s183 + $0x628] sm:$0xff] %v578
        %v580 = vld [vmem:[%s182 + $0x630] sm:$0xff]
        %581 = vst [vmem:[%s183 + $0x630] sm:$0xff] %v580
        %v582 = vld [vmem:[%s182 + $0x638] sm:$0xff]
        %583 = vst [vmem:[%s183 + $0x638] sm:$0xff] %v582
        %v584 = vld [vmem:[%s182 + $0x640] sm:$0xff]
        %585 = vst [vmem:[%s183 + $0x640] sm:$0xff] %v584
        %v586 = vld [vmem:[%s182 + $0x648] sm:$0xff]
        %587 = vst [vmem:[%s183 + $0x648] sm:$0xff] %v586
        %v588 = vld [vmem:[%s182 + $0x650] sm:$0xff]
        %589 = vst [vmem:[%s183 + $0x650] sm:$0xff] %v588
        %v590 = vld [vmem:[%s182 + $0x658] sm:$0xff]
        %591 = vst [vmem:[%s183 + $0x658] sm:$0xff] %v590
        %v592 = vld [vmem:[%s182 + $0x660] sm:$0xff]
        %593 = vst [vmem:[%s183 + $0x660] sm:$0xff] %v592
        %v594 = vld [vmem:[%s182 + $0x668] sm:$0xff]
        %595 = vst [vmem:[%s183 + $0x668] sm:$0xff] %v594
        %v596 = vld [vmem:[%s182 + $0x670] sm:$0xff]
        %597 = vst [vmem:[%s183 + $0x670] sm:$0xff] %v596
        %v598 = vld [vmem:[%s182 + $0x678] sm:$0xff]
        %599 = vst [vmem:[%s183 + $0x678] sm:$0xff] %v598
        %v600 = vld [vmem:[%s182 + $0x680] sm:$0xff]
        %601 = vst [vmem:[%s183 + $0x680] sm:$0xff] %v600
        %v602 = vld [vmem:[%s182 + $0x688] sm:$0xff]
        %603 = vst [vmem:[%s183 + $0x688] sm:$0xff] %v602
        %v604 = vld [vmem:[%s182 + $0x690] sm:$0xff]
        %605 = vst [vmem:[%s183 + $0x690] sm:$0xff] %v604
        %v606 = vld [vmem:[%s182 + $0x698] sm:$0xff]
        %607 = vst [vmem:[%s183 + $0x698] sm:$0xff] %v606
        %v608 = vld [vmem:[%s182 + $0x6a0] sm:$0xff]
        %609 = vst [vmem:[%s183 + $0x6a0] sm:$0xff] %v608
        %v610 = vld [vmem:[%s182 + $0x6a8] sm:$0xff]
        %611 = vst [vmem:[%s183 + $0x6a8] sm:$0xff] %v610
        %v612 = vld [vmem:[%s182 + $0x6b0] sm:$0xff]
        %613 = vst [vmem:[%s183 + $0x6b0] sm:$0xff] %v612
        %v614 = vld [vmem:[%s182 + $0x6b8] sm:$0xff]
        %615 = vst [vmem:[%s183 + $0x6b8] sm:$0xff] %v614
        %v616 = vld [vmem:[%s182 + $0x6c0] sm:$0xff]
        %617 = vst [vmem:[%s183 + $0x6c0] sm:$0xff] %v616
        %v618 = vld [vmem:[%s182 + $0x6c8] sm:$0xff]
        %619 = vst [vmem:[%s183 + $0x6c8] sm:$0xff] %v618
        %v620 = vld [vmem:[%s182 + $0x6d0] sm:$0xff]
        %621 = vst [vmem:[%s183 + $0x6d0] sm:$0xff] %v620
        %v622 = vld [vmem:[%s182 + $0x6d8] sm:$0xff]
        %623 = vst [vmem:[%s183 + $0x6d8] sm:$0xff] %v622
        %v624 = vld [vmem:[%s182 + $0x6e0] sm:$0xff]
        %625 = vst [vmem:[%s183 + $0x6e0] sm:$0xff] %v624
        %v626 = vld [vmem:[%s182 + $0x6e8] sm:$0xff]
        %627 = vst [vmem:[%s183 + $0x6e8] sm:$0xff] %v626
        %v628 = vld [vmem:[%s182 + $0x6f0] sm:$0xff]
        %629 = vst [vmem:[%s183 + $0x6f0] sm:$0xff] %v628
        %v630 = vld [vmem:[%s182 + $0x6f8] sm:$0xff]
        %631 = vst [vmem:[%s183 + $0x6f8] sm:$0xff] %v630
        %v632 = vld [vmem:[%s182 + $0x700] sm:$0xff]
        %633 = vst [vmem:[%s183 + $0x700] sm:$0xff] %v632
        %v634 = vld [vmem:[%s182 + $0x708] sm:$0xff]
        %635 = vst [vmem:[%s183 + $0x708] sm:$0xff] %v634
        %v636 = vld [vmem:[%s182 + $0x710] sm:$0xff]
        %637 = vst [vmem:[%s183 + $0x710] sm:$0xff] %v636
        %v638 = vld [vmem:[%s182 + $0x718] sm:$0xff]
        %639 = vst [vmem:[%s183 + $0x718] sm:$0xff] %v638
        %v640 = vld [vmem:[%s182 + $0x720] sm:$0xff]
        %641 = vst [vmem:[%s183 + $0x720] sm:$0xff] %v640
        %v642 = vld [vmem:[%s182 + $0x728] sm:$0xff]
        %643 = vst [vmem:[%s183 + $0x728] sm:$0xff] %v642
        %v644 = vld [vmem:[%s182 + $0x730] sm:$0xff]
        %645 = vst [vmem:[%s183 + $0x730] sm:$0xff] %v644
        %v646 = vld [vmem:[%s182 + $0x738] sm:$0xff]
        %647 = vst [vmem:[%s183 + $0x738] sm:$0xff] %v646
        %v648 = vld [vmem:[%s182 + $0x740] sm:$0xff]
        %649 = vst [vmem:[%s183 + $0x740] sm:$0xff] %v648
        %v650 = vld [vmem:[%s182 + $0x748] sm:$0xff]
        %651 = vst [vmem:[%s183 + $0x748] sm:$0xff] %v650
        %v652 = vld [vmem:[%s182 + $0x750] sm:$0xff]
        %653 = vst [vmem:[%s183 + $0x750] sm:$0xff] %v652
        %v654 = vld [vmem:[%s182 + $0x758] sm:$0xff]
        %655 = vst [vmem:[%s183 + $0x758] sm:$0xff] %v654
        %v656 = vld [vmem:[%s182 + $0x760] sm:$0xff]
        %657 = vst [vmem:[%s183 + $0x760] sm:$0xff] %v656
        %v658 = vld [vmem:[%s182 + $0x768] sm:$0xff]
        %659 = vst [vmem:[%s183 + $0x768] sm:$0xff] %v658
        %v660 = vld [vmem:[%s182 + $0x770] sm:$0xff]
        %661 = vst [vmem:[%s183 + $0x770] sm:$0xff] %v660
        %v662 = vld [vmem:[%s182 + $0x778] sm:$0xff]
        %663 = vst [vmem:[%s183 + $0x778] sm:$0xff] %v662
        %v664 = vld [vmem:[%s182 + $0x780] sm:$0xff]
        %665 = vst [vmem:[%s183 + $0x780] sm:$0xff] %v664
        %v666 = vld [vmem:[%s182 + $0x788] sm:$0xff]
        %667 = vst [vmem:[%s183 + $0x788] sm:$0xff] %v666
        %v668 = vld [vmem:[%s182 + $0x790] sm:$0xff]
        %669 = vst [vmem:[%s183 + $0x790] sm:$0xff] %v668
        %v670 = vld [vmem:[%s182 + $0x798] sm:$0xff]
        %671 = vst [vmem:[%s183 + $0x798] sm:$0xff] %v670
        %v672 = vld [vmem:[%s182 + $0x7a0] sm:$0xff]
        %673 = vst [vmem:[%s183 + $0x7a0] sm:$0xff] %v672
        %v674 = vld [vmem:[%s182 + $0x7a8] sm:$0xff]
        %675 = vst [vmem:[%s183 + $0x7a8] sm:$0xff] %v674
        %v676 = vld [vmem:[%s182 + $0x7b0] sm:$0xff]
        %677 = vst [vmem:[%s183 + $0x7b0] sm:$0xff] %v676
        %v678 = vld [vmem:[%s182 + $0x7b8] sm:$0xff]
        %679 = vst [vmem:[%s183 + $0x7b8] sm:$0xff] %v678
        %v680 = vld [vmem:[%s182 + $0x7c0] sm:$0xff]
        %681 = vst [vmem:[%s183 + $0x7c0] sm:$0xff] %v680
        %v682 = vld [vmem:[%s182 + $0x7c8] sm:$0xff]
        %683 = vst [vmem:[%s183 + $0x7c8] sm:$0xff] %v682
        %v684 = vld [vmem:[%s182 + $0x7d0] sm:$0xff]
        %685 = vst [vmem:[%s183 + $0x7d0] sm:$0xff] %v684
        %v686 = vld [vmem:[%s182 + $0x7d8] sm:$0xff]
        %687 = vst [vmem:[%s183 + $0x7d8] sm:$0xff] %v686
        %v688 = vld [vmem:[%s182 + $0x7e0] sm:$0xff]
        %689 = vst [vmem:[%s183 + $0x7e0] sm:$0xff] %v688
        %v690 = vld [vmem:[%s182 + $0x7e8] sm:$0xff]
        %691 = vst [vmem:[%s183 + $0x7e8] sm:$0xff] %v690
        %v692 = vld [vmem:[%s182 + $0x7f0] sm:$0xff]
        %693 = vst [vmem:[%s183 + $0x7f0] sm:$0xff] %v692
        %v694 = vld [vmem:[%s182 + $0x7f8] sm:$0xff]
        %695 = vst [vmem:[%s183 + $0x7f8] sm:$0xff] %v694
      $region67: #{dueling_ddqn_forward.1} parent=61 // loop_footer
        %s181 = sadd.s32 1, %s177
      $region68: #{dueling_ddqn_forward.1} parent=61 // loop_footer_branch
        %176 = sbr.rel target = $region64
      $region69: #{dueling_ddqn_forward.1} parent=61 // loop_exit
        _
    $region62: #{dueling_ddqn_forward.1} parent=46 // pred_fallthru
      _
    %p696 = pneg %p172
    // Predicated region
    $region70: #{dueling_ddqn_forward.1} parent=46 // pred_check
      _
    $region71: #{dueling_ddqn_forward.1} parent=46 // pred_check_branch
      %698 = sbr.rel (%p172) target = $region73
    $region72: #{dueling_ddqn_forward.1} parent=46 // pred_region
      %s699 = sand.u32 2048, 7
    $region73: #{dueling_ddqn_forward.1} parent=46 // pred_fallthru
      _
  $region47: #{dueling_ddqn_forward.1} parent=0 // pred_fallthru
    _
  // Predicated region
  $region48: #{dueling_ddqn_forward.1} parent=0 // pred_check
    %p156 = pneg %p152
  $region49: #{dueling_ddqn_forward.1} parent=0 // pred_check_branch
    %158 = sbr.rel (%p156) target = $region51
  $region50: #{dueling_ddqn_forward.1} parent=0 // pred_region
    %s159 = sshll.u32 1, 2048
    %s160 = ssub.s32 %s159, 1
    loop: start=0, step=1, limit=1
    $region52: #{dueling_ddqn_forward.1} parent=50 // loop_pre_header
      _
    $region53: #{dueling_ddqn_forward.1} parent=50 // loop_header
      %s162 = sphi 0, %s166
      %p163 = scmp.ge.s32.totalorder %s162, 1
      %s167 = sphi %s3, %s3
      %s168 = sphi [#allocation3], [#allocation3]
    $region54: #{dueling_ddqn_forward.1} parent=50 // loop_header_branch
      %165 = sbr.rel (%p163) target = $region58
    $region55: #{dueling_ddqn_forward.1} parent=50 // loop_body
      %v169 = vld [vmem:[%s167] sm:%s160]
      %170 = vst [vmem:[%s168] sm:%s160] %v169
    $region56: #{dueling_ddqn_forward.1} parent=50 // loop_footer
      %s166 = sadd.s32 1, %s162
    $region57: #{dueling_ddqn_forward.1} parent=50 // loop_footer_branch
      %161 = sbr.rel target = $region53
    $region58: #{dueling_ddqn_forward.1} parent=50 // loop_exit
      _
  $region51: #{dueling_ddqn_forward.1} parent=0 // pred_fallthru
    _
  // Predicated region
  $region74: #{dueling_ddqn_forward.1} parent=0 // pred_check
    _
  $region75: #{dueling_ddqn_forward.1} parent=0 // pred_check_branch
    %702 = sbr.rel (0) target = $region77
  $region76: #{dueling_ddqn_forward.1} parent=0 // pred_region
    %703 = vsyncadd %s150, 32768
  $region77: #{dueling_ddqn_forward.1} parent=0 // pred_fallthru
    _
  %v704 = vld [vmem:[%s0] sm:$0xff]
  %v705 = vld [vmem:[%s0 + $0x8] sm:$0xff]
  %v706 = vld [vmem:[%s0 + $0x10] sm:$0xff]
  %v707 = vld [vmem:[%s0 + $0x18] sm:$0xff]
  %v708 = vld [vmem:[%s0 + $0x20] sm:$0xff]
  %v709 = vld [vmem:[%s0 + $0x28] sm:$0xff]
  %v710 = vld [vmem:[%s0 + $0x30] sm:$0xff]
  %v711 = vld [vmem:[%s0 + $0x38] sm:$0xff]
  %v712 = vld [vmem:[%s0 + $0x40] sm:$0xff]
  %v713 = vld [vmem:[%s0 + $0x48] sm:$0xff]
  %v714 = vld [vmem:[%s0 + $0x50] sm:$0xff]
  %v715 = vld [vmem:[%s0 + $0x58] sm:$0xff]
  %v716 = vld [vmem:[%s0 + $0x60] sm:$0xff]
  %v717 = vld [vmem:[%s0 + $0x68] sm:$0xff]
  %v718 = vld [vmem:[%s0 + $0x70] sm:$0xff]
  %v719 = vld [vmem:[%s0 + $0x78] sm:$0xff]
  %v720 = vld [vmem:[%s1] sm:$0x1]
  %v721 = vld [vmem:[%s1 + $0x1] sm:$0x1]
  %v722 = vld [vmem:[%s1 + $0x2] sm:$0x1]
  %v723 = vld [vmem:[%s1 + $0x3] sm:$0x1]
  %725 = vset.pattern.permute.xlu0 0
  %726 = vperm.xlu0 %725, 0.0
  %v727 = vpop.permute.xlu0 %726
  %730 = vset.pattern.permute.xlu0 0
  %731 = vperm.xlu0 %730, %v704
  %v732 = vpop.permute.xlu0 %731
  %735 = vset.pattern.permute.xlu0 0
  %736 = vperm.xlu0 %735, %v705
  %v737 = vpop.permute.xlu0 %736
  %740 = vset.pattern.permute.xlu0 0
  %741 = vperm.xlu0 %740, %v706
  %v742 = vpop.permute.xlu0 %741
  %745 = vset.pattern.permute.xlu0 0
  %746 = vperm.xlu0 %745, %v707
  %v747 = vpop.permute.xlu0 %746
  %750 = vset.pattern.permute.xlu0 0
  %751 = vperm.xlu0 %750, %v708
  %v752 = vpop.permute.xlu0 %751
  %755 = vset.pattern.permute.xlu0 0
  %756 = vperm.xlu0 %755, %v709
  %v757 = vpop.permute.xlu0 %756
  %760 = vset.pattern.permute.xlu0 0
  %761 = vperm.xlu0 %760, %v710
  %v762 = vpop.permute.xlu0 %761
  %765 = vset.pattern.permute.xlu0 0
  %766 = vperm.xlu0 %765, %v711
  %v767 = vpop.permute.xlu0 %766
  %770 = vset.pattern.permute.xlu0 0
  %771 = vperm.xlu0 %770, %v712
  %v772 = vpop.permute.xlu0 %771
  %775 = vset.pattern.permute.xlu0 0
  %776 = vperm.xlu0 %775, %v713
  %v777 = vpop.permute.xlu0 %776
  %780 = vset.pattern.permute.xlu0 0
  %781 = vperm.xlu0 %780, %v714
  %v782 = vpop.permute.xlu0 %781
  %785 = vset.pattern.permute.xlu0 0
  %786 = vperm.xlu0 %785, %v715
  %v787 = vpop.permute.xlu0 %786
  %790 = vset.pattern.permute.xlu0 0
  %791 = vperm.xlu0 %790, %v716
  %v792 = vpop.permute.xlu0 %791
  %795 = vset.pattern.permute.xlu0 0
  %796 = vperm.xlu0 %795, %v717
  %v797 = vpop.permute.xlu0 %796
  %800 = vset.pattern.permute.xlu0 0
  %801 = vperm.xlu0 %800, %v718
  %v802 = vpop.permute.xlu0 %801
  %v804 = vlaneseq
  %v805 = vshrl.u32 %v804, 7
  %v806 = vsub.s32 0, %v805
  %v807 = vrot.slane %v720, %v806
  %v808 = vmul.f32 %v727, %v807
  %v809 = vmul.f32 %v732, %v807
  %v810 = vmul.f32 %v737, %v807
  %v811 = vmul.f32 %v742, %v807
  %v812 = vmul.f32 %v747, %v807
  %v813 = vmul.f32 %v752, %v807
  %v814 = vmul.f32 %v757, %v807
  %v815 = vmul.f32 %v762, %v807
  %v816 = vmul.f32 %v767, %v807
  %v817 = vmul.f32 %v772, %v807
  %v818 = vmul.f32 %v777, %v807
  %v819 = vmul.f32 %v782, %v807
  %v820 = vmul.f32 %v787, %v807
  %v821 = vmul.f32 %v792, %v807
  %v822 = vmul.f32 %v797, %v807
  %v823 = vmul.f32 %v802, %v807
  %825 = vset.pattern.permute.xlu0 0
  %826 = vperm.xlu0 %825, %v719
  %v827 = vpop.permute.xlu0 %826
  %v829 = vlaneseq
  %v830 = vshrl.u32 %v829, 7
  %v831 = vsub.s32 0, %v830
  %v832 = vrot.slane %v721, %v831
  %v833 = vmul.f32 %v732, %v832
  %v834 = vmul.f32 %v737, %v832
  %v835 = vmul.f32 %v742, %v832
  %v836 = vmul.f32 %v747, %v832
  %v837 = vmul.f32 %v752, %v832
  %v838 = vmul.f32 %v757, %v832
  %v839 = vmul.f32 %v762, %v832
  %v840 = vmul.f32 %v767, %v832
  %v841 = vmul.f32 %v772, %v832
  %v842 = vmul.f32 %v777, %v832
  %v843 = vmul.f32 %v782, %v832
  %v844 = vmul.f32 %v787, %v832
  %v845 = vmul.f32 %v792, %v832
  %v846 = vmul.f32 %v797, %v832
  %v847 = vmul.f32 %v802, %v832
  %v848 = vmul.f32 %v827, %v832
  %v849 = vadd.f32 %v808, %v833
  %v850 = vadd.f32 %v809, %v834
  %v851 = vadd.f32 %v810, %v835
  %v852 = vadd.f32 %v811, %v836
  %v853 = vadd.f32 %v812, %v837
  %v854 = vadd.f32 %v813, %v838
  %v855 = vadd.f32 %v814, %v839
  %v856 = vadd.f32 %v815, %v840
  %v857 = vadd.f32 %v816, %v841
  %v858 = vadd.f32 %v817, %v842
  %v859 = vadd.f32 %v818, %v843
  %v860 = vadd.f32 %v819, %v844
  %v861 = vadd.f32 %v820, %v845
  %v862 = vadd.f32 %v821, %v846
  %v863 = vadd.f32 %v822, %v847
  %v864 = vadd.f32 %v823, %v848
  %v865 = vlaneseq
  %v866 = vshrl.u32 %v865, 7
  %v867 = vsub.s32 0, %v866
  %v868 = vrot.slane %v722, %v867
  %v869 = vmul.f32 %v737, %v868
  %v870 = vmul.f32 %v742, %v868
  %v871 = vmul.f32 %v747, %v868
  %v872 = vmul.f32 %v752, %v868
  %v873 = vmul.f32 %v757, %v868
  %v874 = vmul.f32 %v762, %v868
  %v875 = vmul.f32 %v767, %v868
  %v876 = vmul.f32 %v772, %v868
  %v877 = vmul.f32 %v777, %v868
  %v878 = vmul.f32 %v782, %v868
  %v879 = vmul.f32 %v787, %v868
  %v880 = vmul.f32 %v792, %v868
  %v881 = vmul.f32 %v797, %v868
  %v882 = vmul.f32 %v802, %v868
  %v883 = vmul.f32 %v827, %v868
  %v884 = vmul.f32 %v727, %v868
  %v885 = vadd.f32 %v849, %v869
  %v886 = vadd.f32 %v850, %v870
  %v887 = vadd.f32 %v851, %v871
  %v888 = vadd.f32 %v852, %v872
  %v889 = vadd.f32 %v853, %v873
  %v890 = vadd.f32 %v854, %v874
  %v891 = vadd.f32 %v855, %v875
  %v892 = vadd.f32 %v856, %v876
  %v893 = vadd.f32 %v857, %v877
  %v894 = vadd.f32 %v858, %v878
  %v895 = vadd.f32 %v859, %v879
  %v896 = vadd.f32 %v860, %v880
  %v897 = vadd.f32 %v861, %v881
  %v898 = vadd.f32 %v862, %v882
  %v899 = vadd.f32 %v863, %v883
  %v900 = vadd.f32 %v864, %v884
  %v901 = vlaneseq
  %v902 = vshrl.u32 %v901, 7
  %v903 = vsub.s32 0, %v902
  %v904 = vrot.slane %v723, %v903
  %v905 = vadd.f32 %v885, %v904
  %v906 = vadd.f32 %v886, %v904
  %v907 = vadd.f32 %v887, %v904
  %v908 = vadd.f32 %v888, %v904
  %v909 = vadd.f32 %v889, %v904
  %v910 = vadd.f32 %v890, %v904
  %v911 = vadd.f32 %v891, %v904
  %v912 = vadd.f32 %v892, %v904
  %v913 = vadd.f32 %v893, %v904
  %v914 = vadd.f32 %v894, %v904
  %v915 = vadd.f32 %v895, %v904
  %v916 = vadd.f32 %v896, %v904
  %v917 = vadd.f32 %v897, %v904
  %v918 = vadd.f32 %v898, %v904
  %v919 = vadd.f32 %v899, %v904
  %v920 = vadd.f32 %v900, %v904
  %vm921 = vcmp.gt.f32.partialorder %v905, 0.0
  %vm922 = vcmp.gt.f32.partialorder %v906, 0.0
  %vm923 = vcmp.gt.f32.partialorder %v907, 0.0
  %vm924 = vcmp.gt.f32.partialorder %v908, 0.0
  %vm925 = vcmp.gt.f32.partialorder %v909, 0.0
  %vm926 = vcmp.gt.f32.partialorder %v910, 0.0
  %vm927 = vcmp.gt.f32.partialorder %v911, 0.0
  %vm928 = vcmp.gt.f32.partialorder %v912, 0.0
  %vm929 = vcmp.gt.f32.partialorder %v913, 0.0
  %vm930 = vcmp.gt.f32.partialorder %v914, 0.0
  %vm931 = vcmp.gt.f32.partialorder %v915, 0.0
  %vm932 = vcmp.gt.f32.partialorder %v916, 0.0
  %vm933 = vcmp.gt.f32.partialorder %v917, 0.0
  %vm934 = vcmp.gt.f32.partialorder %v918, 0.0
  %vm935 = vcmp.gt.f32.partialorder %v919, 0.0
  %vm936 = vcmp.gt.f32.partialorder %v920, 0.0
  %v937 = vmul.f32 %v905, 0.01
  %v938 = vmul.f32 %v906, 0.01
  %v939 = vmul.f32 %v907, 0.01
  %v940 = vmul.f32 %v908, 0.01
  %v941 = vmul.f32 %v909, 0.01
  %v942 = vmul.f32 %v910, 0.01
  %v943 = vmul.f32 %v911, 0.01
  %v944 = vmul.f32 %v912, 0.01
  %v945 = vmul.f32 %v913, 0.01
  %v946 = vmul.f32 %v914, 0.01
  %v947 = vmul.f32 %v915, 0.01
  %v948 = vmul.f32 %v916, 0.01
  %v949 = vmul.f32 %v917, 0.01
  %v950 = vmul.f32 %v918, 0.01
  %v951 = vmul.f32 %v919, 0.01
  %v952 = vmul.f32 %v920, 0.01
  %v953 = vsel %vm921, %v905, %v937
  %v954 = vsel %vm922, %v906, %v938
  %v955 = vsel %vm923, %v907, %v939
  %v956 = vsel %vm924, %v908, %v940
  %v957 = vsel %vm925, %v909, %v941
  %v958 = vsel %vm926, %v910, %v942
  %v959 = vsel %vm927, %v911, %v943
  %v960 = vsel %vm928, %v912, %v944
  %v961 = vsel %vm929, %v913, %v945
  %v962 = vsel %vm930, %v914, %v946
  %v963 = vsel %vm931, %v915, %v947
  %v964 = vsel %vm932, %v916, %v948
  %v965 = vsel %vm933, %v917, %v949
  %v966 = vsel %vm934, %v918, %v950
  %v967 = vsel %vm935, %v919, %v951
  %v968 = vsel %vm936, %v920, %v952
  %s969 = smul.u32 3, 128
  %s970 = smul.u32 %s969, 1
  %s971 = sshll.u32 %s970, 4
  %972 = dma.done [#allocation4], %s971
  %v973 = vld [vmem:[%s1 + $0x4] sm:$0x1]
  %v974 = vld [vmem:[#allocation2] sm:$0xff]
  %v975 = vld [vmem:[#allocation2 + $0x8] sm:$0xff]
  %v976 = vld [vmem:[#allocation2 + $0x10] sm:$0xff]
  %v977 = vld [vmem:[#allocation2 + $0x18] sm:$0xff]
  %v978 = vld [vmem:[#allocation2 + $0x20] sm:$0xff]
  %v979 = vld [vmem:[#allocation2 + $0x28] sm:$0xff]
  %v980 = vld [vmem:[#allocation2 + $0x30] sm:$0xff]
  %v981 = vld [vmem:[#allocation2 + $0x38] sm:$0xff]
  %v982 = vld [vmem:[#allocation2 + $0x40] sm:$0xff]
  %v983 = vld [vmem:[#allocation2 + $0x48] sm:$0xff]
  %v984 = vld [vmem:[#allocation2 + $0x50] sm:$0xff]
  %v985 = vld [vmem:[#allocation2 + $0x58] sm:$0xff]
  %v986 = vld [vmem:[#allocation2 + $0x60] sm:$0xff]
  %v987 = vld [vmem:[#allocation2 + $0x68] sm:$0xff]
  %v988 = vld [vmem:[#allocation2 + $0x70] sm:$0xff]
  %v989 = vld [vmem:[#allocation2 + $0x78] sm:$0xff]
  %s990 = scalar_lea.vmem [#allocation2], 128
  %v991 = vld [vmem:[%s990] sm:$0xff]
  %v992 = vld [vmem:[%s990 + $0x8] sm:$0xff]
  %v993 = vld [vmem:[%s990 + $0x10] sm:$0xff]
  %v994 = vld [vmem:[%s990 + $0x18] sm:$0xff]
  %v995 = vld [vmem:[%s990 + $0x20] sm:$0xff]
  %v996 = vld [vmem:[%s990 + $0x28] sm:$0xff]
  %v997 = vld [vmem:[%s990 + $0x30] sm:$0xff]
  %v998 = vld [vmem:[%s990 + $0x38] sm:$0xff]
  %v999 = vld [vmem:[%s990 + $0x40] sm:$0xff]
  %v1000 = vld [vmem:[%s990 + $0x48] sm:$0xff]
  %v1001 = vld [vmem:[%s990 + $0x50] sm:$0xff]
  %v1002 = vld [vmem:[%s990 + $0x58] sm:$0xff]
  %v1003 = vld [vmem:[%s990 + $0x60] sm:$0xff]
  %v1004 = vld [vmem:[%s990 + $0x68] sm:$0xff]
  %v1005 = vld [vmem:[%s990 + $0x70] sm:$0xff]
  %v1006 = vld [vmem:[%s990 + $0x78] sm:$0xff]
  %1007 = vmatprep.subr.mxu0 0.0
  %1008 = vmatpush1.msra.mxu0 %v1006
  %1009 = vmatprep.subr.mxu0 0.0
  %1010 = vmatpush1.msra.mxu0 %v1005
  %1011 = vmatprep.subr.mxu0 0.0
  %1012 = vmatpush1.msra.mxu0 %v1004
  %1013 = vmatprep.subr.mxu0 0.0
  %1014 = vmatpush1.msra.mxu0 %v1003
  %1015 = vmatprep.subr.mxu0 0.0
  %1016 = vmatpush1.msra.mxu0 %v1002
  %1017 = vmatprep.subr.mxu0 0.0
  %1018 = vmatpush1.msra.mxu0 %v1001
  %1019 = vmatprep.subr.mxu0 0.0
  %1020 = vmatpush1.msra.mxu0 %v1000
  %1021 = vmatprep.subr.mxu0 0.0
  %1022 = vmatpush1.msra.mxu0 %v999
  %1023 = vmatprep.subr.mxu0 0.0
  %1024 = vmatpush1.msra.mxu0 %v998
  %1025 = vmatprep.subr.mxu0 0.0
  %1026 = vmatpush1.msra.mxu0 %v997
  %1027 = vmatprep.subr.mxu0 0.0
  %1028 = vmatpush1.msra.mxu0 %v996
  %1029 = vmatprep.subr.mxu0 0.0
  %1030 = vmatpush1.msra.mxu0 %v995
  %1031 = vmatprep.subr.mxu0 0.0
  %1032 = vmatpush1.msra.mxu0 %v994
  %1033 = vmatprep.subr.mxu0 0.0
  %1034 = vmatpush1.msra.mxu0 %v993
  %1035 = vmatprep.subr.mxu0 0.0
  %1036 = vmatpush1.msra.mxu0 %v992
  %1037 = vmatprep.subr.mxu0 0.0
  %1038 = vmatpush1.msra.mxu0 %v991
  %1039 = vmatprep.subr.mxu0 0.0
  %1040 = vmatpush2.msra.mxu0 0.0
  %1041 = vmatprep.subr.mxu0 0.0
  %1042 = vmatpush2.msra.mxu0 0.0
  %1043 = vmatprep.subr.mxu0 0.0
  %1044 = vmatpush2.msra.mxu0 0.0
  %1045 = vmatprep.subr.mxu0 0.0
  %1046 = vmatpush2.msra.mxu0 0.0
  %1047 = vmatprep.subr.mxu0 0.0
  %1048 = vmatpush2.msra.mxu0 0.0
  %1049 = vmatprep.subr.mxu0 0.0
  %1050 = vmatpush2.msra.mxu0 0.0
  %1051 = vmatprep.subr.mxu0 0.0
  %1052 = vmatpush2.msra.mxu0 0.0
  %1053 = vmatprep.subr.mxu0 0.0
  %1054 = vmatpush2.msra.mxu0 0.0
  %1055 = vmatprep.subr.mxu0 0.0
  %1056 = vmatpush2.msra.mxu0 0.0
  %1057 = vmatprep.subr.mxu0 0.0
  %1058 = vmatpush2.msra.mxu0 0.0
  %1059 = vmatprep.subr.mxu0 0.0
  %1060 = vmatpush2.msra.mxu0 0.0
  %1061 = vmatprep.subr.mxu0 0.0
  %1062 = vmatpush2.msra.mxu0 0.0
  %1063 = vmatprep.subr.mxu0 0.0
  %1064 = vmatpush2.msra.mxu0 0.0
  %1065 = vmatprep.subr.mxu0 0.0
  %1066 = vmatpush2.msra.mxu0 0.0
  %1067 = vmatprep.subr.mxu0 0.0
  %1068 = vmatpush2.msra.mxu0 0.0
  %1069 = vmatprep.subr.mxu0 0.0
  %1070 = vmatpush2.msra.mxu0 0.0
  %1071 = vmatprep.mubr.f32.mxu0 0.0
  %1072 = vmatmul.mubr.f32.gmra.mxu0 %v953
  %v1073 = vpop.f32.mrf.mxu0
  %v1074 = vadd.f32 0.0, %v1073
  %v1075 = vpop.f32.mrf.mxu0
  %1076 = vmatprep.mubr.f32.mxu0 0.0
  %1077 = vmatmul.mubr.f32.gmra.mxu0 %v954
  %v1078 = vpop.f32.mrf.mxu0
  %v1079 = vadd.f32 0.0, %v1078
  %v1080 = vpop.f32.mrf.mxu0
  %1081 = vmatprep.mubr.f32.mxu0 0.0
  %1082 = vmatmul.mubr.f32.gmra.mxu0 %v955
  %v1083 = vpop.f32.mrf.mxu0
  %v1084 = vadd.f32 0.0, %v1083
  %v1085 = vpop.f32.mrf.mxu0
  %1086 = vmatprep.mubr.f32.mxu0 0.0
  %1087 = vmatmul.mubr.f32.gmra.mxu0 %v956
  %v1088 = vpop.f32.mrf.mxu0
  %v1089 = vadd.f32 0.0, %v1088
  %v1090 = vpop.f32.mrf.mxu0
  %1091 = vmatprep.mubr.f32.mxu0 0.0
  %1092 = vmatmul.mubr.f32.gmra.mxu0 %v957
  %v1093 = vpop.f32.mrf.mxu0
  %v1094 = vadd.f32 0.0, %v1093
  %v1095 = vpop.f32.mrf.mxu0
  %1096 = vmatprep.mubr.f32.mxu0 0.0
  %1097 = vmatmul.mubr.f32.gmra.mxu0 %v958
  %v1098 = vpop.f32.mrf.mxu0
  %v1099 = vadd.f32 0.0, %v1098
  %v1100 = vpop.f32.mrf.mxu0
  %1101 = vmatprep.mubr.f32.mxu0 0.0
  %1102 = vmatmul.mubr.f32.gmra.mxu0 %v959
  %v1103 = vpop.f32.mrf.mxu0
  %v1104 = vadd.f32 0.0, %v1103
  %v1105 = vpop.f32.mrf.mxu0
  %1106 = vmatprep.mubr.f32.mxu0 0.0
  %1107 = vmatmul.mubr.f32.gmra.mxu0 %v960
  %v1108 = vpop.f32.mrf.mxu0
  %v1109 = vadd.f32 0.0, %v1108
  %v1110 = vpop.f32.mrf.mxu0
  %1111 = vmatprep.mubr.f32.mxu0 0.0
  %1112 = vmatmul.mubr.f32.gmra.mxu0 %v961
  %v1113 = vpop.f32.mrf.mxu0
  %v1114 = vadd.f32 0.0, %v1113
  %v1115 = vpop.f32.mrf.mxu0
  %1116 = vmatprep.mubr.f32.mxu0 0.0
  %1117 = vmatmul.mubr.f32.gmra.mxu0 %v962
  %v1118 = vpop.f32.mrf.mxu0
  %v1119 = vadd.f32 0.0, %v1118
  %v1120 = vpop.f32.mrf.mxu0
  %1121 = vmatprep.mubr.f32.mxu0 0.0
  %1122 = vmatmul.mubr.f32.gmra.mxu0 %v963
  %v1123 = vpop.f32.mrf.mxu0
  %v1124 = vadd.f32 0.0, %v1123
  %v1125 = vpop.f32.mrf.mxu0
  %1126 = vmatprep.mubr.f32.mxu0 0.0
  %1127 = vmatmul.mubr.f32.gmra.mxu0 %v964
  %v1128 = vpop.f32.mrf.mxu0
  %v1129 = vadd.f32 0.0, %v1128
  %v1130 = vpop.f32.mrf.mxu0
  %1131 = vmatprep.mubr.f32.mxu0 0.0
  %1132 = vmatmul.mubr.f32.gmra.mxu0 %v965
  %v1133 = vpop.f32.mrf.mxu0
  %v1134 = vadd.f32 0.0, %v1133
  %v1135 = vpop.f32.mrf.mxu0
  %1136 = vmatprep.mubr.f32.mxu0 0.0
  %1137 = vmatmul.mubr.f32.gmra.mxu0 %v966
  %v1138 = vpop.f32.mrf.mxu0
  %v1139 = vadd.f32 0.0, %v1138
  %v1140 = vpop.f32.mrf.mxu0
  %1141 = vmatprep.mubr.f32.mxu0 0.0
  %1142 = vmatmul.mubr.f32.gmra.mxu0 %v967
  %v1143 = vpop.f32.mrf.mxu0
  %v1144 = vadd.f32 0.0, %v1143
  %v1145 = vpop.f32.mrf.mxu0
  %1146 = vmatprep.mubr.f32.mxu0 0.0
  %1147 = vmatmul.mubr.f32.gmra.mxu0 %v968
  %v1148 = vpop.f32.mrf.mxu0
  %v1149 = vadd.f32 0.0, %v1148
  %v1150 = vpop.f32.mrf.mxu0
  %1151 = vdwg.mxu0
  %1152 = vmatprep.subr.mxu0 0.0
  %1153 = vmatpush1.msra.mxu0 %v989
  %1154 = vmatprep.subr.mxu0 0.0
  %1155 = vmatpush1.msra.mxu0 %v988
  %1156 = vmatprep.subr.mxu0 0.0
  %1157 = vmatpush1.msra.mxu0 %v987
  %1158 = vmatprep.subr.mxu0 0.0
  %1159 = vmatpush1.msra.mxu0 %v986
  %1160 = vmatprep.subr.mxu0 0.0
  %1161 = vmatpush1.msra.mxu0 %v985
  %1162 = vmatprep.subr.mxu0 0.0
  %1163 = vmatpush1.msra.mxu0 %v984
  %1164 = vmatprep.subr.mxu0 0.0
  %1165 = vmatpush1.msra.mxu0 %v983
  %1166 = vmatprep.subr.mxu0 0.0
  %1167 = vmatpush1.msra.mxu0 %v982
  %1168 = vmatprep.subr.mxu0 0.0
  %1169 = vmatpush1.msra.mxu0 %v981
  %1170 = vmatprep.subr.mxu0 0.0
  %1171 = vmatpush1.msra.mxu0 %v980
  %1172 = vmatprep.subr.mxu0 0.0
  %1173 = vmatpush1.msra.mxu0 %v979
  %1174 = vmatprep.subr.mxu0 0.0
  %1175 = vmatpush1.msra.mxu0 %v978
  %1176 = vmatprep.subr.mxu0 0.0
  %1177 = vmatpush1.msra.mxu0 %v977
  %1178 = vmatprep.subr.mxu0 0.0
  %1179 = vmatpush1.msra.mxu0 %v976
  %1180 = vmatprep.subr.mxu0 0.0
  %1181 = vmatpush1.msra.mxu0 %v975
  %1182 = vmatprep.subr.mxu0 0.0
  %1183 = vmatpush1.msra.mxu0 %v974
  %1184 = vmatprep.subr.mxu0 0.0
  %1185 = vmatpush2.msra.mxu0 0.0
  %1186 = vmatprep.subr.mxu0 0.0
  %1187 = vmatpush2.msra.mxu0 0.0
  %1188 = vmatprep.subr.mxu0 0.0
  %1189 = vmatpush2.msra.mxu0 0.0
  %1190 = vmatprep.subr.mxu0 0.0
  %1191 = vmatpush2.msra.mxu0 0.0
  %1192 = vmatprep.subr.mxu0 0.0
  %1193 = vmatpush2.msra.mxu0 0.0
  %1194 = vmatprep.subr.mxu0 0.0
  %1195 = vmatpush2.msra.mxu0 0.0
  %1196 = vmatprep.subr.mxu0 0.0
  %1197 = vmatpush2.msra.mxu0 0.0
  %1198 = vmatprep.subr.mxu0 0.0
  %1199 = vmatpush2.msra.mxu0 0.0
  %1200 = vmatprep.subr.mxu0 0.0
  %1201 = vmatpush2.msra.mxu0 0.0
  %1202 = vmatprep.subr.mxu0 0.0
  %1203 = vmatpush2.msra.mxu0 0.0
  %1204 = vmatprep.subr.mxu0 0.0
  %1205 = vmatpush2.msra.mxu0 0.0
  %1206 = vmatprep.subr.mxu0 0.0
  %1207 = vmatpush2.msra.mxu0 0.0
  %1208 = vmatprep.subr.mxu0 0.0
  %1209 = vmatpush2.msra.mxu0 0.0
  %1210 = vmatprep.subr.mxu0 0.0
  %1211 = vmatpush2.msra.mxu0 0.0
  %1212 = vmatprep.subr.mxu0 0.0
  %1213 = vmatpush2.msra.mxu0 0.0
  %1214 = vmatprep.subr.mxu0 0.0
  %1215 = vmatpush2.msra.mxu0 0.0
  %1216 = vmatprep.mubr.f32.mxu0 0.0
  %1217 = vmatmul.mubr.f32.gmra.mxu0 0.0
  %v1218 = vpop.f32.mrf.mxu0
  %v1219 = vadd.f32 %v1074, %v1218
  %v1220 = vpop.f32.mrf.mxu0
  %1221 = vmatprep.mubr.f32.mxu0 0.0
  %1222 = vmatmul.mubr.f32.gmra.mxu0 %v953
  %v1223 = vpop.f32.mrf.mxu0
  %v1224 = vadd.f32 %v1079, %v1223
  %v1225 = vpop.f32.mrf.mxu0
  %1226 = vmatprep.mubr.f32.mxu0 0.0
  %1227 = vmatmul.mubr.f32.gmra.mxu0 %v954
  %v1228 = vpop.f32.mrf.mxu0
  %v1229 = vadd.f32 %v1084, %v1228
  %v1230 = vpop.f32.mrf.mxu0
  %1231 = vmatprep.mubr.f32.mxu0 0.0
  %1232 = vmatmul.mubr.f32.gmra.mxu0 %v955
  %v1233 = vpop.f32.mrf.mxu0
  %v1234 = vadd.f32 %v1089, %v1233
  %v1235 = vpop.f32.mrf.mxu0
  %1236 = vmatprep.mubr.f32.mxu0 0.0
  %1237 = vmatmul.mubr.f32.gmra.mxu0 %v956
  %v1238 = vpop.f32.mrf.mxu0
  %v1239 = vadd.f32 %v1094, %v1238
  %v1240 = vpop.f32.mrf.mxu0
  %1241 = vmatprep.mubr.f32.mxu0 0.0
  %1242 = vmatmul.mubr.f32.gmra.mxu0 %v957
  %v1243 = vpop.f32.mrf.mxu0
  %v1244 = vadd.f32 %v1099, %v1243
  %v1245 = vpop.f32.mrf.mxu0
  %1246 = vmatprep.mubr.f32.mxu0 0.0
  %1247 = vmatmul.mubr.f32.gmra.mxu0 %v958
  %v1248 = vpop.f32.mrf.mxu0
  %v1249 = vadd.f32 %v1104, %v1248
  %v1250 = vpop.f32.mrf.mxu0
  %1251 = vmatprep.mubr.f32.mxu0 0.0
  %1252 = vmatmul.mubr.f32.gmra.mxu0 %v959
  %v1253 = vpop.f32.mrf.mxu0
  %v1254 = vadd.f32 %v1109, %v1253
  %v1255 = vpop.f32.mrf.mxu0
  %1256 = vmatprep.mubr.f32.mxu0 0.0
  %1257 = vmatmul.mubr.f32.gmra.mxu0 %v960
  %v1258 = vpop.f32.mrf.mxu0
  %v1259 = vadd.f32 %v1114, %v1258
  %v1260 = vpop.f32.mrf.mxu0
  %1261 = vmatprep.mubr.f32.mxu0 0.0
  %1262 = vmatmul.mubr.f32.gmra.mxu0 %v961
  %v1263 = vpop.f32.mrf.mxu0
  %v1264 = vadd.f32 %v1119, %v1263
  %v1265 = vpop.f32.mrf.mxu0
  %1266 = vmatprep.mubr.f32.mxu0 0.0
  %1267 = vmatmul.mubr.f32.gmra.mxu0 %v962
  %v1268 = vpop.f32.mrf.mxu0
  %v1269 = vadd.f32 %v1124, %v1268
  %v1270 = vpop.f32.mrf.mxu0
  %1271 = vmatprep.mubr.f32.mxu0 0.0
  %1272 = vmatmul.mubr.f32.gmra.mxu0 %v963
  %v1273 = vpop.f32.mrf.mxu0
  %v1274 = vadd.f32 %v1129, %v1273
  %v1275 = vpop.f32.mrf.mxu0
  %1276 = vmatprep.mubr.f32.mxu0 0.0
  %1277 = vmatmul.mubr.f32.gmra.mxu0 %v964
  %v1278 = vpop.f32.mrf.mxu0
  %v1279 = vadd.f32 %v1134, %v1278
  %v1280 = vpop.f32.mrf.mxu0
  %1281 = vmatprep.mubr.f32.mxu0 0.0
  %1282 = vmatmul.mubr.f32.gmra.mxu0 %v965
  %v1283 = vpop.f32.mrf.mxu0
  %v1284 = vadd.f32 %v1139, %v1283
  %v1285 = vpop.f32.mrf.mxu0
  %1286 = vmatprep.mubr.f32.mxu0 0.0
  %1287 = vmatmul.mubr.f32.gmra.mxu0 %v966
  %v1288 = vpop.f32.mrf.mxu0
  %v1289 = vadd.f32 %v1144, %v1288
  %v1290 = vpop.f32.mrf.mxu0
  %1291 = vmatprep.mubr.f32.mxu0 0.0
  %1292 = vmatmul.mubr.f32.gmra.mxu0 %v967
  %v1293 = vpop.f32.mrf.mxu0
  %v1294 = vadd.f32 %v1149, %v1293
  %v1295 = vpop.f32.mrf.mxu0
  %1296 = vdwg.mxu0
  %s1297 = scalar_lea.vmem [#allocation2], 256
  %v1298 = vld [vmem:[%s1297] sm:$0xff]
  %v1299 = vld [vmem:[%s1297 + $0x8] sm:$0xff]
  %v1300 = vld [vmem:[%s1297 + $0x10] sm:$0xff]
  %v1301 = vld [vmem:[%s1297 + $0x18] sm:$0xff]
  %v1302 = vld [vmem:[%s1297 + $0x20] sm:$0xff]
  %v1303 = vld [vmem:[%s1297 + $0x28] sm:$0xff]
  %v1304 = vld [vmem:[%s1297 + $0x30] sm:$0xff]
  %v1305 = vld [vmem:[%s1297 + $0x38] sm:$0xff]
  %v1306 = vld [vmem:[%s1297 + $0x40] sm:$0xff]
  %v1307 = vld [vmem:[%s1297 + $0x48] sm:$0xff]
  %v1308 = vld [vmem:[%s1297 + $0x50] sm:$0xff]
  %v1309 = vld [vmem:[%s1297 + $0x58] sm:$0xff]
  %v1310 = vld [vmem:[%s1297 + $0x60] sm:$0xff]
  %v1311 = vld [vmem:[%s1297 + $0x68] sm:$0xff]
  %v1312 = vld [vmem:[%s1297 + $0x70] sm:$0xff]
  %v1313 = vld [vmem:[%s1297 + $0x78] sm:$0xff]
  %1314 = vmatprep.subr.mxu0 0.0
  %1315 = vmatpush1.msra.mxu0 %v1313
  %1316 = vmatprep.subr.mxu0 0.0
  %1317 = vmatpush1.msra.mxu0 %v1312
  %1318 = vmatprep.subr.mxu0 0.0
  %1319 = vmatpush1.msra.mxu0 %v1311
  %1320 = vmatprep.subr.mxu0 0.0
  %1321 = vmatpush1.msra.mxu0 %v1310
  %1322 = vmatprep.subr.mxu0 0.0
  %1323 = vmatpush1.msra.mxu0 %v1309
  %1324 = vmatprep.subr.mxu0 0.0
  %1325 = vmatpush1.msra.mxu0 %v1308
  %1326 = vmatprep.subr.mxu0 0.0
  %1327 = vmatpush1.msra.mxu0 %v1307
  %1328 = vmatprep.subr.mxu0 0.0
  %1329 = vmatpush1.msra.mxu0 %v1306
  %1330 = vmatprep.subr.mxu0 0.0
  %1331 = vmatpush1.msra.mxu0 %v1305
  %1332 = vmatprep.subr.mxu0 0.0
  %1333 = vmatpush1.msra.mxu0 %v1304
  %1334 = vmatprep.subr.mxu0 0.0
  %1335 = vmatpush1.msra.mxu0 %v1303
  %1336 = vmatprep.subr.mxu0 0.0
  %1337 = vmatpush1.msra.mxu0 %v1302
  %1338 = vmatprep.subr.mxu0 0.0
  %1339 = vmatpush1.msra.mxu0 %v1301
  %1340 = vmatprep.subr.mxu0 0.0
  %1341 = vmatpush1.msra.mxu0 %v1300
  %1342 = vmatprep.subr.mxu0 0.0
  %1343 = vmatpush1.msra.mxu0 %v1299
  %1344 = vmatprep.subr.mxu0 0.0
  %1345 = vmatpush1.msra.mxu0 %v1298
  %1346 = vmatprep.subr.mxu0 0.0
  %1347 = vmatpush2.msra.mxu0 0.0
  %1348 = vmatprep.subr.mxu0 0.0
  %1349 = vmatpush2.msra.mxu0 0.0
  %1350 = vmatprep.subr.mxu0 0.0
  %1351 = vmatpush2.msra.mxu0 0.0
  %1352 = vmatprep.subr.mxu0 0.0
  %1353 = vmatpush2.msra.mxu0 0.0
  %1354 = vmatprep.subr.mxu0 0.0
  %1355 = vmatpush2.msra.mxu0 0.0
  %1356 = vmatprep.subr.mxu0 0.0
  %1357 = vmatpush2.msra.mxu0 0.0
  %1358 = vmatprep.subr.mxu0 0.0
  %1359 = vmatpush2.msra.mxu0 0.0
  %1360 = vmatprep.subr.mxu0 0.0
  %1361 = vmatpush2.msra.mxu0 0.0
  %1362 = vmatprep.subr.mxu0 0.0
  %1363 = vmatpush2.msra.mxu0 0.0
  %1364 = vmatprep.subr.mxu0 0.0
  %1365 = vmatpush2.msra.mxu0 0.0
  %1366 = vmatprep.subr.mxu0 0.0
  %1367 = vmatpush2.msra.mxu0 0.0
  %1368 = vmatprep.subr.mxu0 0.0
  %1369 = vmatpush2.msra.mxu0 0.0
  %1370 = vmatprep.subr.mxu0 0.0
  %1371 = vmatpush2.msra.mxu0 0.0
  %1372 = vmatprep.subr.mxu0 0.0
  %1373 = vmatpush2.msra.mxu0 0.0
  %1374 = vmatprep.subr.mxu0 0.0
  %1375 = vmatpush2.msra.mxu0 0.0
  %1376 = vmatprep.subr.mxu0 0.0
  %1377 = vmatpush2.msra.mxu0 0.0
  %1378 = vmatprep.mubr.f32.mxu0 0.0
  %1379 = vmatmul.mubr.f32.gmra.mxu0 %v954
  %v1380 = vpop.f32.mrf.mxu0
  %v1381 = vadd.f32 0.0, %v1380
  %v1382 = vpop.f32.mrf.mxu0
  %1383 = vmatprep.mubr.f32.mxu0 0.0
  %1384 = vmatmul.mubr.f32.gmra.mxu0 %v955
  %v1385 = vpop.f32.mrf.mxu0
  %v1386 = vadd.f32 0.0, %v1385
  %v1387 = vpop.f32.mrf.mxu0
  %1388 = vmatprep.mubr.f32.mxu0 0.0
  %1389 = vmatmul.mubr.f32.gmra.mxu0 %v956
  %v1390 = vpop.f32.mrf.mxu0
  %v1391 = vadd.f32 0.0, %v1390
  %v1392 = vpop.f32.mrf.mxu0
  %1393 = vmatprep.mubr.f32.mxu0 0.0
  %1394 = vmatmul.mubr.f32.gmra.mxu0 %v957
  %v1395 = vpop.f32.mrf.mxu0
  %v1396 = vadd.f32 0.0, %v1395
  %v1397 = vpop.f32.mrf.mxu0
  %1398 = vmatprep.mubr.f32.mxu0 0.0
  %1399 = vmatmul.mubr.f32.gmra.mxu0 %v958
  %v1400 = vpop.f32.mrf.mxu0
  %v1401 = vadd.f32 0.0, %v1400
  %v1402 = vpop.f32.mrf.mxu0
  %1403 = vmatprep.mubr.f32.mxu0 0.0
  %1404 = vmatmul.mubr.f32.gmra.mxu0 %v959
  %v1405 = vpop.f32.mrf.mxu0
  %v1406 = vadd.f32 0.0, %v1405
  %v1407 = vpop.f32.mrf.mxu0
  %1408 = vmatprep.mubr.f32.mxu0 0.0
  %1409 = vmatmul.mubr.f32.gmra.mxu0 %v960
  %v1410 = vpop.f32.mrf.mxu0
  %v1411 = vadd.f32 0.0, %v1410
  %v1412 = vpop.f32.mrf.mxu0
  %1413 = vmatprep.mubr.f32.mxu0 0.0
  %1414 = vmatmul.mubr.f32.gmra.mxu0 %v961
  %v1415 = vpop.f32.mrf.mxu0
  %v1416 = vadd.f32 0.0, %v1415
  %v1417 = vpop.f32.mrf.mxu0
  %1418 = vmatprep.mubr.f32.mxu0 0.0
  %1419 = vmatmul.mubr.f32.gmra.mxu0 %v962
  %v1420 = vpop.f32.mrf.mxu0
  %v1421 = vadd.f32 0.0, %v1420
  %v1422 = vpop.f32.mrf.mxu0
  %1423 = vmatprep.mubr.f32.mxu0 0.0
  %1424 = vmatmul.mubr.f32.gmra.mxu0 %v963
  %v1425 = vpop.f32.mrf.mxu0
  %v1426 = vadd.f32 0.0, %v1425
  %v1427 = vpop.f32.mrf.mxu0
  %1428 = vmatprep.mubr.f32.mxu0 0.0
  %1429 = vmatmul.mubr.f32.gmra.mxu0 %v964
  %v1430 = vpop.f32.mrf.mxu0
  %v1431 = vadd.f32 0.0, %v1430
  %v1432 = vpop.f32.mrf.mxu0
  %1433 = vmatprep.mubr.f32.mxu0 0.0
  %1434 = vmatmul.mubr.f32.gmra.mxu0 %v965
  %v1435 = vpop.f32.mrf.mxu0
  %v1436 = vadd.f32 0.0, %v1435
  %v1437 = vpop.f32.mrf.mxu0
  %1438 = vmatprep.mubr.f32.mxu0 0.0
  %1439 = vmatmul.mubr.f32.gmra.mxu0 %v966
  %v1440 = vpop.f32.mrf.mxu0
  %v1441 = vadd.f32 0.0, %v1440
  %v1442 = vpop.f32.mrf.mxu0
  %1443 = vmatprep.mubr.f32.mxu0 0.0
  %1444 = vmatmul.mubr.f32.gmra.mxu0 %v967
  %v1445 = vpop.f32.mrf.mxu0
  %v1446 = vadd.f32 0.0, %v1445
  %v1447 = vpop.f32.mrf.mxu0
  %1448 = vmatprep.mubr.f32.mxu0 0.0
  %1449 = vmatmul.mubr.f32.gmra.mxu0 %v968
  %v1450 = vpop.f32.mrf.mxu0
  %v1451 = vadd.f32 0.0, %v1450
  %v1452 = vpop.f32.mrf.mxu0
  %1453 = vmatprep.mubr.f32.mxu0 0.0
  %1454 = vmatmul.mubr.f32.gmra.mxu0 0.0
  %v1455 = vpop.f32.mrf.mxu0
  %v1456 = vadd.f32 0.0, %v1455
  %v1457 = vpop.f32.mrf.mxu0
  %1458 = vdwg.mxu0
  %v1459 = vadd.f32 %v1219, %v1381
  %v1460 = vadd.f32 %v1224, %v1386
  %v1461 = vadd.f32 %v1229, %v1391
  %v1462 = vadd.f32 %v1234, %v1396
  %v1463 = vadd.f32 %v1239, %v1401
  %v1464 = vadd.f32 %v1244, %v1406
  %v1465 = vadd.f32 %v1249, %v1411
  %v1466 = vadd.f32 %v1254, %v1416
  %v1467 = vadd.f32 %v1259, %v1421
  %v1468 = vadd.f32 %v1264, %v1426
  %v1469 = vadd.f32 %v1269, %v1431
  %v1470 = vadd.f32 %v1274, %v1436
  %v1471 = vadd.f32 %v1279, %v1441
  %v1472 = vadd.f32 %v1284, %v1446
  %v1473 = vadd.f32 %v1289, %v1451
  %v1474 = vadd.f32 %v1294, %v1456
  %v1475 = vlaneseq
  %v1476 = vshrl.u32 %v1475, 7
  %v1477 = vsub.s32 0, %v1476
  %v1478 = vrot.slane %v973, %v1477
  %v1479 = vadd.f32 %v1459, %v1478
  %v1480 = vadd.f32 %v1460, %v1478
  %v1481 = vadd.f32 %v1461, %v1478
  %v1482 = vadd.f32 %v1462, %v1478
  %v1483 = vadd.f32 %v1463, %v1478
  %v1484 = vadd.f32 %v1464, %v1478
  %v1485 = vadd.f32 %v1465, %v1478
  %v1486 = vadd.f32 %v1466, %v1478
  %v1487 = vadd.f32 %v1467, %v1478
  %v1488 = vadd.f32 %v1468, %v1478
  %v1489 = vadd.f32 %v1469, %v1478
  %v1490 = vadd.f32 %v1470, %v1478
  %v1491 = vadd.f32 %v1471, %v1478
  %v1492 = vadd.f32 %v1472, %v1478
  %v1493 = vadd.f32 %v1473, %v1478
  %v1494 = vadd.f32 %v1474, %v1478
  %vm1495 = vcmp.gt.f32.partialorder %v1479, 0.0
  %vm1496 = vcmp.gt.f32.partialorder %v1480, 0.0
  %vm1497 = vcmp.gt.f32.partialorder %v1481, 0.0
  %vm1498 = vcmp.gt.f32.partialorder %v1482, 0.0
  %vm1499 = vcmp.gt.f32.partialorder %v1483, 0.0
  %vm1500 = vcmp.gt.f32.partialorder %v1484, 0.0
  %vm1501 = vcmp.gt.f32.partialorder %v1485, 0.0
  %vm1502 = vcmp.gt.f32.partialorder %v1486, 0.0
  %vm1503 = vcmp.gt.f32.partialorder %v1487, 0.0
  %vm1504 = vcmp.gt.f32.partialorder %v1488, 0.0
  %vm1505 = vcmp.gt.f32.partialorder %v1489, 0.0
  %vm1506 = vcmp.gt.f32.partialorder %v1490, 0.0
  %vm1507 = vcmp.gt.f32.partialorder %v1491, 0.0
  %vm1508 = vcmp.gt.f32.partialorder %v1492, 0.0
  %vm1509 = vcmp.gt.f32.partialorder %v1493, 0.0
  %vm1510 = vcmp.gt.f32.partialorder %v1494, 0.0
  %v1511 = vmul.f32 %v1479, 0.01
  %v1512 = vmul.f32 %v1480, 0.01
  %v1513 = vmul.f32 %v1481, 0.01
  %v1514 = vmul.f32 %v1482, 0.01
  %v1515 = vmul.f32 %v1483, 0.01
  %v1516 = vmul.f32 %v1484, 0.01
  %v1517 = vmul.f32 %v1485, 0.01
  %v1518 = vmul.f32 %v1486, 0.01
  %v1519 = vmul.f32 %v1487, 0.01
  %v1520 = vmul.f32 %v1488, 0.01
  %v1521 = vmul.f32 %v1489, 0.01
  %v1522 = vmul.f32 %v1490, 0.01
  %v1523 = vmul.f32 %v1491, 0.01
  %v1524 = vmul.f32 %v1492, 0.01
  %v1525 = vmul.f32 %v1493, 0.01
  %v1526 = vmul.f32 %v1494, 0.01
  %v1527 = vsel %vm1495, %v1479, %v1511
  %v1528 = vsel %vm1496, %v1480, %v1512
  %v1529 = vsel %vm1497, %v1481, %v1513
  %v1530 = vsel %vm1498, %v1482, %v1514
  %v1531 = vsel %vm1499, %v1483, %v1515
  %v1532 = vsel %vm1500, %v1484, %v1516
  %v1533 = vsel %vm1501, %v1485, %v1517
  %v1534 = vsel %vm1502, %v1486, %v1518
  %v1535 = vsel %vm1503, %v1487, %v1519
  %v1536 = vsel %vm1504, %v1488, %v1520
  %v1537 = vsel %vm1505, %v1489, %v1521
  %v1538 = vsel %vm1506, %v1490, %v1522
  %v1539 = vsel %vm1507, %v1491, %v1523
  %v1540 = vsel %vm1508, %v1492, %v1524
  %v1541 = vsel %vm1509, %v1493, %v1525
  %v1542 = vsel %vm1510, %v1494, %v1526
  %s1543 = smul.u32 2048, 1
  %s1544 = sshll.u32 %s1543, 4
  %1545 = dma.done %s150, %s1544
  %v1546 = vld [vmem:[%s1 + $0x5] sm:$0x1]
  %v1547 = vld [vmem:[#allocation3] sm:$0xff]
  %v1548 = vld [vmem:[#allocation3 + $0x8] sm:$0xff]
  %v1549 = vld [vmem:[#allocation3 + $0x10] sm:$0xff]
  %v1550 = vld [vmem:[#allocation3 + $0x18] sm:$0xff]
  %v1551 = vld [vmem:[#allocation3 + $0x20] sm:$0xff]
  %v1552 = vld [vmem:[#allocation3 + $0x28] sm:$0xff]
  %v1553 = vld [vmem:[#allocation3 + $0x30] sm:$0xff]
  %v1554 = vld [vmem:[#allocation3 + $0x38] sm:$0xff]
  %v1555 = vld [vmem:[#allocation3 + $0x40] sm:$0xff]
  %v1556 = vld [vmem:[#allocation3 + $0x48] sm:$0xff]
  %v1557 = vld [vmem:[#allocation3 + $0x50] sm:$0xff]
  %v1558 = vld [vmem:[#allocation3 + $0x58] sm:$0xff]
  %v1559 = vld [vmem:[#allocation3 + $0x60] sm:$0xff]
  %v1560 = vld [vmem:[#allocation3 + $0x68] sm:$0xff]
  %v1561 = vld [vmem:[#allocation3 + $0x70] sm:$0xff]
  %v1562 = vld [vmem:[#allocation3 + $0x78] sm:$0xff]
  %v1563 = vld [vmem:[#allocation3 + $0x80] sm:$0xff]
  %v1564 = vld [vmem:[#allocation3 + $0x88] sm:$0xff]
  %v1565 = vld [vmem:[#allocation3 + $0x90] sm:$0xff]
  %v1566 = vld [vmem:[#allocation3 + $0x98] sm:$0xff]
  %v1567 = vld [vmem:[#allocation3 + $0xa0] sm:$0xff]
  %v1568 = vld [vmem:[#allocation3 + $0xa8] sm:$0xff]
  %v1569 = vld [vmem:[#allocation3 + $0xb0] sm:$0xff]
  %v1570 = vld [vmem:[#allocation3 + $0xb8] sm:$0xff]
  %v1571 = vld [vmem:[#allocation3 + $0xc0] sm:$0xff]
  %v1572 = vld [vmem:[#allocation3 + $0xc8] sm:$0xff]
  %v1573 = vld [vmem:[#allocation3 + $0xd0] sm:$0xff]
  %v1574 = vld [vmem:[#allocation3 + $0xd8] sm:$0xff]
  %v1575 = vld [vmem:[#allocation3 + $0xe0] sm:$0xff]
  %v1576 = vld [vmem:[#allocation3 + $0xe8] sm:$0xff]
  %v1577 = vld [vmem:[#allocation3 + $0xf0] sm:$0xff]
  %v1578 = vld [vmem:[#allocation3 + $0xf8] sm:$0xff]
  %v1579 = vld [vmem:[#allocation3 + $0x100] sm:$0xff]
  %v1580 = vld [vmem:[#allocation3 + $0x108] sm:$0xff]
  %v1581 = vld [vmem:[#allocation3 + $0x110] sm:$0xff]
  %v1582 = vld [vmem:[#allocation3 + $0x118] sm:$0xff]
  %v1583 = vld [vmem:[#allocation3 + $0x120] sm:$0xff]
  %v1584 = vld [vmem:[#allocation3 + $0x128] sm:$0xff]
  %v1585 = vld [vmem:[#allocation3 + $0x130] sm:$0xff]
  %v1586 = vld [vmem:[#allocation3 + $0x138] sm:$0xff]
  %v1587 = vld [vmem:[#allocation3 + $0x140] sm:$0xff]
  %v1588 = vld [vmem:[#allocation3 + $0x148] sm:$0xff]
  %v1589 = vld [vmem:[#allocation3 + $0x150] sm:$0xff]
  %v1590 = vld [vmem:[#allocation3 + $0x158] sm:$0xff]
  %v1591 = vld [vmem:[#allocation3 + $0x160] sm:$0xff]
  %v1592 = vld [vmem:[#allocation3 + $0x168] sm:$0xff]
  %v1593 = vld [vmem:[#allocation3 + $0x170] sm:$0xff]
  %v1594 = vld [vmem:[#allocation3 + $0x178] sm:$0xff]
  %v1595 = vld [vmem:[#allocation3 + $0x180] sm:$0xff]
  %v1596 = vld [vmem:[#allocation3 + $0x188] sm:$0xff]
  %v1597 = vld [vmem:[#allocation3 + $0x190] sm:$0xff]
  %v1598 = vld [vmem:[#allocation3 + $0x198] sm:$0xff]
  %v1599 = vld [vmem:[#allocation3 + $0x1a0] sm:$0xff]
  %v1600 = vld [vmem:[#allocation3 + $0x1a8] sm:$0xff]
  %v1601 = vld [vmem:[#allocation3 + $0x1b0] sm:$0xff]
  %v1602 = vld [vmem:[#allocation3 + $0x1b8] sm:$0xff]
  %v1603 = vld [vmem:[#allocation3 + $0x1c0] sm:$0xff]
  %v1604 = vld [vmem:[#allocation3 + $0x1c8] sm:$0xff]
  %v1605 = vld [vmem:[#allocation3 + $0x1d0] sm:$0xff]
  %v1606 = vld [vmem:[#allocation3 + $0x1d8] sm:$0xff]
  %v1607 = vld [vmem:[#allocation3 + $0x1e0] sm:$0xff]
  %v1608 = vld [vmem:[#allocation3 + $0x1e8] sm:$0xff]
  %v1609 = vld [vmem:[#allocation3 + $0x1f0] sm:$0xff]
  %v1610 = vld [vmem:[#allocation3 + $0x1f8] sm:$0xff]
  %v1611 = vld [vmem:[#allocation3 + $0x200] sm:$0xff]
  %v1612 = vld [vmem:[#allocation3 + $0x208] sm:$0xff]
  %v1613 = vld [vmem:[#allocation3 + $0x210] sm:$0xff]
  %v1614 = vld [vmem:[#allocation3 + $0x218] sm:$0xff]
  %v1615 = vld [vmem:[#allocation3 + $0x220] sm:$0xff]
  %v1616 = vld [vmem:[#allocation3 + $0x228] sm:$0xff]
  %v1617 = vld [vmem:[#allocation3 + $0x230] sm:$0xff]
  %v1618 = vld [vmem:[#allocation3 + $0x238] sm:$0xff]
  %v1619 = vld [vmem:[#allocation3 + $0x240] sm:$0xff]
  %v1620 = vld [vmem:[#allocation3 + $0x248] sm:$0xff]
  %v1621 = vld [vmem:[#allocation3 + $0x250] sm:$0xff]
  %v1622 = vld [vmem:[#allocation3 + $0x258] sm:$0xff]
  %v1623 = vld [vmem:[#allocation3 + $0x260] sm:$0xff]
  %v1624 = vld [vmem:[#allocation3 + $0x268] sm:$0xff]
  %v1625 = vld [vmem:[#allocation3 + $0x270] sm:$0xff]
  %v1626 = vld [vmem:[#allocation3 + $0x278] sm:$0xff]
  %v1627 = vld [vmem:[#allocation3 + $0x280] sm:$0xff]
  %v1628 = vld [vmem:[#allocation3 + $0x288] sm:$0xff]
  %v1629 = vld [vmem:[#allocation3 + $0x290] sm:$0xff]
  %v1630 = vld [vmem:[#allocation3 + $0x298] sm:$0xff]
  %v1631 = vld [vmem:[#allocation3 + $0x2a0] sm:$0xff]
  %v1632 = vld [vmem:[#allocation3 + $0x2a8] sm:$0xff]
  %v1633 = vld [vmem:[#allocation3 + $0x2b0] sm:$0xff]
  %v1634 = vld [vmem:[#allocation3 + $0x2b8] sm:$0xff]
  %v1635 = vld [vmem:[#allocation3 + $0x2c0] sm:$0xff]
  %v1636 = vld [vmem:[#allocation3 + $0x2c8] sm:$0xff]
  %v1637 = vld [vmem:[#allocation3 + $0x2d0] sm:$0xff]
  %v1638 = vld [vmem:[#allocation3 + $0x2d8] sm:$0xff]
  %v1639 = vld [vmem:[#allocation3 + $0x2e0] sm:$0xff]
  %v1640 = vld [vmem:[#allocation3 + $0x2e8] sm:$0xff]
  %v1641 = vld [vmem:[#allocation3 + $0x2f0] sm:$0xff]
  %v1642 = vld [vmem:[#allocation3 + $0x2f8] sm:$0xff]
  %v1643 = vld [vmem:[#allocation3 + $0x300] sm:$0xff]
  %v1644 = vld [vmem:[#allocation3 + $0x308] sm:$0xff]
  %v1645 = vld [vmem:[#allocation3 + $0x310] sm:$0xff]
  %v1646 = vld [vmem:[#allocation3 + $0x318] sm:$0xff]
  %v1647 = vld [vmem:[#allocation3 + $0x320] sm:$0xff]
  %v1648 = vld [vmem:[#allocation3 + $0x328] sm:$0xff]
  %v1649 = vld [vmem:[#allocation3 + $0x330] sm:$0xff]
  %v1650 = vld [vmem:[#allocation3 + $0x338] sm:$0xff]
  %v1651 = vld [vmem:[#allocation3 + $0x340] sm:$0xff]
  %v1652 = vld [vmem:[#allocation3 + $0x348] sm:$0xff]
  %v1653 = vld [vmem:[#allocation3 + $0x350] sm:$0xff]
  %v1654 = vld [vmem:[#allocation3 + $0x358] sm:$0xff]
  %v1655 = vld [vmem:[#allocation3 + $0x360] sm:$0xff]
  %v1656 = vld [vmem:[#allocation3 + $0x368] sm:$0xff]
  %v1657 = vld [vmem:[#allocation3 + $0x370] sm:$0xff]
  %v1658 = vld [vmem:[#allocation3 + $0x378] sm:$0xff]
  %v1659 = vld [vmem:[#allocation3 + $0x380] sm:$0xff]
  %v1660 = vld [vmem:[#allocation3 + $0x388] sm:$0xff]
  %v1661 = vld [vmem:[#allocation3 + $0x390] sm:$0xff]
  %v1662 = vld [vmem:[#allocation3 + $0x398] sm:$0xff]
  %v1663 = vld [vmem:[#allocation3 + $0x3a0] sm:$0xff]
  %v1664 = vld [vmem:[#allocation3 + $0x3a8] sm:$0xff]
  %v1665 = vld [vmem:[#allocation3 + $0x3b0] sm:$0xff]
  %v1666 = vld [vmem:[#allocation3 + $0x3b8] sm:$0xff]
  %v1667 = vld [vmem:[#allocation3 + $0x3c0] sm:$0xff]
  %v1668 = vld [vmem:[#allocation3 + $0x3c8] sm:$0xff]
  %v1669 = vld [vmem:[#allocation3 + $0x3d0] sm:$0xff]
  %v1670 = vld [vmem:[#allocation3 + $0x3d8] sm:$0xff]
  %v1671 = vld [vmem:[#allocation3 + $0x3e0] sm:$0xff]
  %v1672 = vld [vmem:[#allocation3 + $0x3e8] sm:$0xff]
  %v1673 = vld [vmem:[#allocation3 + $0x3f0] sm:$0xff]
  %v1674 = vld [vmem:[#allocation3 + $0x3f8] sm:$0xff]
  %v1675 = vld [vmem:[#allocation3 + $0x400] sm:$0xff]
  %v1676 = vld [vmem:[#allocation3 + $0x408] sm:$0xff]
  %v1677 = vld [vmem:[#allocation3 + $0x410] sm:$0xff]
  %v1678 = vld [vmem:[#allocation3 + $0x418] sm:$0xff]
  %v1679 = vld [vmem:[#allocation3 + $0x420] sm:$0xff]
  %v1680 = vld [vmem:[#allocation3 + $0x428] sm:$0xff]
  %v1681 = vld [vmem:[#allocation3 + $0x430] sm:$0xff]
  %v1682 = vld [vmem:[#allocation3 + $0x438] sm:$0xff]
  %v1683 = vld [vmem:[#allocation3 + $0x440] sm:$0xff]
  %v1684 = vld [vmem:[#allocation3 + $0x448] sm:$0xff]
  %v1685 = vld [vmem:[#allocation3 + $0x450] sm:$0xff]
  %v1686 = vld [vmem:[#allocation3 + $0x458] sm:$0xff]
  %v1687 = vld [vmem:[#allocation3 + $0x460] sm:$0xff]
  %v1688 = vld [vmem:[#allocation3 + $0x468] sm:$0xff]
  %v1689 = vld [vmem:[#allocation3 + $0x470] sm:$0xff]
  %v1690 = vld [vmem:[#allocation3 + $0x478] sm:$0xff]
  %v1691 = vld [vmem:[#allocation3 + $0x480] sm:$0xff]
  %v1692 = vld [vmem:[#allocation3 + $0x488] sm:$0xff]
  %v1693 = vld [vmem:[#allocation3 + $0x490] sm:$0xff]
  %v1694 = vld [vmem:[#allocation3 + $0x498] sm:$0xff]
  %v1695 = vld [vmem:[#allocation3 + $0x4a0] sm:$0xff]
  %v1696 = vld [vmem:[#allocation3 + $0x4a8] sm:$0xff]
  %v1697 = vld [vmem:[#allocation3 + $0x4b0] sm:$0xff]
  %v1698 = vld [vmem:[#allocation3 + $0x4b8] sm:$0xff]
  %v1699 = vld [vmem:[#allocation3 + $0x4c0] sm:$0xff]
  %v1700 = vld [vmem:[#allocation3 + $0x4c8] sm:$0xff]
  %v1701 = vld [vmem:[#allocation3 + $0x4d0] sm:$0xff]
  %v1702 = vld [vmem:[#allocation3 + $0x4d8] sm:$0xff]
  %v1703 = vld [vmem:[#allocation3 + $0x4e0] sm:$0xff]
  %v1704 = vld [vmem:[#allocation3 + $0x4e8] sm:$0xff]
  %v1705 = vld [vmem:[#allocation3 + $0x4f0] sm:$0xff]
  %v1706 = vld [vmem:[#allocation3 + $0x4f8] sm:$0xff]
  %v1707 = vld [vmem:[#allocation3 + $0x500] sm:$0xff]
  %v1708 = vld [vmem:[#allocation3 + $0x508] sm:$0xff]
  %v1709 = vld [vmem:[#allocation3 + $0x510] sm:$0xff]
  %v1710 = vld [vmem:[#allocation3 + $0x518] sm:$0xff]
  %v1711 = vld [vmem:[#allocation3 + $0x520] sm:$0xff]
  %v1712 = vld [vmem:[#allocation3 + $0x528] sm:$0xff]
  %v1713 = vld [vmem:[#allocation3 + $0x530] sm:$0xff]
  %v1714 = vld [vmem:[#allocation3 + $0x538] sm:$0xff]
  %v1715 = vld [vmem:[#allocation3 + $0x540] sm:$0xff]
  %v1716 = vld [vmem:[#allocation3 + $0x548] sm:$0xff]
  %v1717 = vld [vmem:[#allocation3 + $0x550] sm:$0xff]
  %v1718 = vld [vmem:[#allocation3 + $0x558] sm:$0xff]
  %v1719 = vld [vmem:[#allocation3 + $0x560] sm:$0xff]
  %v1720 = vld [vmem:[#allocation3 + $0x568] sm:$0xff]
  %v1721 = vld [vmem:[#allocation3 + $0x570] sm:$0xff]
  %v1722 = vld [vmem:[#allocation3 + $0x578] sm:$0xff]
  %v1723 = vld [vmem:[#allocation3 + $0x580] sm:$0xff]
  %v1724 = vld [vmem:[#allocation3 + $0x588] sm:$0xff]
  %v1725 = vld [vmem:[#allocation3 + $0x590] sm:$0xff]
  %v1726 = vld [vmem:[#allocation3 + $0x598] sm:$0xff]
  %v1727 = vld [vmem:[#allocation3 + $0x5a0] sm:$0xff]
  %v1728 = vld [vmem:[#allocation3 + $0x5a8] sm:$0xff]
  %v1729 = vld [vmem:[#allocation3 + $0x5b0] sm:$0xff]
  %v1730 = vld [vmem:[#allocation3 + $0x5b8] sm:$0xff]
  %v1731 = vld [vmem:[#allocation3 + $0x5c0] sm:$0xff]
  %v1732 = vld [vmem:[#allocation3 + $0x5c8] sm:$0xff]
  %v1733 = vld [vmem:[#allocation3 + $0x5d0] sm:$0xff]
  %v1734 = vld [vmem:[#allocation3 + $0x5d8] sm:$0xff]
  %v1735 = vld [vmem:[#allocation3 + $0x5e0] sm:$0xff]
  %v1736 = vld [vmem:[#allocation3 + $0x5e8] sm:$0xff]
  %v1737 = vld [vmem:[#allocation3 + $0x5f0] sm:$0xff]
  %v1738 = vld [vmem:[#allocation3 + $0x5f8] sm:$0xff]
  %v1739 = vld [vmem:[#allocation3 + $0x600] sm:$0xff]
  %v1740 = vld [vmem:[#allocation3 + $0x608] sm:$0xff]
  %v1741 = vld [vmem:[#allocation3 + $0x610] sm:$0xff]
  %v1742 = vld [vmem:[#allocation3 + $0x618] sm:$0xff]
  %v1743 = vld [vmem:[#allocation3 + $0x620] sm:$0xff]
  %v1744 = vld [vmem:[#allocation3 + $0x628] sm:$0xff]
  %v1745 = vld [vmem:[#allocation3 + $0x630] sm:$0xff]
  %v1746 = vld [vmem:[#allocation3 + $0x638] sm:$0xff]
  %v1747 = vld [vmem:[#allocation3 + $0x640] sm:$0xff]
  %v1748 = vld [vmem:[#allocation3 + $0x648] sm:$0xff]
  %v1749 = vld [vmem:[#allocation3 + $0x650] sm:$0xff]
  %v1750 = vld [vmem:[#allocation3 + $0x658] sm:$0xff]
  %v1751 = vld [vmem:[#allocation3 + $0x660] sm:$0xff]
  %v1752 = vld [vmem:[#allocation3 + $0x668] sm:$0xff]
  %v1753 = vld [vmem:[#allocation3 + $0x670] sm:$0xff]
  %v1754 = vld [vmem:[#allocation3 + $0x678] sm:$0xff]
  %v1755 = vld [vmem:[#allocation3 + $0x680] sm:$0xff]
  %v1756 = vld [vmem:[#allocation3 + $0x688] sm:$0xff]
  %v1757 = vld [vmem:[#allocation3 + $0x690] sm:$0xff]
  %v1758 = vld [vmem:[#allocation3 + $0x698] sm:$0xff]
  %v1759 = vld [vmem:[#allocation3 + $0x6a0] sm:$0xff]
  %v1760 = vld [vmem:[#allocation3 + $0x6a8] sm:$0xff]
  %v1761 = vld [vmem:[#allocation3 + $0x6b0] sm:$0xff]
  %v1762 = vld [vmem:[#allocation3 + $0x6b8] sm:$0xff]
  %v1763 = vld [vmem:[#allocation3 + $0x6c0] sm:$0xff]
  %v1764 = vld [vmem:[#allocation3 + $0x6c8] sm:$0xff]
  %v1765 = vld [vmem:[#allocation3 + $0x6d0] sm:$0xff]
  %v1766 = vld [vmem:[#allocation3 + $0x6d8] sm:$0xff]
  %v1767 = vld [vmem:[#allocation3 + $0x6e0] sm:$0xff]
  %v1768 = vld [vmem:[#allocation3 + $0x6e8] sm:$0xff]
  %v1769 = vld [vmem:[#allocation3 + $0x6f0] sm:$0xff]
  %v1770 = vld [vmem:[#allocation3 + $0x6f8] sm:$0xff]
  %v1771 = vld [vmem:[#allocation3 + $0x700] sm:$0xff]
  %v1772 = vld [vmem:[#allocation3 + $0x708] sm:$0xff]
  %v1773 = vld [vmem:[#allocation3 + $0x710] sm:$0xff]
  %v1774 = vld [vmem:[#allocation3 + $0x718] sm:$0xff]
  %v1775 = vld [vmem:[#allocation3 + $0x720] sm:$0xff]
  %v1776 = vld [vmem:[#allocation3 + $0x728] sm:$0xff]
  %v1777 = vld [vmem:[#allocation3 + $0x730] sm:$0xff]
  %v1778 = vld [vmem:[#allocation3 + $0x738] sm:$0xff]
  %v1779 = vld [vmem:[#allocation3 + $0x740] sm:$0xff]
  %v1780 = vld [vmem:[#allocation3 + $0x748] sm:$0xff]
  %v1781 = vld [vmem:[#allocation3 + $0x750] sm:$0xff]
  %v1782 = vld [vmem:[#allocation3 + $0x758] sm:$0xff]
  %v1783 = vld [vmem:[#allocation3 + $0x760] sm:$0xff]
  %v1784 = vld [vmem:[#allocation3 + $0x768] sm:$0xff]
  %v1785 = vld [vmem:[#allocation3 + $0x770] sm:$0xff]
  %v1786 = vld [vmem:[#allocation3 + $0x778] sm:$0xff]
  %v1787 = vld [vmem:[#allocation3 + $0x780] sm:$0xff]
  %v1788 = vld [vmem:[#allocation3 + $0x788] sm:$0xff]
  %v1789 = vld [vmem:[#allocation3 + $0x790] sm:$0xff]
  %v1790 = vld [vmem:[#allocation3 + $0x798] sm:$0xff]
  %v1791 = vld [vmem:[#allocation3 + $0x7a0] sm:$0xff]
  %v1792 = vld [vmem:[#allocation3 + $0x7a8] sm:$0xff]
  %v1793 = vld [vmem:[#allocation3 + $0x7b0] sm:$0xff]
  %v1794 = vld [vmem:[#allocation3 + $0x7b8] sm:$0xff]
  %v1795 = vld [vmem:[#allocation3 + $0x7c0] sm:$0xff]
  %v1796 = vld [vmem:[#allocation3 + $0x7c8] sm:$0xff]
  %v1797 = vld [vmem:[#allocation3 + $0x7d0] sm:$0xff]
  %v1798 = vld [vmem:[#allocation3 + $0x7d8] sm:$0xff]
  %v1799 = vld [vmem:[#allocation3 + $0x7e0] sm:$0xff]
  %v1800 = vld [vmem:[#allocation3 + $0x7e8] sm:$0xff]
  %v1801 = vld [vmem:[#allocation3 + $0x7f0] sm:$0xff]
  %v1802 = vld [vmem:[#allocation3 + $0x7f8] sm:$0xff]
  %v1803 = vlaneseq
  %v1804 = vshrl.u32 %v1803, 7
  %v1805 = vsub.s32 0, %v1804
  %v1806 = vrot.slane %v1546, %v1805
  %1807 = vmatprep.subr.mxu0 0.0
  %1808 = vmatpush1.msra.mxu0 %v1562
  %1809 = vmatprep.subr.mxu0 0.0
  %1810 = vmatpush1.msra.mxu0 %v1561
  %1811 = vmatprep.subr.mxu0 0.0
  %1812 = vmatpush1.msra.mxu0 %v1560
  %1813 = vmatprep.subr.mxu0 0.0
  %1814 = vmatpush1.msra.mxu0 %v1559
  %1815 = vmatprep.subr.mxu0 0.0
  %1816 = vmatpush1.msra.mxu0 %v1558
  %1817 = vmatprep.subr.mxu0 0.0
  %1818 = vmatpush1.msra.mxu0 %v1557
  %1819 = vmatprep.subr.mxu0 0.0
  %1820 = vmatpush1.msra.mxu0 %v1556
  %1821 = vmatprep.subr.mxu0 0.0
  %1822 = vmatpush1.msra.mxu0 %v1555
  %1823 = vmatprep.subr.mxu0 0.0
  %1824 = vmatpush1.msra.mxu0 %v1554
  %1825 = vmatprep.subr.mxu0 0.0
  %1826 = vmatpush1.msra.mxu0 %v1553
  %1827 = vmatprep.subr.mxu0 0.0
  %1828 = vmatpush1.msra.mxu0 %v1552
  %1829 = vmatprep.subr.mxu0 0.0
  %1830 = vmatpush1.msra.mxu0 %v1551
  %1831 = vmatprep.subr.mxu0 0.0
  %1832 = vmatpush1.msra.mxu0 %v1550
  %1833 = vmatprep.subr.mxu0 0.0
  %1834 = vmatpush1.msra.mxu0 %v1549
  %1835 = vmatprep.subr.mxu0 0.0
  %1836 = vmatpush1.msra.mxu0 %v1548
  %1837 = vmatprep.subr.mxu0 0.0
  %1838 = vmatpush1.msra.mxu0 %v1547
  %1839 = vmatprep.subr.mxu0 0.0
  %1840 = vmatpush2.msra.mxu0 %v1578
  %1841 = vmatprep.subr.mxu0 0.0
  %1842 = vmatpush2.msra.mxu0 %v1577
  %1843 = vmatprep.subr.mxu0 0.0
  %1844 = vmatpush2.msra.mxu0 %v1576
  %1845 = vmatprep.subr.mxu0 0.0
  %1846 = vmatpush2.msra.mxu0 %v1575
  %1847 = vmatprep.subr.mxu0 0.0
  %1848 = vmatpush2.msra.mxu0 %v1574
  %1849 = vmatprep.subr.mxu0 0.0
  %1850 = vmatpush2.msra.mxu0 %v1573
  %1851 = vmatprep.subr.mxu0 0.0
  %1852 = vmatpush2.msra.mxu0 %v1572
  %1853 = vmatprep.subr.mxu0 0.0
  %1854 = vmatpush2.msra.mxu0 %v1571
  %1855 = vmatprep.subr.mxu0 0.0
  %1856 = vmatpush2.msra.mxu0 %v1570
  %1857 = vmatprep.subr.mxu0 0.0
  %1858 = vmatpush2.msra.mxu0 %v1569
  %1859 = vmatprep.subr.mxu0 0.0
  %1860 = vmatpush2.msra.mxu0 %v1568
  %1861 = vmatprep.subr.mxu0 0.0
  %1862 = vmatpush2.msra.mxu0 %v1567
  %1863 = vmatprep.subr.mxu0 0.0
  %1864 = vmatpush2.msra.mxu0 %v1566
  %1865 = vmatprep.subr.mxu0 0.0
  %1866 = vmatpush2.msra.mxu0 %v1565
  %1867 = vmatprep.subr.mxu0 0.0
  %1868 = vmatpush2.msra.mxu0 %v1564
  %1869 = vmatprep.subr.mxu0 0.0
  %1870 = vmatpush2.msra.mxu0 %v1563
  %1871 = vmatprep.mubr.f32.mxu0 %v1528
  %1872 = vmatmul.mubr.f32.gmra.mxu0 %v1527
  %v1873 = vpop.f32.mrf.mxu0
  %v1874 = vadd.f32 %v1806, %v1873
  %v1875 = vpop.f32.mrf.mxu0
  %1876 = vdwg.mxu0
  %1877 = vmatprep.subr.mxu0 0.0
  %1878 = vmatpush1.msra.mxu0 %v1594
  %1879 = vmatprep.subr.mxu0 0.0
  %1880 = vmatpush1.msra.mxu0 %v1593
  %1881 = vmatprep.subr.mxu0 0.0
  %1882 = vmatpush1.msra.mxu0 %v1592
  %1883 = vmatprep.subr.mxu0 0.0
  %1884 = vmatpush1.msra.mxu0 %v1591
  %1885 = vmatprep.subr.mxu0 0.0
  %1886 = vmatpush1.msra.mxu0 %v1590
  %1887 = vmatprep.subr.mxu0 0.0
  %1888 = vmatpush1.msra.mxu0 %v1589
  %1889 = vmatprep.subr.mxu0 0.0
  %1890 = vmatpush1.msra.mxu0 %v1588
  %1891 = vmatprep.subr.mxu0 0.0
  %1892 = vmatpush1.msra.mxu0 %v1587
  %1893 = vmatprep.subr.mxu0 0.0
  %1894 = vmatpush1.msra.mxu0 %v1586
  %1895 = vmatprep.subr.mxu0 0.0
  %1896 = vmatpush1.msra.mxu0 %v1585
  %1897 = vmatprep.subr.mxu0 0.0
  %1898 = vmatpush1.msra.mxu0 %v1584
  %1899 = vmatprep.subr.mxu0 0.0
  %1900 = vmatpush1.msra.mxu0 %v1583
  %1901 = vmatprep.subr.mxu0 0.0
  %1902 = vmatpush1.msra.mxu0 %v1582
  %1903 = vmatprep.subr.mxu0 0.0
  %1904 = vmatpush1.msra.mxu0 %v1581
  %1905 = vmatprep.subr.mxu0 0.0
  %1906 = vmatpush1.msra.mxu0 %v1580
  %1907 = vmatprep.subr.mxu0 0.0
  %1908 = vmatpush1.msra.mxu0 %v1579
  %1909 = vmatprep.subr.mxu0 0.0
  %1910 = vmatpush2.msra.mxu0 %v1610
  %1911 = vmatprep.subr.mxu0 0.0
  %1912 = vmatpush2.msra.mxu0 %v1609
  %1913 = vmatprep.subr.mxu0 0.0
  %1914 = vmatpush2.msra.mxu0 %v1608
  %1915 = vmatprep.subr.mxu0 0.0
  %1916 = vmatpush2.msra.mxu0 %v1607
  %1917 = vmatprep.subr.mxu0 0.0
  %1918 = vmatpush2.msra.mxu0 %v1606
  %1919 = vmatprep.subr.mxu0 0.0
  %1920 = vmatpush2.msra.mxu0 %v1605
  %1921 = vmatprep.subr.mxu0 0.0
  %1922 = vmatpush2.msra.mxu0 %v1604
  %1923 = vmatprep.subr.mxu0 0.0
  %1924 = vmatpush2.msra.mxu0 %v1603
  %1925 = vmatprep.subr.mxu0 0.0
  %1926 = vmatpush2.msra.mxu0 %v1602
  %1927 = vmatprep.subr.mxu0 0.0
  %1928 = vmatpush2.msra.mxu0 %v1601
  %1929 = vmatprep.subr.mxu0 0.0
  %1930 = vmatpush2.msra.mxu0 %v1600
  %1931 = vmatprep.subr.mxu0 0.0
  %1932 = vmatpush2.msra.mxu0 %v1599
  %1933 = vmatprep.subr.mxu0 0.0
  %1934 = vmatpush2.msra.mxu0 %v1598
  %1935 = vmatprep.subr.mxu0 0.0
  %1936 = vmatpush2.msra.mxu0 %v1597
  %1937 = vmatprep.subr.mxu0 0.0
  %1938 = vmatpush2.msra.mxu0 %v1596
  %1939 = vmatprep.subr.mxu0 0.0
  %1940 = vmatpush2.msra.mxu0 %v1595
  %1941 = vmatprep.mubr.f32.mxu0 %v1530
  %1942 = vmatmul.mubr.f32.gmra.mxu0 %v1529
  %v1943 = vpop.f32.mrf.mxu0
  %v1944 = vadd.f32 %v1874, %v1943
  %v1945 = vpop.f32.mrf.mxu0
  %1946 = vdwg.mxu0
  %1947 = vmatprep.subr.mxu0 0.0
  %1948 = vmatpush1.msra.mxu0 %v1626
  %1949 = vmatprep.subr.mxu0 0.0
  %1950 = vmatpush1.msra.mxu0 %v1625
  %1951 = vmatprep.subr.mxu0 0.0
  %1952 = vmatpush1.msra.mxu0 %v1624
  %1953 = vmatprep.subr.mxu0 0.0
  %1954 = vmatpush1.msra.mxu0 %v1623
  %1955 = vmatprep.subr.mxu0 0.0
  %1956 = vmatpush1.msra.mxu0 %v1622
  %1957 = vmatprep.subr.mxu0 0.0
  %1958 = vmatpush1.msra.mxu0 %v1621
  %1959 = vmatprep.subr.mxu0 0.0
  %1960 = vmatpush1.msra.mxu0 %v1620
  %1961 = vmatprep.subr.mxu0 0.0
  %1962 = vmatpush1.msra.mxu0 %v1619
  %1963 = vmatprep.subr.mxu0 0.0
  %1964 = vmatpush1.msra.mxu0 %v1618
  %1965 = vmatprep.subr.mxu0 0.0
  %1966 = vmatpush1.msra.mxu0 %v1617
  %1967 = vmatprep.subr.mxu0 0.0
  %1968 = vmatpush1.msra.mxu0 %v1616
  %1969 = vmatprep.subr.mxu0 0.0
  %1970 = vmatpush1.msra.mxu0 %v1615
  %1971 = vmatprep.subr.mxu0 0.0
  %1972 = vmatpush1.msra.mxu0 %v1614
  %1973 = vmatprep.subr.mxu0 0.0
  %1974 = vmatpush1.msra.mxu0 %v1613
  %1975 = vmatprep.subr.mxu0 0.0
  %1976 = vmatpush1.msra.mxu0 %v1612
  %1977 = vmatprep.subr.mxu0 0.0
  %1978 = vmatpush1.msra.mxu0 %v1611
  %1979 = vmatprep.subr.mxu0 0.0
  %1980 = vmatpush2.msra.mxu0 %v1642
  %1981 = vmatprep.subr.mxu0 0.0
  %1982 = vmatpush2.msra.mxu0 %v1641
  %1983 = vmatprep.subr.mxu0 0.0
  %1984 = vmatpush2.msra.mxu0 %v1640
  %1985 = vmatprep.subr.mxu0 0.0
  %1986 = vmatpush2.msra.mxu0 %v1639
  %1987 = vmatprep.subr.mxu0 0.0
  %1988 = vmatpush2.msra.mxu0 %v1638
  %1989 = vmatprep.subr.mxu0 0.0
  %1990 = vmatpush2.msra.mxu0 %v1637
  %1991 = vmatprep.subr.mxu0 0.0
  %1992 = vmatpush2.msra.mxu0 %v1636
  %1993 = vmatprep.subr.mxu0 0.0
  %1994 = vmatpush2.msra.mxu0 %v1635
  %1995 = vmatprep.subr.mxu0 0.0
  %1996 = vmatpush2.msra.mxu0 %v1634
  %1997 = vmatprep.subr.mxu0 0.0
  %1998 = vmatpush2.msra.mxu0 %v1633
  %1999 = vmatprep.subr.mxu0 0.0
  %2000 = vmatpush2.msra.mxu0 %v1632
  %2001 = vmatprep.subr.mxu0 0.0
  %2002 = vmatpush2.msra.mxu0 %v1631
  %2003 = vmatprep.subr.mxu0 0.0
  %2004 = vmatpush2.msra.mxu0 %v1630
  %2005 = vmatprep.subr.mxu0 0.0
  %2006 = vmatpush2.msra.mxu0 %v1629
  %2007 = vmatprep.subr.mxu0 0.0
  %2008 = vmatpush2.msra.mxu0 %v1628
  %2009 = vmatprep.subr.mxu0 0.0
  %2010 = vmatpush2.msra.mxu0 %v1627
  %2011 = vmatprep.mubr.f32.mxu0 %v1532
  %2012 = vmatmul.mubr.f32.gmra.mxu0 %v1531
  %v2013 = vpop.f32.mrf.mxu0
  %v2014 = vadd.f32 %v1944, %v2013
  %v2015 = vpop.f32.mrf.mxu0
  %2016 = vdwg.mxu0
  %2017 = vmatprep.subr.mxu0 0.0
  %2018 = vmatpush1.msra.mxu0 %v1658
  %2019 = vmatprep.subr.mxu0 0.0
  %2020 = vmatpush1.msra.mxu0 %v1657
  %2021 = vmatprep.subr.mxu0 0.0
  %2022 = vmatpush1.msra.mxu0 %v1656
  %2023 = vmatprep.subr.mxu0 0.0
  %2024 = vmatpush1.msra.mxu0 %v1655
  %2025 = vmatprep.subr.mxu0 0.0
  %2026 = vmatpush1.msra.mxu0 %v1654
  %2027 = vmatprep.subr.mxu0 0.0
  %2028 = vmatpush1.msra.mxu0 %v1653
  %2029 = vmatprep.subr.mxu0 0.0
  %2030 = vmatpush1.msra.mxu0 %v1652
  %2031 = vmatprep.subr.mxu0 0.0
  %2032 = vmatpush1.msra.mxu0 %v1651
  %2033 = vmatprep.subr.mxu0 0.0
  %2034 = vmatpush1.msra.mxu0 %v1650
  %2035 = vmatprep.subr.mxu0 0.0
  %2036 = vmatpush1.msra.mxu0 %v1649
  %2037 = vmatprep.subr.mxu0 0.0
  %2038 = vmatpush1.msra.mxu0 %v1648
  %2039 = vmatprep.subr.mxu0 0.0
  %2040 = vmatpush1.msra.mxu0 %v1647
  %2041 = vmatprep.subr.mxu0 0.0
  %2042 = vmatpush1.msra.mxu0 %v1646
  %2043 = vmatprep.subr.mxu0 0.0
  %2044 = vmatpush1.msra.mxu0 %v1645
  %2045 = vmatprep.subr.mxu0 0.0
  %2046 = vmatpush1.msra.mxu0 %v1644
  %2047 = vmatprep.subr.mxu0 0.0
  %2048 = vmatpush1.msra.mxu0 %v1643
  %2049 = vmatprep.subr.mxu0 0.0
  %2050 = vmatpush2.msra.mxu0 %v1674
  %2051 = vmatprep.subr.mxu0 0.0
  %2052 = vmatpush2.msra.mxu0 %v1673
  %2053 = vmatprep.subr.mxu0 0.0
  %2054 = vmatpush2.msra.mxu0 %v1672
  %2055 = vmatprep.subr.mxu0 0.0
  %2056 = vmatpush2.msra.mxu0 %v1671
  %2057 = vmatprep.subr.mxu0 0.0
  %2058 = vmatpush2.msra.mxu0 %v1670
  %2059 = vmatprep.subr.mxu0 0.0
  %2060 = vmatpush2.msra.mxu0 %v1669
  %2061 = vmatprep.subr.mxu0 0.0
  %2062 = vmatpush2.msra.mxu0 %v1668
  %2063 = vmatprep.subr.mxu0 0.0
  %2064 = vmatpush2.msra.mxu0 %v1667
  %2065 = vmatprep.subr.mxu0 0.0
  %2066 = vmatpush2.msra.mxu0 %v1666
  %2067 = vmatprep.subr.mxu0 0.0
  %2068 = vmatpush2.msra.mxu0 %v1665
  %2069 = vmatprep.subr.mxu0 0.0
  %2070 = vmatpush2.msra.mxu0 %v1664
  %2071 = vmatprep.subr.mxu0 0.0
  %2072 = vmatpush2.msra.mxu0 %v1663
  %2073 = vmatprep.subr.mxu0 0.0
  %2074 = vmatpush2.msra.mxu0 %v1662
  %2075 = vmatprep.subr.mxu0 0.0
  %2076 = vmatpush2.msra.mxu0 %v1661
  %2077 = vmatprep.subr.mxu0 0.0
  %2078 = vmatpush2.msra.mxu0 %v1660
  %2079 = vmatprep.subr.mxu0 0.0
  %2080 = vmatpush2.msra.mxu0 %v1659
  %2081 = vmatprep.mubr.f32.mxu0 %v1534
  %2082 = vmatmul.mubr.f32.gmra.mxu0 %v1533
  %v2083 = vpop.f32.mrf.mxu0
  %v2084 = vadd.f32 %v2014, %v2083
  %v2085 = vpop.f32.mrf.mxu0
  %2086 = vdwg.mxu0
  %2087 = vmatprep.subr.mxu0 0.0
  %2088 = vmatpush1.msra.mxu0 %v1690
  %2089 = vmatprep.subr.mxu0 0.0
  %2090 = vmatpush1.msra.mxu0 %v1689
  %2091 = vmatprep.subr.mxu0 0.0
  %2092 = vmatpush1.msra.mxu0 %v1688
  %2093 = vmatprep.subr.mxu0 0.0
  %2094 = vmatpush1.msra.mxu0 %v1687
  %2095 = vmatprep.subr.mxu0 0.0
  %2096 = vmatpush1.msra.mxu0 %v1686
  %2097 = vmatprep.subr.mxu0 0.0
  %2098 = vmatpush1.msra.mxu0 %v1685
  %2099 = vmatprep.subr.mxu0 0.0
  %2100 = vmatpush1.msra.mxu0 %v1684
  %2101 = vmatprep.subr.mxu0 0.0
  %2102 = vmatpush1.msra.mxu0 %v1683
  %2103 = vmatprep.subr.mxu0 0.0
  %2104 = vmatpush1.msra.mxu0 %v1682
  %2105 = vmatprep.subr.mxu0 0.0
  %2106 = vmatpush1.msra.mxu0 %v1681
  %2107 = vmatprep.subr.mxu0 0.0
  %2108 = vmatpush1.msra.mxu0 %v1680
  %2109 = vmatprep.subr.mxu0 0.0
  %2110 = vmatpush1.msra.mxu0 %v1679
  %2111 = vmatprep.subr.mxu0 0.0
  %2112 = vmatpush1.msra.mxu0 %v1678
  %2113 = vmatprep.subr.mxu0 0.0
  %2114 = vmatpush1.msra.mxu0 %v1677
  %2115 = vmatprep.subr.mxu0 0.0
  %2116 = vmatpush1.msra.mxu0 %v1676
  %2117 = vmatprep.subr.mxu0 0.0
  %2118 = vmatpush1.msra.mxu0 %v1675
  %2119 = vmatprep.subr.mxu0 0.0
  %2120 = vmatpush2.msra.mxu0 %v1706
  %2121 = vmatprep.subr.mxu0 0.0
  %2122 = vmatpush2.msra.mxu0 %v1705
  %2123 = vmatprep.subr.mxu0 0.0
  %2124 = vmatpush2.msra.mxu0 %v1704
  %2125 = vmatprep.subr.mxu0 0.0
  %2126 = vmatpush2.msra.mxu0 %v1703
  %2127 = vmatprep.subr.mxu0 0.0
  %2128 = vmatpush2.msra.mxu0 %v1702
  %2129 = vmatprep.subr.mxu0 0.0
  %2130 = vmatpush2.msra.mxu0 %v1701
  %2131 = vmatprep.subr.mxu0 0.0
  %2132 = vmatpush2.msra.mxu0 %v1700
  %2133 = vmatprep.subr.mxu0 0.0
  %2134 = vmatpush2.msra.mxu0 %v1699
  %2135 = vmatprep.subr.mxu0 0.0
  %2136 = vmatpush2.msra.mxu0 %v1698
  %2137 = vmatprep.subr.mxu0 0.0
  %2138 = vmatpush2.msra.mxu0 %v1697
  %2139 = vmatprep.subr.mxu0 0.0
  %2140 = vmatpush2.msra.mxu0 %v1696
  %2141 = vmatprep.subr.mxu0 0.0
  %2142 = vmatpush2.msra.mxu0 %v1695
  %2143 = vmatprep.subr.mxu0 0.0
  %2144 = vmatpush2.msra.mxu0 %v1694
  %2145 = vmatprep.subr.mxu0 0.0
  %2146 = vmatpush2.msra.mxu0 %v1693
  %2147 = vmatprep.subr.mxu0 0.0
  %2148 = vmatpush2.msra.mxu0 %v1692
  %2149 = vmatprep.subr.mxu0 0.0
  %2150 = vmatpush2.msra.mxu0 %v1691
  %2151 = vmatprep.mubr.f32.mxu0 %v1536
  %2152 = vmatmul.mubr.f32.gmra.mxu0 %v1535
  %v2153 = vpop.f32.mrf.mxu0
  %v2154 = vadd.f32 %v2084, %v2153
  %v2155 = vpop.f32.mrf.mxu0
  %2156 = vdwg.mxu0
  %2157 = vmatprep.subr.mxu0 0.0
  %2158 = vmatpush1.msra.mxu0 %v1722
  %2159 = vmatprep.subr.mxu0 0.0
  %2160 = vmatpush1.msra.mxu0 %v1721
  %2161 = vmatprep.subr.mxu0 0.0
  %2162 = vmatpush1.msra.mxu0 %v1720
  %2163 = vmatprep.subr.mxu0 0.0
  %2164 = vmatpush1.msra.mxu0 %v1719
  %2165 = vmatprep.subr.mxu0 0.0
  %2166 = vmatpush1.msra.mxu0 %v1718
  %2167 = vmatprep.subr.mxu0 0.0
  %2168 = vmatpush1.msra.mxu0 %v1717
  %2169 = vmatprep.subr.mxu0 0.0
  %2170 = vmatpush1.msra.mxu0 %v1716
  %2171 = vmatprep.subr.mxu0 0.0
  %2172 = vmatpush1.msra.mxu0 %v1715
  %2173 = vmatprep.subr.mxu0 0.0
  %2174 = vmatpush1.msra.mxu0 %v1714
  %2175 = vmatprep.subr.mxu0 0.0
  %2176 = vmatpush1.msra.mxu0 %v1713
  %2177 = vmatprep.subr.mxu0 0.0
  %2178 = vmatpush1.msra.mxu0 %v1712
  %2179 = vmatprep.subr.mxu0 0.0
  %2180 = vmatpush1.msra.mxu0 %v1711
  %2181 = vmatprep.subr.mxu0 0.0
  %2182 = vmatpush1.msra.mxu0 %v1710
  %2183 = vmatprep.subr.mxu0 0.0
  %2184 = vmatpush1.msra.mxu0 %v1709
  %2185 = vmatprep.subr.mxu0 0.0
  %2186 = vmatpush1.msra.mxu0 %v1708
  %2187 = vmatprep.subr.mxu0 0.0
  %2188 = vmatpush1.msra.mxu0 %v1707
  %2189 = vmatprep.subr.mxu0 0.0
  %2190 = vmatpush2.msra.mxu0 %v1738
  %2191 = vmatprep.subr.mxu0 0.0
  %2192 = vmatpush2.msra.mxu0 %v1737
  %2193 = vmatprep.subr.mxu0 0.0
  %2194 = vmatpush2.msra.mxu0 %v1736
  %2195 = vmatprep.subr.mxu0 0.0
  %2196 = vmatpush2.msra.mxu0 %v1735
  %2197 = vmatprep.subr.mxu0 0.0
  %2198 = vmatpush2.msra.mxu0 %v1734
  %2199 = vmatprep.subr.mxu0 0.0
  %2200 = vmatpush2.msra.mxu0 %v1733
  %2201 = vmatprep.subr.mxu0 0.0
  %2202 = vmatpush2.msra.mxu0 %v1732
  %2203 = vmatprep.subr.mxu0 0.0
  %2204 = vmatpush2.msra.mxu0 %v1731
  %2205 = vmatprep.subr.mxu0 0.0
  %2206 = vmatpush2.msra.mxu0 %v1730
  %2207 = vmatprep.subr.mxu0 0.0
  %2208 = vmatpush2.msra.mxu0 %v1729
  %2209 = vmatprep.subr.mxu0 0.0
  %2210 = vmatpush2.msra.mxu0 %v1728
  %2211 = vmatprep.subr.mxu0 0.0
  %2212 = vmatpush2.msra.mxu0 %v1727
  %2213 = vmatprep.subr.mxu0 0.0
  %2214 = vmatpush2.msra.mxu0 %v1726
  %2215 = vmatprep.subr.mxu0 0.0
  %2216 = vmatpush2.msra.mxu0 %v1725
  %2217 = vmatprep.subr.mxu0 0.0
  %2218 = vmatpush2.msra.mxu0 %v1724
  %2219 = vmatprep.subr.mxu0 0.0
  %2220 = vmatpush2.msra.mxu0 %v1723
  %2221 = vmatprep.mubr.f32.mxu0 %v1538
  %2222 = vmatmul.mubr.f32.gmra.mxu0 %v1537
  %v2223 = vpop.f32.mrf.mxu0
  %v2224 = vadd.f32 %v2154, %v2223
  %v2225 = vpop.f32.mrf.mxu0
  %2226 = vdwg.mxu0
  %2227 = vmatprep.subr.mxu0 0.0
  %2228 = vmatpush1.msra.mxu0 %v1754
  %2229 = vmatprep.subr.mxu0 0.0
  %2230 = vmatpush1.msra.mxu0 %v1753
  %2231 = vmatprep.subr.mxu0 0.0
  %2232 = vmatpush1.msra.mxu0 %v1752
  %2233 = vmatprep.subr.mxu0 0.0
  %2234 = vmatpush1.msra.mxu0 %v1751
  %2235 = vmatprep.subr.mxu0 0.0
  %2236 = vmatpush1.msra.mxu0 %v1750
  %2237 = vmatprep.subr.mxu0 0.0
  %2238 = vmatpush1.msra.mxu0 %v1749
  %2239 = vmatprep.subr.mxu0 0.0
  %2240 = vmatpush1.msra.mxu0 %v1748
  %2241 = vmatprep.subr.mxu0 0.0
  %2242 = vmatpush1.msra.mxu0 %v1747
  %2243 = vmatprep.subr.mxu0 0.0
  %2244 = vmatpush1.msra.mxu0 %v1746
  %2245 = vmatprep.subr.mxu0 0.0
  %2246 = vmatpush1.msra.mxu0 %v1745
  %2247 = vmatprep.subr.mxu0 0.0
  %2248 = vmatpush1.msra.mxu0 %v1744
  %2249 = vmatprep.subr.mxu0 0.0
  %2250 = vmatpush1.msra.mxu0 %v1743
  %2251 = vmatprep.subr.mxu0 0.0
  %2252 = vmatpush1.msra.mxu0 %v1742
  %2253 = vmatprep.subr.mxu0 0.0
  %2254 = vmatpush1.msra.mxu0 %v1741
  %2255 = vmatprep.subr.mxu0 0.0
  %2256 = vmatpush1.msra.mxu0 %v1740
  %2257 = vmatprep.subr.mxu0 0.0
  %2258 = vmatpush1.msra.mxu0 %v1739
  %2259 = vmatprep.subr.mxu0 0.0
  %2260 = vmatpush2.msra.mxu0 %v1770
  %2261 = vmatprep.subr.mxu0 0.0
  %2262 = vmatpush2.msra.mxu0 %v1769
  %2263 = vmatprep.subr.mxu0 0.0
  %2264 = vmatpush2.msra.mxu0 %v1768
  %2265 = vmatprep.subr.mxu0 0.0
  %2266 = vmatpush2.msra.mxu0 %v1767
  %2267 = vmatprep.subr.mxu0 0.0
  %2268 = vmatpush2.msra.mxu0 %v1766
  %2269 = vmatprep.subr.mxu0 0.0
  %2270 = vmatpush2.msra.mxu0 %v1765
  %2271 = vmatprep.subr.mxu0 0.0
  %2272 = vmatpush2.msra.mxu0 %v1764
  %2273 = vmatprep.subr.mxu0 0.0
  %2274 = vmatpush2.msra.mxu0 %v1763
  %2275 = vmatprep.subr.mxu0 0.0
  %2276 = vmatpush2.msra.mxu0 %v1762
  %2277 = vmatprep.subr.mxu0 0.0
  %2278 = vmatpush2.msra.mxu0 %v1761
  %2279 = vmatprep.subr.mxu0 0.0
  %2280 = vmatpush2.msra.mxu0 %v1760
  %2281 = vmatprep.subr.mxu0 0.0
  %2282 = vmatpush2.msra.mxu0 %v1759
  %2283 = vmatprep.subr.mxu0 0.0
  %2284 = vmatpush2.msra.mxu0 %v1758
  %2285 = vmatprep.subr.mxu0 0.0
  %2286 = vmatpush2.msra.mxu0 %v1757
  %2287 = vmatprep.subr.mxu0 0.0
  %2288 = vmatpush2.msra.mxu0 %v1756
  %2289 = vmatprep.subr.mxu0 0.0
  %2290 = vmatpush2.msra.mxu0 %v1755
  %2291 = vmatprep.mubr.f32.mxu0 %v1540
  %2292 = vmatmul.mubr.f32.gmra.mxu0 %v1539
  %v2293 = vpop.f32.mrf.mxu0
  %v2294 = vadd.f32 %v2224, %v2293
  %v2295 = vpop.f32.mrf.mxu0
  %2296 = vdwg.mxu0
  %2297 = vmatprep.subr.mxu0 0.0
  %2298 = vmatpush1.msra.mxu0 %v1786
  %2299 = vmatprep.subr.mxu0 0.0
  %2300 = vmatpush1.msra.mxu0 %v1785
  %2301 = vmatprep.subr.mxu0 0.0
  %2302 = vmatpush1.msra.mxu0 %v1784
  %2303 = vmatprep.subr.mxu0 0.0
  %2304 = vmatpush1.msra.mxu0 %v1783
  %2305 = vmatprep.subr.mxu0 0.0
  %2306 = vmatpush1.msra.mxu0 %v1782
  %2307 = vmatprep.subr.mxu0 0.0
  %2308 = vmatpush1.msra.mxu0 %v1781
  %2309 = vmatprep.subr.mxu0 0.0
  %2310 = vmatpush1.msra.mxu0 %v1780
  %2311 = vmatprep.subr.mxu0 0.0
  %2312 = vmatpush1.msra.mxu0 %v1779
  %2313 = vmatprep.subr.mxu0 0.0
  %2314 = vmatpush1.msra.mxu0 %v1778
  %2315 = vmatprep.subr.mxu0 0.0
  %2316 = vmatpush1.msra.mxu0 %v1777
  %2317 = vmatprep.subr.mxu0 0.0
  %2318 = vmatpush1.msra.mxu0 %v1776
  %2319 = vmatprep.subr.mxu0 0.0
  %2320 = vmatpush1.msra.mxu0 %v1775
  %2321 = vmatprep.subr.mxu0 0.0
  %2322 = vmatpush1.msra.mxu0 %v1774
  %2323 = vmatprep.subr.mxu0 0.0
  %2324 = vmatpush1.msra.mxu0 %v1773
  %2325 = vmatprep.subr.mxu0 0.0
  %2326 = vmatpush1.msra.mxu0 %v1772
  %2327 = vmatprep.subr.mxu0 0.0
  %2328 = vmatpush1.msra.mxu0 %v1771
  %2329 = vmatprep.subr.mxu0 0.0
  %2330 = vmatpush2.msra.mxu0 %v1802
  %2331 = vmatprep.subr.mxu0 0.0
  %2332 = vmatpush2.msra.mxu0 %v1801
  %2333 = vmatprep.subr.mxu0 0.0
  %2334 = vmatpush2.msra.mxu0 %v1800
  %2335 = vmatprep.subr.mxu0 0.0
  %2336 = vmatpush2.msra.mxu0 %v1799
  %2337 = vmatprep.subr.mxu0 0.0
  %2338 = vmatpush2.msra.mxu0 %v1798
  %2339 = vmatprep.subr.mxu0 0.0
  %2340 = vmatpush2.msra.mxu0 %v1797
  %2341 = vmatprep.subr.mxu0 0.0
  %2342 = vmatpush2.msra.mxu0 %v1796
  %2343 = vmatprep.subr.mxu0 0.0
  %2344 = vmatpush2.msra.mxu0 %v1795
  %2345 = vmatprep.subr.mxu0 0.0
  %2346 = vmatpush2.msra.mxu0 %v1794
  %2347 = vmatprep.subr.mxu0 0.0
  %2348 = vmatpush2.msra.mxu0 %v1793
  %2349 = vmatprep.subr.mxu0 0.0
  %2350 = vmatpush2.msra.mxu0 %v1792
  %2351 = vmatprep.subr.mxu0 0.0
  %2352 = vmatpush2.msra.mxu0 %v1791
  %2353 = vmatprep.subr.mxu0 0.0
  %2354 = vmatpush2.msra.mxu0 %v1790
  %2355 = vmatprep.subr.mxu0 0.0
  %2356 = vmatpush2.msra.mxu0 %v1789
  %2357 = vmatprep.subr.mxu0 0.0
  %2358 = vmatpush2.msra.mxu0 %v1788
  %2359 = vmatprep.subr.mxu0 0.0
  %2360 = vmatpush2.msra.mxu0 %v1787
  %2361 = vmatprep.mubr.f32.mxu0 %v1542
  %2362 = vmatmul.mubr.f32.gmra.mxu0 %v1541
  %v2363 = vpop.f32.mrf.mxu0
  %v2364 = vadd.f32 %v2294, %v2363
  %v2365 = vpop.f32.mrf.mxu0
  %2366 = vdwg.mxu0
  %vm2367 = vcmp.gt.f32.partialorder %v2364, 0.0
  %v2368 = vmul.f32 %v2364, 0.01
  %v2369 = vsel %vm2367, %v2364, %v2368
  %v2370 = vld [vmem:[%s1 + $0x8] sm:$0xff]
  %v2371 = vld [vmem:[%s1 + $0x10] sm:$0xff]
  %v2372 = vld [vmem:[%s1 + $0x18] sm:$0xff]
  %v2373 = vld [vmem:[%s1 + $0x20] sm:$0xff]
  %v2374 = vld [vmem:[%s1 + $0x28] sm:$0xff]
  %v2375 = vld [vmem:[%s1 + $0x30] sm:$0xff]
  %v2376 = vld [vmem:[%s1 + $0x38] sm:$0x3]
  %v2377 = vld [vmem:[%s1 + $0x6] sm:$0x1]
  %v2378 = vlaneseq
  %v2379 = vshrl.u32 %v2378, 7
  %v2380 = vsub.s32 0, %v2379
  %v2381 = vrot.slane %v2377, %v2380
  %vm2382 = vcmask 408576
  %v2384 = vsel %vm2382, %v2369, 0
  %vm2386 = vcmask 1041408
  %v2388 = vsel %vm2386, %v2376, 0
  %2390 = vmatprep.subr.mxu0 0.0
  %2391 = vmatpush1.msra.mxu0 0.0
  %2392 = vmatprep.subr.mxu0 0.0
  %2393 = vmatpush1.msra.mxu0 0.0
  %2394 = vmatprep.subr.mxu0 0.0
  %2395 = vmatpush1.msra.mxu0 0.0
  %2396 = vmatprep.subr.mxu0 0.0
  %2397 = vmatpush1.msra.mxu0 0.0
  %2398 = vmatprep.subr.mxu0 0.0
  %2399 = vmatpush1.msra.mxu0 0.0
  %2400 = vmatprep.subr.mxu0 0.0
  %2401 = vmatpush1.msra.mxu0 0.0
  %2402 = vmatprep.subr.mxu0 0.0
  %2403 = vmatpush1.msra.mxu0 0.0
  %2404 = vmatprep.subr.mxu0 0.0
  %2405 = vmatpush1.msra.mxu0 0.0
  %2406 = vmatprep.subr.mxu0 0.0
  %2407 = vmatpush1.msra.mxu0 0.0
  %2408 = vmatprep.subr.mxu0 0.0
  %2409 = vmatpush1.msra.mxu0 %v2388
  %2410 = vmatprep.subr.mxu0 0.0
  %2411 = vmatpush1.msra.mxu0 %v2375
  %2412 = vmatprep.subr.mxu0 0.0
  %2413 = vmatpush1.msra.mxu0 %v2374
  %2414 = vmatprep.subr.mxu0 0.0
  %2415 = vmatpush1.msra.mxu0 %v2373
  %2416 = vmatprep.subr.mxu0 0.0
  %2417 = vmatpush1.msra.mxu0 %v2372
  %2418 = vmatprep.subr.mxu0 0.0
  %2419 = vmatpush1.msra.mxu0 %v2371
  %2420 = vmatprep.subr.mxu0 0.0
  %2421 = vmatpush1.msra.mxu0 %v2370
  %2422 = vmatprep.subr.mxu0 0.0
  %2423 = vmatpush2.msra.mxu0 0.0
  %2424 = vmatprep.subr.mxu0 0.0
  %2425 = vmatpush2.msra.mxu0 0.0
  %2426 = vmatprep.subr.mxu0 0.0
  %2427 = vmatpush2.msra.mxu0 0.0
  %2428 = vmatprep.subr.mxu0 0.0
  %2429 = vmatpush2.msra.mxu0 0.0
  %2430 = vmatprep.subr.mxu0 0.0
  %2431 = vmatpush2.msra.mxu0 0.0
  %2432 = vmatprep.subr.mxu0 0.0
  %2433 = vmatpush2.msra.mxu0 0.0
  %2434 = vmatprep.subr.mxu0 0.0
  %2435 = vmatpush2.msra.mxu0 0.0
  %2436 = vmatprep.subr.mxu0 0.0
  %2437 = vmatpush2.msra.mxu0 0.0
  %2438 = vmatprep.subr.mxu0 0.0
  %2439 = vmatpush2.msra.mxu0 0.0
  %2440 = vmatprep.subr.mxu0 0.0
  %2441 = vmatpush2.msra.mxu0 0.0
  %2442 = vmatprep.subr.mxu0 0.0
  %2443 = vmatpush2.msra.mxu0 0.0
  %2444 = vmatprep.subr.mxu0 0.0
  %2445 = vmatpush2.msra.mxu0 0.0
  %2446 = vmatprep.subr.mxu0 0.0
  %2447 = vmatpush2.msra.mxu0 0.0
  %2448 = vmatprep.subr.mxu0 0.0
  %2449 = vmatpush2.msra.mxu0 0.0
  %2450 = vmatprep.subr.mxu0 0.0
  %2451 = vmatpush2.msra.mxu0 0.0
  %2452 = vmatprep.subr.mxu0 0.0
  %2453 = vmatpush2.msra.mxu0 0.0
  %2454 = vmatprep.mubr.f32.mxu0 0.0
  %2455 = vmatmul.mubr.f32.gmra.mxu0 %v2384
  %v2456 = vpop.f32.mrf.mxu0
  %v2457 = vadd.f32 %v2381, %v2456
  %v2458 = vpop.f32.mrf.mxu0
  %2459 = vdwg.mxu0
  %vm2460 = vcmp.gt.f32.partialorder %v2457, 0.0
  %v2461 = vmul.f32 %v2457, 0.01
  %v2462 = vsel %vm2460, %v2457, %v2461
  %v2463 = vld [vmem:[%s1 + $0x40] sm:$0xff]
  %v2464 = vld [vmem:[%s1 + $0x48] sm:$0xff]
  %v2465 = vld [vmem:[%s1 + $0x50] sm:$0xff]
  %v2466 = vld [vmem:[%s1 + $0x58] sm:$0xff]
  %v2467 = vld [vmem:[%s1 + $0x60] sm:$0xff]
  %v2468 = vld [vmem:[%s1 + $0x68] sm:$0xff]
  %v2469 = vld [vmem:[%s1 + $0x70] sm:$0xff]
  %v2470 = vld [vmem:[%s1 + $0x78] sm:$0xff]
  %v2471 = vld [vmem:[%s1 + $0x80] sm:$0xff]
  %v2472 = vld [vmem:[%s1 + $0x88] sm:$0xff]
  %v2473 = vld [vmem:[%s1 + $0x90] sm:$0xff]
  %v2474 = vld [vmem:[%s1 + $0x98] sm:$0xff]
  %v2475 = vld [vmem:[%s1 + $0xa0] sm:$0xff]
  %v2476 = vld [vmem:[%s1 + $0xa8] sm:$0xff]
  %v2477 = vld [vmem:[%s1 + $0xb0] sm:$0xff]
  %v2478 = vld [vmem:[%s1 + $0xb8] sm:$0xff]
  %v2479 = vld [vmem:[%s1 + $0x7] sm:$0x1]
  %v2480 = vlaneseq
  %v2481 = vshrl.u32 %v2480, 7
  %v2482 = vsub.s32 0, %v2481
  %v2483 = vrot.slane %v2479, %v2482
  %2484 = vmatprep.subr.mxu0 0.0
  %2485 = vmatpush1.msra.mxu0 %v2478
  %2486 = vmatprep.subr.mxu0 0.0
  %2487 = vmatpush1.msra.mxu0 %v2477
  %2488 = vmatprep.subr.mxu0 0.0
  %2489 = vmatpush1.msra.mxu0 %v2476
  %2490 = vmatprep.subr.mxu0 0.0
  %2491 = vmatpush1.msra.mxu0 %v2475
  %2492 = vmatprep.subr.mxu0 0.0
  %2493 = vmatpush1.msra.mxu0 %v2474
  %2494 = vmatprep.subr.mxu0 0.0
  %2495 = vmatpush1.msra.mxu0 %v2473
  %2496 = vmatprep.subr.mxu0 0.0
  %2497 = vmatpush1.msra.mxu0 %v2472
  %2498 = vmatprep.subr.mxu0 0.0
  %2499 = vmatpush1.msra.mxu0 %v2471
  %2500 = vmatprep.subr.mxu0 0.0
  %2501 = vmatpush1.msra.mxu0 %v2470
  %2502 = vmatprep.subr.mxu0 0.0
  %2503 = vmatpush1.msra.mxu0 %v2469
  %2504 = vmatprep.subr.mxu0 0.0
  %2505 = vmatpush1.msra.mxu0 %v2468
  %2506 = vmatprep.subr.mxu0 0.0
  %2507 = vmatpush1.msra.mxu0 %v2467
  %2508 = vmatprep.subr.mxu0 0.0
  %2509 = vmatpush1.msra.mxu0 %v2466
  %2510 = vmatprep.subr.mxu0 0.0
  %2511 = vmatpush1.msra.mxu0 %v2465
  %2512 = vmatprep.subr.mxu0 0.0
  %2513 = vmatpush1.msra.mxu0 %v2464
  %2514 = vmatprep.subr.mxu0 0.0
  %2515 = vmatpush1.msra.mxu0 %v2463
  %2516 = vmatprep.subr.mxu0 0.0
  %2517 = vmatpush2.msra.mxu0 0.0
  %2518 = vmatprep.subr.mxu0 0.0
  %2519 = vmatpush2.msra.mxu0 0.0
  %2520 = vmatprep.subr.mxu0 0.0
  %2521 = vmatpush2.msra.mxu0 0.0
  %2522 = vmatprep.subr.mxu0 0.0
  %2523 = vmatpush2.msra.mxu0 0.0
  %2524 = vmatprep.subr.mxu0 0.0
  %2525 = vmatpush2.msra.mxu0 0.0
  %2526 = vmatprep.subr.mxu0 0.0
  %2527 = vmatpush2.msra.mxu0 0.0
  %2528 = vmatprep.subr.mxu0 0.0
  %2529 = vmatpush2.msra.mxu0 0.0
  %2530 = vmatprep.subr.mxu0 0.0
  %2531 = vmatpush2.msra.mxu0 0.0
  %2532 = vmatprep.subr.mxu0 0.0
  %2533 = vmatpush2.msra.mxu0 0.0
  %2534 = vmatprep.subr.mxu0 0.0
  %2535 = vmatpush2.msra.mxu0 0.0
  %2536 = vmatprep.subr.mxu0 0.0
  %2537 = vmatpush2.msra.mxu0 0.0
  %2538 = vmatprep.subr.mxu0 0.0
  %2539 = vmatpush2.msra.mxu0 0.0
  %2540 = vmatprep.subr.mxu0 0.0
  %2541 = vmatpush2.msra.mxu0 0.0
  %2542 = vmatprep.subr.mxu0 0.0
  %2543 = vmatpush2.msra.mxu0 0.0
  %2544 = vmatprep.subr.mxu0 0.0
  %2545 = vmatpush2.msra.mxu0 0.0
  %2546 = vmatprep.subr.mxu0 0.0
  %2547 = vmatpush2.msra.mxu0 0.0
  %2548 = vmatprep.mubr.f32.mxu0 0.0
  %2549 = vmatmul.mubr.f32.gmra.mxu0 %v2462
  %v2550 = vpop.f32.mrf.mxu0
  %v2551 = vadd.f32 %v2483, %v2550
  %v2552 = vpop.f32.mrf.mxu0
  %2553 = vdwg.mxu0
  %2555 = vset.pattern.permute.xlu0 0
  %2556 = vperm.xlu0 %2555, %v2551
  %v2557 = vpop.permute.xlu0 %2556
  %v2559 = vadd.f32 %v2557, %v2551
  %2560 = vset.pattern.permute.xlu0 5
  %2561 = vperm.xlu0 %2560, %v2551
  %v2562 = vpop.permute.xlu0 %2561
  %v2564 = vsub.f32 %v2559, %v2562
  %2566 = vrot.lane.b32.xlu0 %v2564, 127
  %v2567 = vpop.permute.xlu0 %2566
  %vm2569 = vcmask 31744
  %2570 = vst.msk [vmem:[%s4] sm:$0xff] %vm2569, %v2567
  // Predicated region
  $region78: #{dueling_ddqn_forward.1} parent=0 // pred_check
    _
  $region79: #{dueling_ddqn_forward.1} parent=0 // pred_check_branch
    %2572 = sbr.rel (0) target = $region81
  $region80: #{dueling_ddqn_forward.1} parent=0 // pred_region
    _
  $region81: #{dueling_ddqn_forward.1} parent=0 // pred_fallthru
    _
  // Predicated region
  $region82: #{dueling_ddqn_forward.1} parent=0 // pred_check
    _
  $region83: #{dueling_ddqn_forward.1} parent=0 // pred_check_branch
    %2574 = sbr.rel (0) target = $region85
  $region84: #{dueling_ddqn_forward.1} parent=0 // pred_region
    _
  $region85: #{dueling_ddqn_forward.1} parent=0 // pred_fallthru
    _
  %2575 = vsyncmov [#allocation4]
  %s2576 = vpop.sfrf %2575
  %p2577 = scmp.eq.s32.totalorder %s2576, 0
  %p2578 = pneg %p2577
  %2580 = shalt.err (%p2578)
  %s2581 = scalar_lea.sflag [#allocation4], 1
  %2582 = vsyncmov %s2581
  %s2583 = vpop.sfrf %2582
  %p2584 = scmp.eq.s32.totalorder %s2583, 0
  %p2585 = pneg %p2584
  %2587 = shalt.err (%p2585)

</llo_original>
